<compile_context>
chip_gen: v5e
topology: v5e:2x2
jax: 0.10.0
libtpu: 0.0.40
codegen_flags: <defaults>
</compile_context>

<pallas_src>
import functools

import jax
import jax.numpy as jnp
from jax.experimental import pallas as pl
from jax.experimental.pallas import tpu as pltpu

EPS = 1e-5                 # nn.BatchNorm2d default
PAD = 4                    # max spatial halo needed (dilation-4 branch)
MXU_DTYPE = jnp.bfloat16   # MXU operand dtype (f32 accumulation). Set to
                           # jnp.float32 to recover ~1e-5 agreement with ref.


# Tap offsets in the same (ky slow, kx fast) order as the HWIO weight layout:
# 1 tap for the 1x1 branch, then 9 taps each for dilation 1, 2, 4.
def _tap_offsets():
    taps = [(0, 0)]
    for d in (1, 2, 4):
        taps += [(dy, dx) for dy in (-d, 0, d) for dx in (-d, 0, d)]
    return tuple(taps)


TAPS = _tap_offsets()      # 28 taps
NTAPS = len(TAPS)


# --------------------------- pass 1: conv + stats ------------------------------
def _conv_stats_kernel(x_ref, wt_ref, y_ref, sum_ref, m2_ref, xp_ref, patch_ref,
                       *, H, W, Cin, B):
    """B images per step: in-kernel pad -> im2col into scratch -> MXU -> stats."""
    HW = H * W
    inv_cnt = 1.0 / float(HW)

    # In-kernel zero padding (replaces a full jnp.pad HBM round trip).
    xp_ref[...] = jnp.zeros_like(xp_ref)
    xp_ref[:, :, PAD:PAD + H, PAD:PAD + W] = x_ref[...].astype(jnp.float32)

    # im2col written directly into the VMEM scratch (no concatenate copy).
    # Scratch is MXU_DTYPE (bf16): halves store traffic, feeds the MXU at bf16.
    for t, (dy, dx) in enumerate(TAPS):                       # 28 static slices
        sl = xp_ref[:, :, PAD + dy:PAD + dy + H, PAD + dx:PAD + dx + W]
        patch_ref[:, t * Cin:(t + 1) * Cin, :] = (
            sl.reshape(B, Cin, HW).astype(MXU_DTYPE))

    # One lane-dense MXU matmul per image + per-image BN partial statistics
    # (centered M2; cross-image combine via Chan's formula in the wrapper).
    for b in range(B):                                         # B small & static
        y = jnp.dot(wt_ref[...], patch_ref[b],
                    preferred_element_type=jnp.float32)        # (4f, HW)
        y_ref[b] = y
        s = jnp.sum(y, axis=1, keepdims=True)                  # (4f, 1)
        d = y - s * inv_cnt
        sum_ref[b] = s
        m2_ref[b] = jnp.sum(d * d, axis=1, keepdims=True)


# --------------------------- pass 2: normalize + ReLU --------------------------
def _bn_relu_kernel(scale_ref, shift_ref, y_ref, o_ref):
    """y*scale + shift, ReLU.  scale/shift already fold gamma, beta, mean, var."""
    o_ref[...] = jnp.maximum(
        y_ref[...] * scale_ref[...] + shift_ref[...], 0.0).astype(o_ref.dtype)


# ----------------------------------- helpers -----------------------------------
def _pick_batch_block(n, per_item_bytes, budget_bytes, cap):
    """Largest b dividing n with b*per_item <= budget; keep >=2 grid steps when
    n >= 2 so v7x's two TensorCores both get work."""
    best = 1
    for b in range(1, min(n, cap) + 1):
        if n % b:
            continue
        if b * per_item_bytes > budget_bytes:
            continue
        if n // b < 2 and n >= 2:
            continue
        best = b
    return best


# ----------------------------------- wrapper -----------------------------------
def _forward(x_nchw, params):
    N, Cin, H, W = x_nchw.shape
    f = params["w1"].shape[-1]
    C4 = 4 * f
    HW = H * W
    K = NTAPS * Cin
    Hp, Wp = H + 2 * PAD, W + 2 * PAD

    # Block-diagonal combined conv weight (K, 4f) -> transposed (4f, K) so the
    # conv is one lane-dense (4f,K)@(K,HW) MXU matmul; bf16 operands.
    w_comb = jnp.zeros((K, C4), jnp.float32)
    w_comb = w_comb.at[0:Cin, 0:f].set(params["w1"].reshape(Cin, f))
    w_comb = w_comb.at[Cin:10 * Cin, f:2 * f].set(params["w2"].reshape(9 * Cin, f))
    w_comb = w_comb.at[10 * Cin:19 * Cin, 2 * f:3 * f].set(params["w3"].reshape(9 * Cin, f))
    w_comb = w_comb.at[19 * Cin:28 * Cin, 3 * f:4 * f].set(params["w4"].reshape(9 * Cin, f))
    wt = w_comb.T.astype(MXU_DTYPE)

    # NOTE: conv biases (b1..b4) are intentionally NOT applied — a bias followed
    # by batch-stat BatchNorm cancels exactly, so the output is identical.
    # TODO(synk): restore the bias add if BN ever switches to running stats.

    # Images per grid step from a VMEM budget (safe on v7x's 64 MiB VMEM).
    elt = jnp.dtype(MXU_DTYPE).itemsize
    per_img = (2 * Cin * H * W * 4            # x block (double-buffered)
               + Cin * Hp * Wp * 4            # padded scratch
               + K * HW * elt                 # im2col scratch
               + 2 * C4 * HW * 4              # conv-out block (double-buffered)
               + 4 * C4 * 4)                  # stats blocks
    budget = 12 * 1024 * 1024
    B = _pick_batch_block(N, per_img, budget, cap=8)
    vmem_limit = int(min(96 * 2 ** 20,
                         max(32 * 2 ** 20, 2 * (B * per_img + 2 * C4 * K * elt))))

    conv_call = pl.pallas_call(
        functools.partial(_conv_stats_kernel, H=H, W=W, Cin=Cin, B=B),
        grid=(N // B,),
        in_specs=[
            pl.BlockSpec((B, Cin, H, W), lambda n: (n, 0, 0, 0)),
            pl.BlockSpec((C4, K), lambda n: (0, 0)),
        ],
        out_specs=[
            pl.BlockSpec((B, C4, HW), lambda n: (n, 0, 0)),
            pl.BlockSpec((B, C4, 1), lambda n: (n, 0, 0)),
            pl.BlockSpec((B, C4, 1), lambda n: (n, 0, 0)),
        ],
        out_shape=(
            jax.ShapeDtypeStruct((N, C4, HW), jnp.float32),
            jax.ShapeDtypeStruct((N, C4, 1), jnp.float32),
            jax.ShapeDtypeStruct((N, C4, 1), jnp.float32),
        ),
        scratch_shapes=[
            pltpu.VMEM((B, Cin, Hp, Wp), jnp.float32),   # padded image
            pltpu.VMEM((B, K, HW), MXU_DTYPE),           # im2col patches
        ],
        compiler_params=pltpu.CompilerParams(
            dimension_semantics=("parallel",),
            vmem_limit_bytes=vmem_limit),
    )
    y_conv, sums, m2s = conv_call(x_nchw, wt)

    # ---- combine per-image partials into global BN stats (Chan's formula) ----
    sums = sums[..., 0]                                  # (N, C4)
    m2s = m2s[..., 0]                                    # (N, C4)
    total = float(N * HW)
    mean = jnp.sum(sums, axis=0) / total                 # (C4,)
    tile_mean = sums / float(HW)                         # (N, C4)
    var = (jnp.sum(m2s, axis=0)
           + float(HW) * jnp.sum((tile_mean - mean) ** 2, axis=0)) / total

    gamma = jnp.concatenate([params["g1"], params["g2"], params["g3"], params["g4"]])
    beta = jnp.concatenate([params["be1"], params["be2"], params["be3"], params["be4"]])
    scale = gamma * jax.lax.rsqrt(var + EPS)              # folded BN: y*scale + shift
    shift = beta - mean * scale
    scale = scale.reshape(C4, 1).astype(jnp.float32)
    shift = shift.reshape(C4, 1).astype(jnp.float32)

    # ---- pass 2: normalize + ReLU (lane-dense, bigger blocks, aliased buffer) --
    out_dtype = x_nchw.dtype
    per_img2 = 2 * C4 * HW * (4 + jnp.dtype(out_dtype).itemsize)
    B2 = _pick_batch_block(N, per_img2, budget, cap=32)
    alias = {2: 0} if out_dtype == jnp.float32 else {}
    bn_call = pl.pallas_call(
        _bn_relu_kernel,
        grid=(N // B2,),
        in_specs=[
            pl.BlockSpec((C4, 1), lambda n: (0, 0)),
            pl.BlockSpec((C4, 1), lambda n: (0, 0)),
            pl.BlockSpec((B2, C4, HW), lambda n: (n, 0, 0)),
        ],
        out_specs=pl.BlockSpec((B2, C4, HW), lambda n: (n, 0, 0)),
        out_shape=jax.ShapeDtypeStruct((N, C4, HW), out_dtype),
        input_output_aliases=alias,
        compiler_params=pltpu.CompilerParams(
            dimension_semantics=("parallel",)),
    )
    out = bn_call(scale, shift, y_conv)

    # (N, 4f, H*W) -> NCHW via a contiguous (free) reshape; no transpose needed.
    return out.reshape(N, C4, H, W)


dilation_inception_pallas = jax.jit(_forward)


# ----------------------------- pure-JAX reference -----------------------------
def dilation_inception_ref(x_nchw, params):
    x = jnp.transpose(x_nchw, (0, 2, 3, 1)).astype(jnp.float32)

    def conv(w_hwio, b, dil, pad):
        y = jax.lax.conv_general_dilated(
            x, w_hwio, window_strides=(1, 1),
            padding=((pad, pad), (pad, pad)),
            rhs_dilation=(dil, dil),
            dimension_numbers=("NHWC", "HWIO", "NHWC"),
            precision=jax.lax.Precision.HIGHEST)
        return y + b

    def bn_relu(y, g, be):
        mean = jnp.mean(y, axis=(0, 1, 2), keepdims=True)
        var = jnp.mean((y - mean) ** 2, axis=(0, 1, 2), keepdims=True)
        return jnp.maximum((y - mean) * jax.lax.rsqrt(var + EPS) * g + be, 0.0)

    y1 = bn_relu(conv(params["w1"], params["b1"], 1, 0), params["g1"], params["be1"])
    y2 = bn_relu(conv(params["w2"], params["b2"], 1, 1), params["g2"], params["be2"])
    y3 = bn_relu(conv(params["w3"], params["b3"], 2, 2), params["g3"], params["be3"])
    y4 = bn_relu(conv(params["w4"], params["b4"], 4, 4), params["g4"], params["be4"])
    y = jnp.concatenate([y1, y2, y3, y4], axis=-1)
    return jnp.transpose(y, (0, 3, 1, 2)).astype(x_nchw.dtype)


# ----------------------------------- main --------------------------------------
if __name__ == "__main__":
    key = jax.random.PRNGKey(0)
    N, inplanes, H, W = 2, 4, 16, 16
    planes = 8
    fnum = planes // 4

    ks = jax.random.split(key, 20)
    params = {
        # conv weights in HWIO layout (kh, kw, Cin, fnum)
        "w1": jax.random.normal(ks[0], (1, 1, inplanes, fnum), jnp.float32) * 0.3,
        "w2": jax.random.normal(ks[1], (3, 3, inplanes, fnum), jnp.float32) * 0.3,
        "w3": jax.random.normal(ks[2], (3, 3, inplanes, fnum), jnp.float32) * 0.3,
        "w4": jax.random.normal(ks[3], (3, 3, inplanes, fnum), jnp.float32) * 0.3,
        # conv biases (used by the reference; cancelled exactly by BN in Pallas path)
        "b1": jax.random.normal(ks[4], (fnum,), jnp.float32) * 0.1,
        "b2": jax.random.normal(ks[5], (fnum,), jnp.float32) * 0.1,
        "b3": jax.random.normal(ks[6], (fnum,), jnp.float32) * 0.1,
        "b4": jax.random.normal(ks[7], (fnum,), jnp.float32) * 0.1,
        # BN affine params
        "g1": 1.0 + 0.1 * jax.random.normal(ks[8], (fnum,), jnp.float32),
        "g2": 1.0 + 0.1 * jax.random.normal(ks[9], (fnum,), jnp.float32),
        "g3": 1.0 + 0.1 * jax.random.normal(ks[10], (fnum,), jnp.float32),
        "g4": 1.0 + 0.1 * jax.random.normal(ks[11], (fnum,), jnp.float32),
        "be1": 0.1 * jax.random.normal(ks[12], (fnum,), jnp.float32),
        "be2": 0.1 * jax.random.normal(ks[13], (fnum,), jnp.float32),
        "be3": 0.1 * jax.random.normal(ks[14], (fnum,), jnp.float32),
        "be4": 0.1 * jax.random.normal(ks[15], (fnum,), jnp.float32),
    }

    x = jax.random.normal(ks[16], (N, inplanes, H, W), jnp.float32)

    out = jax.block_until_ready(dilation_inception_pallas(x, params))
    ref = jax.block_until_ready(dilation_inception_ref(x, params))

    assert out.shape == (N, planes, H, W), out.shape
    # bf16 MXU operands (per perf review) give ~1e-2 worst-case abs error at
    # these magnitudes; set MXU_DTYPE = jnp.float32 to recover ~1e-5 agreement.
    max_err = float(jnp.max(jnp.abs(out - ref)))
    assert jnp.allclose(out, ref, rtol=2e-2, atol=2e-2), max_err

    print("KERNEL_OK")
</pallas_src>

<mosaic_0001>
module attributes {stable_mosaic.version = 11 : i64} {
  func.func @_conv_stats_kernel(%arg0: i32, %arg1: memref<1x4x16x16xf32, #tpu.memory_space<vmem>>, %arg2: memref<8x112xbf16, #tpu.memory_space<vmem>>, %arg3: memref<1x8x256xf32, #tpu.memory_space<vmem>>, %arg4: memref<1x8x1xf32, #tpu.memory_space<vmem>>, %arg5: memref<1x8x1xf32, #tpu.memory_space<vmem>>, %arg6: memref<1x4x24x24xf32, #tpu.memory_space<vmem>>, %arg7: memref<1x112x256xbf16, #tpu.memory_space<vmem>>) attributes {dimension_semantics = [#tpu.dimension_semantics<parallel>], iteration_bounds = array<i64: 2>, scalar_prefetch = 0 : i64, scratch_operands = 2 : i64, tpu.core_type = #tpu.core_type<tc>, window_params = [{transform_indices = @transform_0, window_bounds = array<i64: 1, 4, 16, 16>}, {pipeline_mode = #tpu.pipeline_mode<synchronous>, transform_indices = @transform_1, window_bounds = array<i64: 8, 112>}, {transform_indices = @transform_2, window_bounds = array<i64: 1, 8, 256>}, {transform_indices = @transform_3, window_bounds = array<i64: 1, 8, 1>}, {transform_indices = @transform_4, window_bounds = array<i64: 1, 8, 1>}]} {
    %cst = arith.constant 0.000000e+00 : f32
    %0 = vector.broadcast %cst : f32 to vector<1x4x24x24xf32>
    %c0 = arith.constant 0 : index
    %c0_0 = arith.constant 0 : index
    %c0_1 = arith.constant 0 : index
    %c0_2 = arith.constant 0 : index
    %1 = vector.load %arg6[%c0, %c0_0, %c0_1, %c0_2] : memref<1x4x24x24xf32, #tpu.memory_space<vmem>>, vector<1x4x24x24xf32>
    tpu.vector_store %arg6[%c0, %c0_0, %c0_1, %c0_2], %0 {strides = array<i32>} : memref<1x4x24x24xf32, #tpu.memory_space<vmem>>, vector<1x4x24x24xf32>,
    %c0_3 = arith.constant 0 : index
    %c0_4 = arith.constant 0 : index
    %c0_5 = arith.constant 0 : index
    %c0_6 = arith.constant 0 : index
    %2 = vector.load %arg1[%c0_3, %c0_4, %c0_5, %c0_6] : memref<1x4x16x16xf32, #tpu.memory_space<vmem>>, vector<1x4x16x16xf32>
    %c0_7 = arith.constant 0 : index
    %c0_8 = arith.constant 0 : index
    %c4 = arith.constant 4 : index
    %c4_9 = arith.constant 4 : index
    %3 = vector.load %arg6[%c0_7, %c0_8, %c4, %c4_9] : memref<1x4x24x24xf32, #tpu.memory_space<vmem>>, vector<1x4x16x16xf32>
    tpu.vector_store %arg6[%c0_7, %c0_8, %c4, %c4_9], %2 {strides = array<i32>} : memref<1x4x24x24xf32, #tpu.memory_space<vmem>>, vector<1x4x16x16xf32>,
    %c0_10 = arith.constant 0 : index
    %c0_11 = arith.constant 0 : index
    %c4_12 = arith.constant 4 : index
    %c4_13 = arith.constant 4 : index
    %4 = vector.load %arg6[%c0_10, %c0_11, %c4_12, %c4_13] : memref<1x4x24x24xf32, #tpu.memory_space<vmem>>, vector<1x4x16x16xf32>
    %5 = vector.shape_cast %4 : vector<1x4x16x16xf32> to vector<1x4x256xf32>
    %6 = arith.truncf %5 : vector<1x4x256xf32> to vector<1x4x256xbf16>
    %c0_14 = arith.constant 0 : index
    %c0_15 = arith.constant 0 : index
    %c0_16 = arith.constant 0 : index
    %7 = vector.load %arg7[%c0_14, %c0_15, %c0_16] : memref<1x112x256xbf16, #tpu.memory_space<vmem>>, vector<1x4x256xbf16>
    tpu.vector_store %arg7[%c0_14, %c0_15, %c0_16], %6 {strides = array<i32>} : memref<1x112x256xbf16, #tpu.memory_space<vmem>>, vector<1x4x256xbf16>,
    %c0_17 = arith.constant 0 : index
    %c0_18 = arith.constant 0 : index
    %c3 = arith.constant 3 : index
    %c3_19 = arith.constant 3 : index
    %8 = vector.load %arg6[%c0_17, %c0_18, %c3, %c3_19] : memref<1x4x24x24xf32, #tpu.memory_space<vmem>>, vector<1x4x16x16xf32>
    %9 = vector.shape_cast %8 : vector<1x4x16x16xf32> to vector<1x4x256xf32>
    %10 = arith.truncf %9 : vector<1x4x256xf32> to vector<1x4x256xbf16>
    %c0_20 = arith.constant 0 : index
    %c4_21 = arith.constant 4 : index
    %c0_22 = arith.constant 0 : index
    %11 = vector.load %arg7[%c0_20, %c4_21, %c0_22] : memref<1x112x256xbf16, #tpu.memory_space<vmem>>, vector<1x4x256xbf16>
    tpu.vector_store %arg7[%c0_20, %c4_21, %c0_22], %10 {strides = array<i32>} : memref<1x112x256xbf16, #tpu.memory_space<vmem>>, vector<1x4x256xbf16>,
    %c0_23 = arith.constant 0 : index
    %c0_24 = arith.constant 0 : index
    %c3_25 = arith.constant 3 : index
    %c4_26 = arith.constant 4 : index
    %12 = vector.load %arg6[%c0_23, %c0_24, %c3_25, %c4_26] : memref<1x4x24x24xf32, #tpu.memory_space<vmem>>, vector<1x4x16x16xf32>
    %13 = vector.shape_cast %12 : vector<1x4x16x16xf32> to vector<1x4x256xf32>
    %14 = arith.truncf %13 : vector<1x4x256xf32> to vector<1x4x256xbf16>
    %c0_27 = arith.constant 0 : index
    %c8 = arith.constant 8 : index
    %c0_28 = arith.constant 0 : index
    %15 = vector.load %arg7[%c0_27, %c8, %c0_28] : memref<1x112x256xbf16, #tpu.memory_space<vmem>>, vector<1x4x256xbf16>
    tpu.vector_store %arg7[%c0_27, %c8, %c0_28], %14 {strides = array<i32>} : memref<1x112x256xbf16, #tpu.memory_space<vmem>>, vector<1x4x256xbf16>,
    %c0_29 = arith.constant 0 : index
    %c0_30 = arith.constant 0 : index
    %c3_31 = arith.constant 3 : index
    %c5 = arith.constant 5 : index
    %16 = vector.load %arg6[%c0_29, %c0_30, %c3_31, %c5] : memref<1x4x24x24xf32, #tpu.memory_space<vmem>>, vector<1x4x16x16xf32>
    %17 = vector.shape_cast %16 : vector<1x4x16x16xf32> to vector<1x4x256xf32>
    %18 = arith.truncf %17 : vector<1x4x256xf32> to vector<1x4x256xbf16>
    %c0_32 = arith.constant 0 : index
    %c12 = arith.constant 12 : index
    %c0_33 = arith.constant 0 : index
    %19 = vector.load %arg7[%c0_32, %c12, %c0_33] : memref<1x112x256xbf16, #tpu.memory_space<vmem>>, vector<1x4x256xbf16>
    tpu.vector_store %arg7[%c0_32, %c12, %c0_33], %18 {strides = array<i32>} : memref<1x112x256xbf16, #tpu.memory_space<vmem>>, vector<1x4x256xbf16>,
    %c0_34 = arith.constant 0 : index
    %c0_35 = arith.constant 0 : index
    %c4_36 = arith.constant 4 : index
    %c3_37 = arith.constant 3 : index
    %20 = vector.load %arg6[%c0_34, %c0_35, %c4_36, %c3_37] : memref<1x4x24x24xf32, #tpu.memory_space<vmem>>, vector<1x4x16x16xf32>
    %21 = vector.shape_cast %20 : vector<1x4x16x16xf32> to vector<1x4x256xf32>
    %22 = arith.truncf %21 : vector<1x4x256xf32> to vector<1x4x256xbf16>
    %c0_38 = arith.constant 0 : index
    %c16 = arith.constant 16 : index
    %c0_39 = arith.constant 0 : index
    %23 = vector.load %arg7[%c0_38, %c16, %c0_39] : memref<1x112x256xbf16, #tpu.memory_space<vmem>>, vector<1x4x256xbf16>
    tpu.vector_store %arg7[%c0_38, %c16, %c0_39], %22 {strides = array<i32>} : memref<1x112x256xbf16, #tpu.memory_space<vmem>>, vector<1x4x256xbf16>,
    %c0_40 = arith.constant 0 : index
    %c0_41 = arith.constant 0 : index
    %c4_42 = arith.constant 4 : index
    %c4_43 = arith.constant 4 : index
    %24 = vector.load %arg6[%c0_40, %c0_41, %c4_42, %c4_43] : memref<1x4x24x24xf32, #tpu.memory_space<vmem>>, vector<1x4x16x16xf32>
    %25 = vector.shape_cast %24 : vector<1x4x16x16xf32> to vector<1x4x256xf32>
    %26 = arith.truncf %25 : vector<1x4x256xf32> to vector<1x4x256xbf16>
    %c0_44 = arith.constant 0 : index
    %c20 = arith.constant 20 : index
    %c0_45 = arith.constant 0 : index
    %27 = vector.load %arg7[%c0_44, %c20, %c0_45] : memref<1x112x256xbf16, #tpu.memory_space<vmem>>, vector<1x4x256xbf16>
    tpu.vector_store %arg7[%c0_44, %c20, %c0_45], %26 {strides = array<i32>} : memref<1x112x256xbf16, #tpu.memory_space<vmem>>, vector<1x4x256xbf16>,
    %c0_46 = arith.constant 0 : index
    %c0_47 = arith.constant 0 : index
    %c4_48 = arith.constant 4 : index
    %c5_49 = arith.constant 5 : index
    %28 = vector.load %arg6[%c0_46, %c0_47, %c4_48, %c5_49] : memref<1x4x24x24xf32, #tpu.memory_space<vmem>>, vector<1x4x16x16xf32>
    %29 = vector.shape_cast %28 : vector<1x4x16x16xf32> to vector<1x4x256xf32>
    %30 = arith.truncf %29 : vector<1x4x256xf32> to vector<1x4x256xbf16>
    %c0_50 = arith.constant 0 : index
    %c24 = arith.constant 24 : index
    %c0_51 = arith.constant 0 : index
    %31 = vector.load %arg7[%c0_50, %c24, %c0_51] : memref<1x112x256xbf16, #tpu.memory_space<vmem>>, vector<1x4x256xbf16>
    tpu.vector_store %arg7[%c0_50, %c24, %c0_51], %30 {strides = array<i32>} : memref<1x112x256xbf16, #tpu.memory_space<vmem>>, vector<1x4x256xbf16>,
    %c0_52 = arith.constant 0 : index
    %c0_53 = arith.constant 0 : index
    %c5_54 = arith.constant 5 : index
    %c3_55 = arith.constant 3 : index
    %32 = vector.load %arg6[%c0_52, %c0_53, %c5_54, %c3_55] : memref<1x4x24x24xf32, #tpu.memory_space<vmem>>, vector<1x4x16x16xf32>
    %33 = vector.shape_cast %32 : vector<1x4x16x16xf32> to vector<1x4x256xf32>
    %34 = arith.truncf %33 : vector<1x4x256xf32> to vector<1x4x256xbf16>
    %c0_56 = arith.constant 0 : index
    %c28 = arith.constant 28 : index
    %c0_57 = arith.constant 0 : index
    %35 = vector.load %arg7[%c0_56, %c28, %c0_57] : memref<1x112x256xbf16, #tpu.memory_space<vmem>>, vector<1x4x256xbf16>
    tpu.vector_store %arg7[%c0_56, %c28, %c0_57], %34 {strides = array<i32>} : memref<1x112x256xbf16, #tpu.memory_space<vmem>>, vector<1x4x256xbf16>,
    %c0_58 = arith.constant 0 : index
    %c0_59 = arith.constant 0 : index
    %c5_60 = arith.constant 5 : index
    %c4_61 = arith.constant 4 : index
    %36 = vector.load %arg6[%c0_58, %c0_59, %c5_60, %c4_61] : memref<1x4x24x24xf32, #tpu.memory_space<vmem>>, vector<1x4x16x16xf32>
    %37 = vector.shape_cast %36 : vector<1x4x16x16xf32> to vector<1x4x256xf32>
    %38 = arith.truncf %37 : vector<1x4x256xf32> to vector<1x4x256xbf16>
    %c0_62 = arith.constant 0 : index
    %c32 = arith.constant 32 : index
    %c0_63 = arith.constant 0 : index
    %39 = vector.load %arg7[%c0_62, %c32, %c0_63] : memref<1x112x256xbf16, #tpu.memory_space<vmem>>, vector<1x4x256xbf16>
    tpu.vector_store %arg7[%c0_62, %c32, %c0_63], %38 {strides = array<i32>} : memref<1x112x256xbf16, #tpu.memory_space<vmem>>, vector<1x4x256xbf16>,
    %c0_64 = arith.constant 0 : index
    %c0_65 = arith.constant 0 : index
    %c5_66 = arith.constant 5 : index
    %c5_67 = arith.constant 5 : index
    %40 = vector.load %arg6[%c0_64, %c0_65, %c5_66, %c5_67] : memref<1x4x24x24xf32, #tpu.memory_space<vmem>>, vector<1x4x16x16xf32>
    %41 = vector.shape_cast %40 : vector<1x4x16x16xf32> to vector<1x4x256xf32>
    %42 = arith.truncf %41 : vector<1x4x256xf32> to vector<1x4x256xbf16>
    %c0_68 = arith.constant 0 : index
    %c36 = arith.constant 36 : index
    %c0_69 = arith.constant 0 : index
    %43 = vector.load %arg7[%c0_68, %c36, %c0_69] : memref<1x112x256xbf16, #tpu.memory_space<vmem>>, vector<1x4x256xbf16>
    tpu.vector_store %arg7[%c0_68, %c36, %c0_69], %42 {strides = array<i32>} : memref<1x112x256xbf16, #tpu.memory_space<vmem>>, vector<1x4x256xbf16>,
    %c0_70 = arith.constant 0 : index
    %c0_71 = arith.constant 0 : index
    %c2 = arith.constant 2 : index
    %c2_72 = arith.constant 2 : index
    %44 = vector.load %arg6[%c0_70, %c0_71, %c2, %c2_72] : memref<1x4x24x24xf32, #tpu.memory_space<vmem>>, vector<1x4x16x16xf32>
    %45 = vector.shape_cast %44 : vector<1x4x16x16xf32> to vector<1x4x256xf32>
    %46 = arith.truncf %45 : vector<1x4x256xf32> to vector<1x4x256xbf16>
    %c0_73 = arith.constant 0 : index
    %c40 = arith.constant 40 : index
    %c0_74 = arith.constant 0 : index
    %47 = vector.load %arg7[%c0_73, %c40, %c0_74] : memref<1x112x256xbf16, #tpu.memory_space<vmem>>, vector<1x4x256xbf16>
    tpu.vector_store %arg7[%c0_73, %c40, %c0_74], %46 {strides = array<i32>} : memref<1x112x256xbf16, #tpu.memory_space<vmem>>, vector<1x4x256xbf16>,
    %c0_75 = arith.constant 0 : index
    %c0_76 = arith.constant 0 : index
    %c2_77 = arith.constant 2 : index
    %c4_78 = arith.constant 4 : index
    %48 = vector.load %arg6[%c0_75, %c0_76, %c2_77, %c4_78] : memref<1x4x24x24xf32, #tpu.memory_space<vmem>>, vector<1x4x16x16xf32>
    %49 = vector.shape_cast %48 : vector<1x4x16x16xf32> to vector<1x4x256xf32>
    %50 = arith.truncf %49 : vector<1x4x256xf32> to vector<1x4x256xbf16>
    %c0_79 = arith.constant 0 : index
    %c44 = arith.constant 44 : index
    %c0_80 = arith.constant 0 : index
    %51 = vector.load %arg7[%c0_79, %c44, %c0_80] : memref<1x112x256xbf16, #tpu.memory_space<vmem>>, vector<1x4x256xbf16>
    tpu.vector_store %arg7[%c0_79, %c44, %c0_80], %50 {strides = array<i32>} : memref<1x112x256xbf16, #tpu.memory_space<vmem>>, vector<1x4x256xbf16>,
    %c0_81 = arith.constant 0 : index
    %c0_82 = arith.constant 0 : index
    %c2_83 = arith.constant 2 : index
    %c6 = arith.constant 6 : index
    %52 = vector.load %arg6[%c0_81, %c0_82, %c2_83, %c6] : memref<1x4x24x24xf32, #tpu.memory_space<vmem>>, vector<1x4x16x16xf32>
    %53 = vector.shape_cast %52 : vector<1x4x16x16xf32> to vector<1x4x256xf32>
    %54 = arith.truncf %53 : vector<1x4x256xf32> to vector<1x4x256xbf16>
    %c0_84 = arith.constant 0 : index
    %c48 = arith.constant 48 : index
    %c0_85 = arith.constant 0 : index
    %55 = vector.load %arg7[%c0_84, %c48, %c0_85] : memref<1x112x256xbf16, #tpu.memory_space<vmem>>, vector<1x4x256xbf16>
    tpu.vector_store %arg7[%c0_84, %c48, %c0_85], %54 {strides = array<i32>} : memref<1x112x256xbf16, #tpu.memory_space<vmem>>, vector<1x4x256xbf16>,
    %c0_86 = arith.constant 0 : index
    %c0_87 = arith.constant 0 : index
    %c4_88 = arith.constant 4 : index
    %c2_89 = arith.constant 2 : index
    %56 = vector.load %arg6[%c0_86, %c0_87, %c4_88, %c2_89] : memref<1x4x24x24xf32, #tpu.memory_space<vmem>>, vector<1x4x16x16xf32>
    %57 = vector.shape_cast %56 : vector<1x4x16x16xf32> to vector<1x4x256xf32>
    %58 = arith.truncf %57 : vector<1x4x256xf32> to vector<1x4x256xbf16>
    %c0_90 = arith.constant 0 : index
    %c52 = arith.constant 52 : index
    %c0_91 = arith.constant 0 : index
    %59 = vector.load %arg7[%c0_90, %c52, %c0_91] : memref<1x112x256xbf16, #tpu.memory_space<vmem>>, vector<1x4x256xbf16>
    tpu.vector_store %arg7[%c0_90, %c52, %c0_91], %58 {strides = array<i32>} : memref<1x112x256xbf16, #tpu.memory_space<vmem>>, vector<1x4x256xbf16>,
    %c0_92 = arith.constant 0 : index
    %c0_93 = arith.constant 0 : index
    %c4_94 = arith.constant 4 : index
    %c4_95 = arith.constant 4 : index
    %60 = vector.load %arg6[%c0_92, %c0_93, %c4_94, %c4_95] : memref<1x4x24x24xf32, #tpu.memory_space<vmem>>, vector<1x4x16x16xf32>
    %61 = vector.shape_cast %60 : vector<1x4x16x16xf32> to vector<1x4x256xf32>
    %62 = arith.truncf %61 : vector<1x4x256xf32> to vector<1x4x256xbf16>
    %c0_96 = arith.constant 0 : index
    %c56 = arith.constant 56 : index
    %c0_97 = arith.constant 0 : index
    %63 = vector.load %arg7[%c0_96, %c56, %c0_97] : memref<1x112x256xbf16, #tpu.memory_space<vmem>>, vector<1x4x256xbf16>
    tpu.vector_store %arg7[%c0_96, %c56, %c0_97], %62 {strides = array<i32>} : memref<1x112x256xbf16, #tpu.memory_space<vmem>>, vector<1x4x256xbf16>,
    %c0_98 = arith.constant 0 : index
    %c0_99 = arith.constant 0 : index
    %c4_100 = arith.constant 4 : index
    %c6_101 = arith.constant 6 : index
    %64 = vector.load %arg6[%c0_98, %c0_99, %c4_100, %c6_101] : memref<1x4x24x24xf32, #tpu.memory_space<vmem>>, vector<1x4x16x16xf32>
    %65 = vector.shape_cast %64 : vector<1x4x16x16xf32> to vector<1x4x256xf32>
    %66 = arith.truncf %65 : vector<1x4x256xf32> to vector<1x4x256xbf16>
    %c0_102 = arith.constant 0 : index
    %c60 = arith.constant 60 : index
    %c0_103 = arith.constant 0 : index
    %67 = vector.load %arg7[%c0_102, %c60, %c0_103] : memref<1x112x256xbf16, #tpu.memory_space<vmem>>, vector<1x4x256xbf16>
    tpu.vector_store %arg7[%c0_102, %c60, %c0_103], %66 {strides = array<i32>} : memref<1x112x256xbf16, #tpu.memory_space<vmem>>, vector<1x4x256xbf16>,
    %c0_104 = arith.constant 0 : index
    %c0_105 = arith.constant 0 : index
    %c6_106 = arith.constant 6 : index
    %c2_107 = arith.constant 2 : index
    %68 = vector.load %arg6[%c0_104, %c0_105, %c6_106, %c2_107] : memref<1x4x24x24xf32, #tpu.memory_space<vmem>>, vector<1x4x16x16xf32>
    %69 = vector.shape_cast %68 : vector<1x4x16x16xf32> to vector<1x4x256xf32>
    %70 = arith.truncf %69 : vector<1x4x256xf32> to vector<1x4x256xbf16>
    %c0_108 = arith.constant 0 : index
    %c64 = arith.constant 64 : index
    %c0_109 = arith.constant 0 : index
    %71 = vector.load %arg7[%c0_108, %c64, %c0_109] : memref<1x112x256xbf16, #tpu.memory_space<vmem>>, vector<1x4x256xbf16>
    tpu.vector_store %arg7[%c0_108, %c64, %c0_109], %70 {strides = array<i32>} : memref<1x112x256xbf16, #tpu.memory_space<vmem>>, vector<1x4x256xbf16>,
    %c0_110 = arith.constant 0 : index
    %c0_111 = arith.constant 0 : index
    %c6_112 = arith.constant 6 : index
    %c4_113 = arith.constant 4 : index
    %72 = vector.load %arg6[%c0_110, %c0_111, %c6_112, %c4_113] : memref<1x4x24x24xf32, #tpu.memory_space<vmem>>, vector<1x4x16x16xf32>
    %73 = vector.shape_cast %72 : vector<1x4x16x16xf32> to vector<1x4x256xf32>
    %74 = arith.truncf %73 : vector<1x4x256xf32> to vector<1x4x256xbf16>
    %c0_114 = arith.constant 0 : index
    %c68 = arith.constant 68 : index
    %c0_115 = arith.constant 0 : index
    %75 = vector.load %arg7[%c0_114, %c68, %c0_115] : memref<1x112x256xbf16, #tpu.memory_space<vmem>>, vector<1x4x256xbf16>
    tpu.vector_store %arg7[%c0_114, %c68, %c0_115], %74 {strides = array<i32>} : memref<1x112x256xbf16, #tpu.memory_space<vmem>>, vector<1x4x256xbf16>,
    %c0_116 = arith.constant 0 : index
    %c0_117 = arith.constant 0 : index
    %c6_118 = arith.constant 6 : index
    %c6_119 = arith.constant 6 : index
    %76 = vector.load %arg6[%c0_116, %c0_117, %c6_118, %c6_119] : memref<1x4x24x24xf32, #tpu.memory_space<vmem>>, vector<1x4x16x16xf32>
    %77 = vector.shape_cast %76 : vector<1x4x16x16xf32> to vector<1x4x256xf32>
    %78 = arith.truncf %77 : vector<1x4x256xf32> to vector<1x4x256xbf16>
    %c0_120 = arith.constant 0 : index
    %c72 = arith.constant 72 : index
    %c0_121 = arith.constant 0 : index
    %79 = vector.load %arg7[%c0_120, %c72, %c0_121] : memref<1x112x256xbf16, #tpu.memory_space<vmem>>, vector<1x4x256xbf16>
    tpu.vector_store %arg7[%c0_120, %c72, %c0_121], %78 {strides = array<i32>} : memref<1x112x256xbf16, #tpu.memory_space<vmem>>, vector<1x4x256xbf16>,
    %c0_122 = arith.constant 0 : index
    %c0_123 = arith.constant 0 : index
    %c0_124 = arith.constant 0 : index
    %c0_125 = arith.constant 0 : index
    %80 = vector.load %arg6[%c0_122, %c0_123, %c0_124, %c0_125] : memref<1x4x24x24xf32, #tpu.memory_space<vmem>>, vector<1x4x16x16xf32>
    %81 = vector.shape_cast %80 : vector<1x4x16x16xf32> to vector<1x4x256xf32>
    %82 = arith.truncf %81 : vector<1x4x256xf32> to vector<1x4x256xbf16>
    %c0_126 = arith.constant 0 : index
    %c76 = arith.constant 76 : index
    %c0_127 = arith.constant 0 : index
    %83 = vector.load %arg7[%c0_126, %c76, %c0_127] : memref<1x112x256xbf16, #tpu.memory_space<vmem>>, vector<1x4x256xbf16>
    tpu.vector_store %arg7[%c0_126, %c76, %c0_127], %82 {strides = array<i32>} : memref<1x112x256xbf16, #tpu.memory_space<vmem>>, vector<1x4x256xbf16>,
    %c0_128 = arith.constant 0 : index
    %c0_129 = arith.constant 0 : index
    %c0_130 = arith.constant 0 : index
    %c4_131 = arith.constant 4 : index
    %84 = vector.load %arg6[%c0_128, %c0_129, %c0_130, %c4_131] : memref<1x4x24x24xf32, #tpu.memory_space<vmem>>, vector<1x4x16x16xf32>
    %85 = vector.shape_cast %84 : vector<1x4x16x16xf32> to vector<1x4x256xf32>
    %86 = arith.truncf %85 : vector<1x4x256xf32> to vector<1x4x256xbf16>
    %c0_132 = arith.constant 0 : index
    %c80 = arith.constant 80 : index
    %c0_133 = arith.constant 0 : index
    %87 = vector.load %arg7[%c0_132, %c80, %c0_133] : memref<1x112x256xbf16, #tpu.memory_space<vmem>>, vector<1x4x256xbf16>
    tpu.vector_store %arg7[%c0_132, %c80, %c0_133], %86 {strides = array<i32>} : memref<1x112x256xbf16, #tpu.memory_space<vmem>>, vector<1x4x256xbf16>,
    %c0_134 = arith.constant 0 : index
    %c0_135 = arith.constant 0 : index
    %c0_136 = arith.constant 0 : index
    %c8_137 = arith.constant 8 : index
    %88 = vector.load %arg6[%c0_134, %c0_135, %c0_136, %c8_137] : memref<1x4x24x24xf32, #tpu.memory_space<vmem>>, vector<1x4x16x16xf32>
    %89 = vector.shape_cast %88 : vector<1x4x16x16xf32> to vector<1x4x256xf32>
    %90 = arith.truncf %89 : vector<1x4x256xf32> to vector<1x4x256xbf16>
    %c0_138 = arith.constant 0 : index
    %c84 = arith.constant 84 : index
    %c0_139 = arith.constant 0 : index
    %91 = vector.load %arg7[%c0_138, %c84, %c0_139] : memref<1x112x256xbf16, #tpu.memory_space<vmem>>, vector<1x4x256xbf16>
    tpu.vector_store %arg7[%c0_138, %c84, %c0_139], %90 {strides = array<i32>} : memref<1x112x256xbf16, #tpu.memory_space<vmem>>, vector<1x4x256xbf16>,
    %c0_140 = arith.constant 0 : index
    %c0_141 = arith.constant 0 : index
    %c4_142 = arith.constant 4 : index
    %c0_143 = arith.constant 0 : index
    %92 = vector.load %arg6[%c0_140, %c0_141, %c4_142, %c0_143] : memref<1x4x24x24xf32, #tpu.memory_space<vmem>>, vector<1x4x16x16xf32>
    %93 = vector.shape_cast %92 : vector<1x4x16x16xf32> to vector<1x4x256xf32>
    %94 = arith.truncf %93 : vector<1x4x256xf32> to vector<1x4x256xbf16>
    %c0_144 = arith.constant 0 : index
    %c88 = arith.constant 88 : index
    %c0_145 = arith.constant 0 : index
    %95 = vector.load %arg7[%c0_144, %c88, %c0_145] : memref<1x112x256xbf16, #tpu.memory_space<vmem>>, vector<1x4x256xbf16>
    tpu.vector_store %arg7[%c0_144, %c88, %c0_145], %94 {strides = array<i32>} : memref<1x112x256xbf16, #tpu.memory_space<vmem>>, vector<1x4x256xbf16>,
    %c0_146 = arith.constant 0 : index
    %c0_147 = arith.constant 0 : index
    %c4_148 = arith.constant 4 : index
    %c4_149 = arith.constant 4 : index
    %96 = vector.load %arg6[%c0_146, %c0_147, %c4_148, %c4_149] : memref<1x4x24x24xf32, #tpu.memory_space<vmem>>, vector<1x4x16x16xf32>
    %97 = vector.shape_cast %96 : vector<1x4x16x16xf32> to vector<1x4x256xf32>
    %98 = arith.truncf %97 : vector<1x4x256xf32> to vector<1x4x256xbf16>
    %c0_150 = arith.constant 0 : index
    %c92 = arith.constant 92 : index
    %c0_151 = arith.constant 0 : index
    %99 = vector.load %arg7[%c0_150, %c92, %c0_151] : memref<1x112x256xbf16, #tpu.memory_space<vmem>>, vector<1x4x256xbf16>
    tpu.vector_store %arg7[%c0_150, %c92, %c0_151], %98 {strides = array<i32>} : memref<1x112x256xbf16, #tpu.memory_space<vmem>>, vector<1x4x256xbf16>,
    %c0_152 = arith.constant 0 : index
    %c0_153 = arith.constant 0 : index
    %c4_154 = arith.constant 4 : index
    %c8_155 = arith.constant 8 : index
    %100 = vector.load %arg6[%c0_152, %c0_153, %c4_154, %c8_155] : memref<1x4x24x24xf32, #tpu.memory_space<vmem>>, vector<1x4x16x16xf32>
    %101 = vector.shape_cast %100 : vector<1x4x16x16xf32> to vector<1x4x256xf32>
    %102 = arith.truncf %101 : vector<1x4x256xf32> to vector<1x4x256xbf16>
    %c0_156 = arith.constant 0 : index
    %c96 = arith.constant 96 : index
    %c0_157 = arith.constant 0 : index
    %103 = vector.load %arg7[%c0_156, %c96, %c0_157] : memref<1x112x256xbf16, #tpu.memory_space<vmem>>, vector<1x4x256xbf16>
    tpu.vector_store %arg7[%c0_156, %c96, %c0_157], %102 {strides = array<i32>} : memref<1x112x256xbf16, #tpu.memory_space<vmem>>, vector<1x4x256xbf16>,
    %c0_158 = arith.constant 0 : index
    %c0_159 = arith.constant 0 : index
    %c8_160 = arith.constant 8 : index
    %c0_161 = arith.constant 0 : index
    %104 = vector.load %arg6[%c0_158, %c0_159, %c8_160, %c0_161] : memref<1x4x24x24xf32, #tpu.memory_space<vmem>>, vector<1x4x16x16xf32>
    %105 = vector.shape_cast %104 : vector<1x4x16x16xf32> to vector<1x4x256xf32>
    %106 = arith.truncf %105 : vector<1x4x256xf32> to vector<1x4x256xbf16>
    %c0_162 = arith.constant 0 : index
    %c100 = arith.constant 100 : index
    %c0_163 = arith.constant 0 : index
    %107 = vector.load %arg7[%c0_162, %c100, %c0_163] : memref<1x112x256xbf16, #tpu.memory_space<vmem>>, vector<1x4x256xbf16>
    tpu.vector_store %arg7[%c0_162, %c100, %c0_163], %106 {strides = array<i32>} : memref<1x112x256xbf16, #tpu.memory_space<vmem>>, vector<1x4x256xbf16>,
    %c0_164 = arith.constant 0 : index
    %c0_165 = arith.constant 0 : index
    %c8_166 = arith.constant 8 : index
    %c4_167 = arith.constant 4 : index
    %108 = vector.load %arg6[%c0_164, %c0_165, %c8_166, %c4_167] : memref<1x4x24x24xf32, #tpu.memory_space<vmem>>, vector<1x4x16x16xf32>
    %109 = vector.shape_cast %108 : vector<1x4x16x16xf32> to vector<1x4x256xf32>
    %110 = arith.truncf %109 : vector<1x4x256xf32> to vector<1x4x256xbf16>
    %c0_168 = arith.constant 0 : index
    %c104 = arith.constant 104 : index
    %c0_169 = arith.constant 0 : index
    %111 = vector.load %arg7[%c0_168, %c104, %c0_169] : memref<1x112x256xbf16, #tpu.memory_space<vmem>>, vector<1x4x256xbf16>
    tpu.vector_store %arg7[%c0_168, %c104, %c0_169], %110 {strides = array<i32>} : memref<1x112x256xbf16, #tpu.memory_space<vmem>>, vector<1x4x256xbf16>,
    %c0_170 = arith.constant 0 : index
    %c0_171 = arith.constant 0 : index
    %c8_172 = arith.constant 8 : index
    %c8_173 = arith.constant 8 : index
    %112 = vector.load %arg6[%c0_170, %c0_171, %c8_172, %c8_173] : memref<1x4x24x24xf32, #tpu.memory_space<vmem>>, vector<1x4x16x16xf32>
    %113 = vector.shape_cast %112 : vector<1x4x16x16xf32> to vector<1x4x256xf32>
    %114 = arith.truncf %113 : vector<1x4x256xf32> to vector<1x4x256xbf16>
    %c0_174 = arith.constant 0 : index
    %c108 = arith.constant 108 : index
    %c0_175 = arith.constant 0 : index
    %115 = vector.load %arg7[%c0_174, %c108, %c0_175] : memref<1x112x256xbf16, #tpu.memory_space<vmem>>, vector<1x4x256xbf16>
    tpu.vector_store %arg7[%c0_174, %c108, %c0_175], %114 {strides = array<i32>} : memref<1x112x256xbf16, #tpu.memory_space<vmem>>, vector<1x4x256xbf16>,
    %c0_176 = arith.constant 0 : index
    %c0_177 = arith.constant 0 : index
    %116 = vector.load %arg2[%c0_176, %c0_177] : memref<8x112xbf16, #tpu.memory_space<vmem>>, vector<8x112xbf16>
    %c0_178 = arith.constant 0 : index
    %c0_179 = arith.constant 0 : index
    %c0_180 = arith.constant 0 : index
    %117 = vector.load %arg7[%c0_178, %c0_179, %c0_180] : memref<1x112x256xbf16, #tpu.memory_space<vmem>>, vector<1x112x256xbf16>
    %118 = vector.shape_cast %117 : vector<1x112x256xbf16> to vector<112x256xbf16>
    %cst_181 = arith.constant dense<0.000000e+00> : vector<8x256xf32>
    %119 = tpu.matmul %116, %118, %cst_181 {dimension_numbers = #tpu.dot_dimension_numbers<[1], [0], [0], [1], [0, 0, 1, 1], [], []>} : vector<8x112xbf16>, vector<112x256xbf16>, vector<8x256xf32> -> vector<8x256xf32>
    %c0_182 = arith.constant 0 : index
    %c0_183 = arith.constant 0 : index
    %c0_184 = arith.constant 0 : index
    %120 = vector.load %arg3[%c0_182, %c0_183, %c0_184] : memref<1x8x256xf32, #tpu.memory_space<vmem>>, vector<1x8x256xf32>
    %121 = vector.shape_cast %120 : vector<1x8x256xf32> to vector<8x256xf32>
    %122 = vector.shape_cast %119 : vector<8x256xf32> to vector<1x8x256xf32>
    tpu.vector_store %arg3[%c0_182, %c0_183, %c0_184], %122 {strides = array<i32>} : memref<1x8x256xf32, #tpu.memory_space<vmem>>, vector<1x8x256xf32>,
    %cst_185 = arith.constant dense<0.000000e+00> : vector<8xf32>
    %123 = vector.multi_reduction <add>, %119, %cst_185 [1] : vector<8x256xf32> to vector<8xf32>
    %124 = vector.shape_cast %123 : vector<8xf32> to vector<8x1xf32>
    %cst_186 = arith.constant 3.906250e-03 : f32
    %125 = vector.broadcast %cst_186 : f32 to vector<8x1xf32>
    %126 = arith.mulf %124, %125 : vector<8x1xf32>
    %127 = vector.broadcast %126 : vector<8x1xf32> to vector<8x256xf32>
    %128 = arith.subf %119, %127 : vector<8x256xf32>
    %c0_187 = arith.constant 0 : index
    %c0_188 = arith.constant 0 : index
    %c0_189 = arith.constant 0 : index
    %129 = vector.load %arg4[%c0_187, %c0_188, %c0_189] : memref<1x8x1xf32, #tpu.memory_space<vmem>>, vector<1x8x1xf32>
    %130 = vector.shape_cast %129 : vector<1x8x1xf32> to vector<8x1xf32>
    %131 = vector.shape_cast %124 : vector<8x1xf32> to vector<1x8x1xf32>
    tpu.vector_store %arg4[%c0_187, %c0_188, %c0_189], %131 {strides = array<i32>} : memref<1x8x1xf32, #tpu.memory_space<vmem>>, vector<1x8x1xf32>,
    %132 = arith.mulf %128, %128 : vector<8x256xf32>
    %cst_190 = arith.constant dense<0.000000e+00> : vector<8xf32>
    %133 = vector.multi_reduction <add>, %132, %cst_190 [1] : vector<8x256xf32> to vector<8xf32>
    %134 = vector.shape_cast %133 : vector<8xf32> to vector<8x1xf32>
    %c0_191 = arith.constant 0 : index
    %c0_192 = arith.constant 0 : index
    %c0_193 = arith.constant 0 : index
    %135 = vector.load %arg5[%c0_191, %c0_192, %c0_193] : memref<1x8x1xf32, #tpu.memory_space<vmem>>, vector<1x8x1xf32>
    %136 = vector.shape_cast %135 : vector<1x8x1xf32> to vector<8x1xf32>
    %137 = vector.shape_cast %134 : vector<8x1xf32> to vector<1x8x1xf32>
    tpu.vector_store %arg5[%c0_191, %c0_192, %c0_193], %137 {strides = array<i32>} : memref<1x8x1xf32, #tpu.memory_space<vmem>>, vector<1x8x1xf32>,
    return
  }
  func.func @transform_0(%arg0: i32) -> (i32, i32, i32, i32) {
    %c0_i32 = arith.constant 0 : i32
    %c0_i32_0 = arith.constant 0 : i32
    %c0_i32_1 = arith.constant 0 : i32
    %c0_i32_2 = arith.constant 0 : i32
    return %arg0, %c0_i32, %c0_i32_0, %c0_i32_1 : i32, i32, i32, i32
  }
  func.func @transform_1(%arg0: i32) -> (i32, i32) {
    %c0_i32 = arith.constant 0 : i32
    %c0_i32_0 = arith.constant 0 : i32
    %c0_i32_1 = arith.constant 0 : i32
    return %c0_i32, %c0_i32_0 : i32, i32
  }
  func.func @transform_2(%arg0: i32) -> (i32, i32, i32) {
    %c0_i32 = arith.constant 0 : i32
    %c0_i32_0 = arith.constant 0 : i32
    %c0_i32_1 = arith.constant 0 : i32
    return %arg0, %c0_i32, %c0_i32_0 : i32, i32, i32
  }
  func.func @transform_3(%arg0: i32) -> (i32, i32, i32) {
    %c0_i32 = arith.constant 0 : i32
    %c0_i32_0 = arith.constant 0 : i32
    %c0_i32_1 = arith.constant 0 : i32
    return %arg0, %c0_i32, %c0_i32_0 : i32, i32, i32
  }
  func.func @transform_4(%arg0: i32) -> (i32, i32, i32) {
    %c0_i32 = arith.constant 0 : i32
    %c0_i32_0 = arith.constant 0 : i32
    %c0_i32_1 = arith.constant 0 : i32
    return %arg0, %c0_i32, %c0_i32_0 : i32, i32, i32
  }
}

module attributes {stable_mosaic.version = 11 : i64} {
  func.func @_bn_relu_kernel(%arg0: i32, %arg1: memref<8x1xf32, #tpu.memory_space<vmem>>, %arg2: memref<8x1xf32, #tpu.memory_space<vmem>>, %arg3: memref<1x8x256xf32, #tpu.memory_space<vmem>>, %arg4: memref<1x8x256xf32, #tpu.memory_space<vmem>>) attributes {dimension_semantics = [#tpu.dimension_semantics<parallel>], iteration_bounds = array<i64: 2>, scalar_prefetch = 0 : i64, scratch_operands = 0 : i64, tpu.core_type = #tpu.core_type<tc>, window_params = [{pipeline_mode = #tpu.pipeline_mode<synchronous>, transform_indices = @transform_0, window_bounds = array<i64: 8, 1>}, {pipeline_mode = #tpu.pipeline_mode<synchronous>, transform_indices = @transform_1, window_bounds = array<i64: 8, 1>}, {transform_indices = @transform_2, window_bounds = array<i64: 1, 8, 256>}, {transform_indices = @transform_3, window_bounds = array<i64: 1, 8, 256>}]} {
    %c0 = arith.constant 0 : index
    %c0_0 = arith.constant 0 : index
    %c0_1 = arith.constant 0 : index
    %0 = vector.load %arg3[%c0, %c0_0, %c0_1] : memref<1x8x256xf32, #tpu.memory_space<vmem>>, vector<1x8x256xf32>
    %c0_2 = arith.constant 0 : index
    %c0_3 = arith.constant 0 : index
    %1 = vector.load %arg1[%c0_2, %c0_3] : memref<8x1xf32, #tpu.memory_space<vmem>>, vector<8x1xf32>
    %2 = vector.shape_cast %1 : vector<8x1xf32> to vector<1x8x1xf32>
    %3 = vector.broadcast %2 : vector<1x8x1xf32> to vector<1x8x256xf32>
    %4 = arith.mulf %0, %3 : vector<1x8x256xf32>
    %c0_4 = arith.constant 0 : index
    %c0_5 = arith.constant 0 : index
    %5 = vector.load %arg2[%c0_4, %c0_5] : memref<8x1xf32, #tpu.memory_space<vmem>>, vector<8x1xf32>
    %6 = vector.shape_cast %5 : vector<8x1xf32> to vector<1x8x1xf32>
    %7 = vector.broadcast %6 : vector<1x8x1xf32> to vector<1x8x256xf32>
    %8 = arith.addf %4, %7 : vector<1x8x256xf32>
    %cst = arith.constant 0.000000e+00 : f32
    %9 = vector.broadcast %cst : f32 to vector<1x8x256xf32>
    %10 = arith.maximumf %8, %9 : vector<1x8x256xf32>
    %c0_6 = arith.constant 0 : index
    %c0_7 = arith.constant 0 : index
    %c0_8 = arith.constant 0 : index
    %11 = vector.load %arg4[%c0_6, %c0_7, %c0_8] : memref<1x8x256xf32, #tpu.memory_space<vmem>>, vector<1x8x256xf32>
    tpu.vector_store %arg4[%c0_6, %c0_7, %c0_8], %10 {strides = array<i32>} : memref<1x8x256xf32, #tpu.memory_space<vmem>>, vector<1x8x256xf32>,
    return
  }
  func.func @transform_0(%arg0: i32) -> (i32, i32) {
    %c0_i32 = arith.constant 0 : i32
    %c0_i32_0 = arith.constant 0 : i32
    %c0_i32_1 = arith.constant 0 : i32
    return %c0_i32, %c0_i32_0 : i32, i32
  }
  func.func @transform_1(%arg0: i32) -> (i32, i32) {
    %c0_i32 = arith.constant 0 : i32
    %c0_i32_0 = arith.constant 0 : i32
    %c0_i32_1 = arith.constant 0 : i32
    return %c0_i32, %c0_i32_0 : i32, i32
  }
  func.func @transform_2(%arg0: i32) -> (i32, i32, i32) {
    %c0_i32 = arith.constant 0 : i32
    %c0_i32_0 = arith.constant 0 : i32
    %c0_i32_1 = arith.constant 0 : i32
    return %arg0, %c0_i32, %c0_i32_0 : i32, i32, i32
  }
  func.func @transform_3(%arg0: i32) -> (i32, i32, i32) {
    %c0_i32 = arith.constant 0 : i32
    %c0_i32_0 = arith.constant 0 : i32
    %c0_i32_1 = arith.constant 0 : i32
    return %arg0, %c0_i32, %c0_i32_0 : i32, i32, i32
  }
}

</mosaic_0001>

<llo_original>
// kernel: _forward.3
$region0: #{_forward.3}
  #allocation0 [shape = 'u32[]', space=smem, size = 0x4, offset = 0x4, fixed_abs, tag = 'smem constant byte address 0x4 - core index']
  #allocation1 [shape = 'u32[72,128]{1,0:T(1,128)}', space=vmem, size = 0x9000, scoped, tag = 'internal scratch']
  %s0 = inlined_call_operand.vmem [shape: f32[8,1], index: 0, kind: input, shape index: {}]
  %s1 = inlined_call_operand.vmem [shape: f32[8,1], index: 1, kind: input, shape index: {}]
  %s2 = inlined_call_operand.vmem [shape: f32[2,8,256], index: 2, kind: input, shape index: {}, may-alias: {2,3}]
  %s3 = inlined_call_operand.vmem [shape: f32[2,8,256], index: 3, kind: output, shape index: {}, may-alias: {2,3}]
  %s4 = sld [smem:[#allocation0]]
  $region45: #{_forward.3} parent=0
    _
  %s6 = ssub.s32 1, %s4
  %s7 = scalar_select 0, %s6, %s4
  loop: start=0, step=1, limit=4
  $region2: #{_forward.3} parent=0 // loop_pre_header
    _
  $region3: #{_forward.3} parent=0 // loop_header
    %s9 = sphi 0, %s13
    %p10 = scmp.ge.s32.totalorder %s9, 4
    %s17 = sphi 0, %s17
    %s19 = sphi 0, %s17
    %s20 = sphi 0, %s19
    %s34 = sphi 0, %s20
    %s38 = sphi 0, %s38
    %s40 = sphi 0, %s38
    %s41 = sphi 0, %s40
    %s55 = sphi 0, %s41
    %s61 = sphi 0, %s63
    %s64 = sphi 0, %s61
    %s65 = sphi 0, %s64
    %s81 = sphi 0, %s65
    %s87 = sphi 0, %s89
    %s90 = sphi 0, %s87
    %s91 = sphi 0, %s90
    %s107 = sphi 0, %s91
  $region4: #{_forward.3} parent=0 // loop_header_branch
    %12 = sbr.rel (%p10) target = $region8
  $region5: #{_forward.3} parent=0 // loop_body
    %s14 = ssub.s32 %s9, 1
    %s15 = ssub.s32 %s9, 2
    %s16 = sadd.s32 %s9, 1
    %s18 = sadd.s32 %s17, 1
    %p21 = scmp.eq.s32.totalorder %s9, 1
    %p22 = scmp.ne.s32.totalorder %s17, %s19
    %p23 = scmp.eq.s32.totalorder %s9, 0
    %p24 = por %p22, %p23
    %p25 = scmp.ne.s32.totalorder %s17, %s19
    %p26 = scmp.eq.s32.totalorder %s14, 1
    %p27 = por %p25, %p26
    %p28 = scmp.ne.s32.totalorder %s19, %s20
    %p29 = scmp.eq.s32.totalorder %s14, 0
    %p30 = por %p28, %p29
    %p31 = scmp.ne.s32.totalorder %s19, %s20
    %p32 = scmp.eq.s32.totalorder %s15, 1
    %p33 = por %p31, %p32
    %p35 = scmp.ne.s32.totalorder %s20, %s34
    %p36 = scmp.eq.s32.totalorder %s15, 0
    %p37 = por %p35, %p36
    %s39 = sadd.s32 %s38, 1
    %p42 = scmp.eq.s32.totalorder %s9, 1
    %p43 = scmp.ne.s32.totalorder %s38, %s40
    %p44 = scmp.eq.s32.totalorder %s9, 0
    %p45 = por %p43, %p44
    %p46 = scmp.ne.s32.totalorder %s38, %s40
    %p47 = scmp.eq.s32.totalorder %s14, 1
    %p48 = por %p46, %p47
    %p49 = scmp.ne.s32.totalorder %s40, %s41
    %p50 = scmp.eq.s32.totalorder %s14, 0
    %p51 = por %p49, %p50
    %p52 = scmp.ne.s32.totalorder %s40, %s41
    %p53 = scmp.eq.s32.totalorder %s15, 1
    %p54 = por %p52, %p53
    %p56 = scmp.ne.s32.totalorder %s41, %s55
    %p57 = scmp.eq.s32.totalorder %s15, 0
    %p58 = por %p56, %p57
    %s59 = ssub.s32 %s9, %s16
    %p60 = scmp.eq.s32.totalorder %s59, 0
    %s62 = sadd.s32 %s61, 1
    %s63 = scalar_select %p60, %s61, %s62
    %p66 = pneg %p60
    %p67 = scmp.eq.s32.totalorder %s9, 1
    %p68 = por %p66, %p67
    %p69 = scmp.ne.s32.totalorder %s61, %s64
    %p70 = scmp.eq.s32.totalorder %s9, 0
    %p71 = por %p69, %p70
    %p72 = scmp.ne.s32.totalorder %s61, %s64
    %p73 = scmp.eq.s32.totalorder %s14, 1
    %p74 = por %p72, %p73
    %p75 = scmp.ne.s32.totalorder %s64, %s65
    %p76 = scmp.eq.s32.totalorder %s14, 0
    %p77 = por %p75, %p76
    %p78 = scmp.ne.s32.totalorder %s64, %s65
    %p79 = scmp.eq.s32.totalorder %s15, 1
    %p80 = por %p78, %p79
    %p82 = scmp.ne.s32.totalorder %s65, %s81
    %p83 = scmp.eq.s32.totalorder %s15, 0
    %p84 = por %p82, %p83
    %s85 = ssub.s32 %s9, %s16
    %p86 = scmp.eq.s32.totalorder %s85, 0
    %s88 = sadd.s32 %s87, 1
    %s89 = scalar_select %p86, %s87, %s88
    %p92 = pneg %p86
    %p93 = scmp.eq.s32.totalorder %s9, 1
    %p94 = por %p92, %p93
    %p95 = scmp.ne.s32.totalorder %s87, %s90
    %p96 = scmp.eq.s32.totalorder %s9, 0
    %p97 = por %p95, %p96
    %p98 = scmp.ne.s32.totalorder %s87, %s90
    %p99 = scmp.eq.s32.totalorder %s14, 1
    %p100 = por %p98, %p99
    %p101 = scmp.ne.s32.totalorder %s90, %s91
    %p102 = scmp.eq.s32.totalorder %s14, 0
    %p103 = por %p101, %p102
    %p104 = scmp.ne.s32.totalorder %s90, %s91
    %p105 = scmp.eq.s32.totalorder %s15, 1
    %p106 = por %p104, %p105
    %p108 = scmp.ne.s32.totalorder %s91, %s107
    %p109 = scmp.eq.s32.totalorder %s15, 0
    %p110 = por %p108, %p109
    %p111 = scmp.le.s32.totalorder 1, %s9
    %p112 = scmp.lt.s32.totalorder %s9, 3
    %p113 = pnand %p111, %p112
    %p114 = pneg %p113
    // Predicated region
    $region9: #{_forward.3} parent=5 // pred_check
      _
    $region10: #{_forward.3} parent=5 // pred_check_branch
      %116 = sbr.rel (%p113) target = $region12
    $region11: #{_forward.3} parent=5 // pred_region
      %s117 = ssub.s32 %s9, 1
      // Predicated region
      $region13: #{_forward.3} parent=11 // pred_check
        %p118 = pneg %p30
      $region14: #{_forward.3} parent=11 // pred_check_branch
        %120 = sbr.rel (%p118) target = $region16
      $region15: #{_forward.3} parent=11 // pred_region
        _
      $region16: #{_forward.3} parent=11 // pred_fallthru
        _
      // Predicated region
      $region17: #{_forward.3} parent=11 // pred_check
        %p121 = pneg %p51
      $region18: #{_forward.3} parent=11 // pred_check_branch
        %123 = sbr.rel (%p121) target = $region20
      $region19: #{_forward.3} parent=11 // pred_region
        _
      $region20: #{_forward.3} parent=11 // pred_fallthru
        _
    $region12: #{_forward.3} parent=5 // pred_fallthru
      _
    %p124 = scmp.lt.s32.totalorder %s9, 2
    // Predicated region
    $region21: #{_forward.3} parent=5 // pred_check
      %p125 = pneg %p124
    $region22: #{_forward.3} parent=5 // pred_check_branch
      %127 = sbr.rel (%p125) target = $region24
    $region23: #{_forward.3} parent=5 // pred_region
      // Predicated region
      $region25: #{_forward.3} parent=23 // pred_check
        %p128 = pneg %p71
      $region26: #{_forward.3} parent=23 // pred_check_branch
        %130 = sbr.rel (%p128) target = $region28
      $region27: #{_forward.3} parent=23 // pred_region
        %p131 = scmp.lt.s32.totalorder %s9, 1
        %s132 = scalar_select %p131, %s9, 1
        %s133 = smul.addr %s132, 2
        %s134 = smul.addr %s133, 8
        %s135 = scalar_lea.vmem %s2, %s134
      $region28: #{_forward.3} parent=23 // pred_fallthru
        _
    $region24: #{_forward.3} parent=5 // pred_fallthru
      _
    %p136 = scmp.le.s32.totalorder 1, %s9
    %p137 = scmp.lt.s32.totalorder %s9, 3
    %p138 = pnand %p136, %p137
    %p139 = pneg %p138
    // Predicated region
    $region29: #{_forward.3} parent=5 // pred_check
      _
    $region30: #{_forward.3} parent=5 // pred_check_branch
      %141 = sbr.rel (%p138) target = $region32
    $region31: #{_forward.3} parent=5 // pred_region
      %s142 = ssub.s32 %s9, 1
      %p143 = pneg %p30
      %p144 = pneg %p27
      %p145 = pneg %p51
      %p146 = pneg %p48
      %p147 = scmp.lt.s32.totalorder %s14, 1
      %s148 = scalar_select %p147, %s14, 1
      %s149 = smul.addr %s148, 2
      %s150 = smul.addr %s149, 8
      %s151 = scalar_lea.vmem %s2, %s150
      %p152 = pneg %p77
      %p153 = pneg %p74
      %p154 = pneg %p103
      %p155 = pneg %p100
      %p156 = scmp.lt.s32.totalorder %s14, 1
      %s157 = scalar_select %p156, %s14, 1
      %s158 = smul.addr %s157, 2
      %s159 = smul.addr %s158, 8
      %s160 = scalar_lea.vmem %s3, %s159
      %p161 = scmp.lt.s32.totalorder %s14, 1
      %s162 = scalar_select %p161, %s14, 1
      %s163 = smul.addr %s162, 2
      %s164 = smul.addr %s163, 8
      %s165 = scalar_lea.vmem %s2, %s164
      %p166 = scmp.lt.s32.totalorder %s14, 1
      %s167 = scalar_select %p166, %s14, 1
      %s168 = smul.addr %s167, 2
      %s169 = smul.addr %s168, 8
      %s170 = scalar_lea.vmem %s3, %s169
      %v171 = vld [vmem:[%s165] sm:$0xff]
      %v172 = vld [vmem:[%s165 + $0x8] sm:$0xff]
      %v173 = vld [vmem:[%s0] sm:$0xff]
      %175 = vset.pattern.permute.xlu0 0
      %176 = vperm.xlu0 %175, %v173
      %v177 = vpop.permute.xlu0 %176
      %v179 = vmul.f32 %v171, %v177
      %v180 = vmul.f32 %v172, %v177
      %v181 = vld [vmem:[%s1] sm:$0xff]
      %183 = vset.pattern.permute.xlu0 0
      %184 = vperm.xlu0 %183, %v181
      %v185 = vpop.permute.xlu0 %184
      %v187 = vadd.f32 %v179, %v185
      %v188 = vadd.f32 %v180, %v185
      %v189 = vmax.f32 %v187, 0.0
      %v190 = vmax.f32 %v188, 0.0
      %191 = vst [vmem:[%s170] sm:$0xff] %v189
      %192 = vst [vmem:[%s170 + $0x8] sm:$0xff] %v190
      %p193 = scmp.lt.s32.totalorder %s14, 1
      %s194 = scalar_select %p193, %s14, 1
      %s195 = smul.addr %s194, 2
      %s196 = smul.addr %s195, 8
      %s197 = scalar_lea.vmem %s3, %s196
      // Predicated region
      $region33: #{_forward.3} parent=31 // pred_check
        %p198 = pneg %p100
      $region34: #{_forward.3} parent=31 // pred_check_branch
        %200 = sbr.rel (%p198) target = $region36
      $region35: #{_forward.3} parent=31 // pred_region
        _
      $region36: #{_forward.3} parent=31 // pred_fallthru
        _
    $region32: #{_forward.3} parent=5 // pred_fallthru
      _
    %p201 = scmp.le.s32.totalorder 2, %s9
    // Predicated region
    $region37: #{_forward.3} parent=5 // pred_check
      %p202 = pneg %p201
    $region38: #{_forward.3} parent=5 // pred_check_branch
      %204 = sbr.rel (%p202) target = $region40
    $region39: #{_forward.3} parent=5 // pred_region
      %s205 = ssub.s32 %s9, 2
      // Predicated region
      $region41: #{_forward.3} parent=39 // pred_check
        %p206 = pneg %p106
      $region42: #{_forward.3} parent=39 // pred_check_branch
        %208 = sbr.rel (%p206) target = $region44
      $region43: #{_forward.3} parent=39 // pred_region
        %p209 = scmp.lt.s32.totalorder %s15, 1
        %s210 = scalar_select %p209, %s15, 1
        %s211 = smul.addr %s210, 2
        %s212 = smul.addr %s211, 8
        %s213 = scalar_lea.vmem %s3, %s212
      $region44: #{_forward.3} parent=39 // pred_fallthru
        _
    $region40: #{_forward.3} parent=5 // pred_fallthru
      _
  $region6: #{_forward.3} parent=0 // loop_footer
    %s13 = sadd.s32 1, %s9
  $region7: #{_forward.3} parent=0 // loop_footer_branch
    %8 = sbr.rel target = $region3
  $region8: #{_forward.3} parent=0 // loop_exit
    _

// kernel: _forward.2
$region0: #{_forward.2}
  #allocation0 [shape = 'u32[]', space=smem, size = 0x4, offset = 0x4, fixed_abs, tag = 'smem constant byte address 0x4 - core index']
  #allocation1 [shape = 'u32[72,128]{1,0:T(1,128)}', space=vmem, size = 0x9000, scoped, tag = 'internal scratch']
  #allocation2 [shape = 'f32[1,4,24,24]{3,2,1,0:T(8,128)}', space=vmem, size = 0xc000, scoped, tag = 'scratch operand']
  #allocation3 [shape = 'bf16[1,112,256]{2,1,0:T(8,128)(2,1)}', space=vmem, size = 0xe000, scoped, tag = 'scratch operand']
  %s0 = inlined_call_operand.hbm [shape: f32[2,4,16,16], index: 0, kind: input, shape index: {}]
  %s1 = inlined_call_operand.vmem [shape: bf16[8,112], index: 1, kind: input, shape index: {}]
  %s2 = inlined_call_operand.vmem [shape: f32[2,8,256], index: 2, kind: output, shape index: {0}]
  %s3 = inlined_call_operand.vmem [shape: f32[2,8,1], index: 3, kind: output, shape index: {1}]
  %s4 = inlined_call_operand.vmem [shape: f32[2,8,1], index: 4, kind: output, shape index: {2}]
  %5 = xla_tuple %s2, %s3, %s4
  %s6 = sld [smem:[#allocation0]]
  $region61: #{_forward.2} parent=0
    _
  %s8 = ssub.s32 1, %s6
  %s9 = scalar_select 0, %s8, %s6
  $region1: #{_forward.2} parent=0
    #allocation4 [shape = 'u8[65536]{0}', space=vmem, size = 0x10000, scoped, tag = 'input window, operand 0']
    #allocation5 [shape = 's32[2]{0}', space=sflag, size = 0x8, scoped, tag = 'scoped memory for _forward.2']
    %10 = vsyncpa [#allocation5], 0
    %s11 = scalar_lea.sflag [#allocation5], 1
    %12 = vsyncpa %s11, 0
    loop: start=0, step=1, limit=4
    $region2: #{_forward.2} parent=1 // loop_pre_header
      _
    $region3: #{_forward.2} parent=1 // loop_header
      %s14 = sphi 0, %s18
      %p15 = scmp.ge.s32.totalorder %s14, 4
      %s24 = sphi 0, %s26
      %s27 = sphi 0, %s24
      %s28 = sphi 0, %s27
      %s44 = sphi 0, %s28
      %s48 = sphi 0, %s48
      %s50 = sphi 0, %s48
      %s51 = sphi 0, %s50
      %s65 = sphi 0, %s51
      %s71 = sphi 0, %s73
      %s74 = sphi 0, %s71
      %s75 = sphi 0, %s74
      %s91 = sphi 0, %s75
      %s97 = sphi 0, %s99
      %s100 = sphi 0, %s97
      %s101 = sphi 0, %s100
      %s117 = sphi 0, %s101
      %s123 = sphi 0, %s125
      %s126 = sphi 0, %s123
      %s127 = sphi 0, %s126
      %s143 = sphi 0, %s127
    $region4: #{_forward.2} parent=1 // loop_header_branch
      %17 = sbr.rel (%p15) target = $region8
    $region5: #{_forward.2} parent=1 // loop_body
      %s19 = ssub.s32 %s14, 1
      %s20 = ssub.s32 %s14, 2
      %s21 = sadd.s32 %s14, 1
      %s22 = ssub.s32 %s14, %s21
      %p23 = scmp.eq.s32.totalorder %s22, 0
      %s25 = sadd.s32 %s24, 1
      %s26 = scalar_select %p23, %s24, %s25
      %p29 = pneg %p23
      %p30 = scmp.eq.s32.totalorder %s14, 1
      %p31 = por %p29, %p30
      %p32 = scmp.ne.s32.totalorder %s24, %s27
      %p33 = scmp.eq.s32.totalorder %s14, 0
      %p34 = por %p32, %p33
      %p35 = scmp.ne.s32.totalorder %s24, %s27
      %p36 = scmp.eq.s32.totalorder %s19, 1
      %p37 = por %p35, %p36
      %p38 = scmp.ne.s32.totalorder %s27, %s28
      %p39 = scmp.eq.s32.totalorder %s19, 0
      %p40 = por %p38, %p39
      %p41 = scmp.ne.s32.totalorder %s27, %s28
      %p42 = scmp.eq.s32.totalorder %s20, 1
      %p43 = por %p41, %p42
      %p45 = scmp.ne.s32.totalorder %s28, %s44
      %p46 = scmp.eq.s32.totalorder %s20, 0
      %p47 = por %p45, %p46
      %s49 = sadd.s32 %s48, 1
      %p52 = scmp.eq.s32.totalorder %s14, 1
      %p53 = scmp.ne.s32.totalorder %s48, %s50
      %p54 = scmp.eq.s32.totalorder %s14, 0
      %p55 = por %p53, %p54
      %p56 = scmp.ne.s32.totalorder %s48, %s50
      %p57 = scmp.eq.s32.totalorder %s19, 1
      %p58 = por %p56, %p57
      %p59 = scmp.ne.s32.totalorder %s50, %s51
      %p60 = scmp.eq.s32.totalorder %s19, 0
      %p61 = por %p59, %p60
      %p62 = scmp.ne.s32.totalorder %s50, %s51
      %p63 = scmp.eq.s32.totalorder %s20, 1
      %p64 = por %p62, %p63
      %p66 = scmp.ne.s32.totalorder %s51, %s65
      %p67 = scmp.eq.s32.totalorder %s20, 0
      %p68 = por %p66, %p67
      %s69 = ssub.s32 %s14, %s21
      %p70 = scmp.eq.s32.totalorder %s69, 0
      %s72 = sadd.s32 %s71, 1
      %s73 = scalar_select %p70, %s71, %s72
      %p76 = pneg %p70
      %p77 = scmp.eq.s32.totalorder %s14, 1
      %p78 = por %p76, %p77
      %p79 = scmp.ne.s32.totalorder %s71, %s74
      %p80 = scmp.eq.s32.totalorder %s14, 0
      %p81 = por %p79, %p80
      %p82 = scmp.ne.s32.totalorder %s71, %s74
      %p83 = scmp.eq.s32.totalorder %s19, 1
      %p84 = por %p82, %p83
      %p85 = scmp.ne.s32.totalorder %s74, %s75
      %p86 = scmp.eq.s32.totalorder %s19, 0
      %p87 = por %p85, %p86
      %p88 = scmp.ne.s32.totalorder %s74, %s75
      %p89 = scmp.eq.s32.totalorder %s20, 1
      %p90 = por %p88, %p89
      %p92 = scmp.ne.s32.totalorder %s75, %s91
      %p93 = scmp.eq.s32.totalorder %s20, 0
      %p94 = por %p92, %p93
      %s95 = ssub.s32 %s14, %s21
      %p96 = scmp.eq.s32.totalorder %s95, 0
      %s98 = sadd.s32 %s97, 1
      %s99 = scalar_select %p96, %s97, %s98
      %p102 = pneg %p96
      %p103 = scmp.eq.s32.totalorder %s14, 1
      %p104 = por %p102, %p103
      %p105 = scmp.ne.s32.totalorder %s97, %s100
      %p106 = scmp.eq.s32.totalorder %s14, 0
      %p107 = por %p105, %p106
      %p108 = scmp.ne.s32.totalorder %s97, %s100
      %p109 = scmp.eq.s32.totalorder %s19, 1
      %p110 = por %p108, %p109
      %p111 = scmp.ne.s32.totalorder %s100, %s101
      %p112 = scmp.eq.s32.totalorder %s19, 0
      %p113 = por %p111, %p112
      %p114 = scmp.ne.s32.totalorder %s100, %s101
      %p115 = scmp.eq.s32.totalorder %s20, 1
      %p116 = por %p114, %p115
      %p118 = scmp.ne.s32.totalorder %s101, %s117
      %p119 = scmp.eq.s32.totalorder %s20, 0
      %p120 = por %p118, %p119
      %s121 = ssub.s32 %s14, %s21
      %p122 = scmp.eq.s32.totalorder %s121, 0
      %s124 = sadd.s32 %s123, 1
      %s125 = scalar_select %p122, %s123, %s124
      %p128 = pneg %p122
      %p129 = scmp.eq.s32.totalorder %s14, 1
      %p130 = por %p128, %p129
      %p131 = scmp.ne.s32.totalorder %s123, %s126
      %p132 = scmp.eq.s32.totalorder %s14, 0
      %p133 = por %p131, %p132
      %p134 = scmp.ne.s32.totalorder %s123, %s126
      %p135 = scmp.eq.s32.totalorder %s19, 1
      %p136 = por %p134, %p135
      %p137 = scmp.ne.s32.totalorder %s126, %s127
      %p138 = scmp.eq.s32.totalorder %s19, 0
      %p139 = por %p137, %p138
      %p140 = scmp.ne.s32.totalorder %s126, %s127
      %p141 = scmp.eq.s32.totalorder %s20, 1
      %p142 = por %p140, %p141
      %p144 = scmp.ne.s32.totalorder %s127, %s143
      %p145 = scmp.eq.s32.totalorder %s20, 0
      %p146 = por %p144, %p145
      %p147 = scmp.le.s32.totalorder 1, %s14
      %p148 = scmp.lt.s32.totalorder %s14, 3
      %p149 = pnand %p147, %p148
      %p150 = pneg %p149
      // Predicated region
      $region9: #{_forward.2} parent=5 // pred_check
        _
      $region10: #{_forward.2} parent=5 // pred_check_branch
        %152 = sbr.rel (%p149) target = $region12
      $region11: #{_forward.2} parent=5 // pred_region
        %s153 = ssub.s32 %s14, 1
        // Predicated region
        $region13: #{_forward.2} parent=11 // pred_check
          %p154 = pneg %p61
        $region14: #{_forward.2} parent=11 // pred_check_branch
          %156 = sbr.rel (%p154) target = $region16
        $region15: #{_forward.2} parent=11 // pred_region
          _
        $region16: #{_forward.2} parent=11 // pred_fallthru
          _
      $region12: #{_forward.2} parent=5 // pred_fallthru
        _
      %p157 = scmp.lt.s32.totalorder %s14, 2
      // Predicated region
      $region17: #{_forward.2} parent=5 // pred_check
        %p158 = pneg %p157
      $region18: #{_forward.2} parent=5 // pred_check_branch
        %160 = sbr.rel (%p158) target = $region20
      $region19: #{_forward.2} parent=5 // pred_region
        // Predicated region
        $region21: #{_forward.2} parent=19 // pred_check
          %p161 = pneg %p34
        $region22: #{_forward.2} parent=19 // pred_check_branch
          %163 = sbr.rel (%p161) target = $region24
        $region23: #{_forward.2} parent=19 // pred_region
          %s164 = sand.u32 %s24, 1
          %s165 = scalar_lea.sflag [#allocation5], %s164
          %s166 = sand.u32 %s24, 1
          %s167 = smul.addr %s166, 64
          %s168 = scalar_lea.vmem [#allocation4], %s167
          %170 = vsyncadd %s165, 0
          %s171 = smul.addr %s14, 8
          %s172 = smul.addr %s171, 8
          %s173 = scalar_lea.hbm %s0, %s172
          %s174 = sshll.u32 %s173, 4
          %s175 = int_to_ptr.hbm [resolvable:$true] %s174
          %s176 = sshll.u32 %s168, 4
          %s177 = int_to_ptr.vmem [resolvable:$true] %s176
          %182 = dma.hbm_to_vmem [thread:$0]  %s175, 1024, %s177, %s165, 128, 128, 8
        $region24: #{_forward.2} parent=19 // pred_fallthru
          _
      $region20: #{_forward.2} parent=5 // pred_fallthru
        _
      %p183 = scmp.le.s32.totalorder 1, %s14
      %p184 = scmp.lt.s32.totalorder %s14, 3
      %p185 = pnand %p183, %p184
      %p186 = pneg %p185
      // Predicated region
      $region25: #{_forward.2} parent=5 // pred_check
        _
      $region26: #{_forward.2} parent=5 // pred_check_branch
        %188 = sbr.rel (%p185) target = $region28
      $region27: #{_forward.2} parent=5 // pred_region
        %s189 = ssub.s32 %s14, 1
        %s190 = sand.u32 %s27, 1
        %s191 = scalar_lea.sflag [#allocation5], %s190
        %s192 = sand.u32 %s27, 1
        %s193 = smul.addr %s192, 64
        %s194 = scalar_lea.vmem [#allocation4], %s193
        // Predicated region
        $region29: #{_forward.2} parent=27 // pred_check
          %p195 = pneg %p40
        $region30: #{_forward.2} parent=27 // pred_check_branch
          %197 = sbr.rel (%p195) target = $region32
        $region31: #{_forward.2} parent=27 // pred_region
          %199 = dma.done %s191, 1024
        $region32: #{_forward.2} parent=27 // pred_fallthru
          _
        %s200 = sand.u32 %s27, 1
        %s201 = scalar_lea.sflag [#allocation5], %s200
        %s202 = sand.u32 %s27, 1
        %s203 = smul.addr %s202, 64
        %s204 = scalar_lea.vmem [#allocation4], %s203
        %p205 = pneg %p40
        %p206 = pneg %p37
        %p207 = pneg %p61
        %p208 = pneg %p58
        %p209 = pneg %p87
        %p210 = pneg %p84
        %p211 = scmp.lt.s32.totalorder %s19, 1
        %s212 = scalar_select %p211, %s19, 1
        %s213 = smul.addr %s212, 2
        %s214 = smul.addr %s213, 8
        %s215 = scalar_lea.vmem %s2, %s214
        %p216 = pneg %p113
        %p217 = pneg %p110
        %p218 = scmp.lt.s32.totalorder %s19, 1
        %s219 = scalar_select %p218, %s19, 1
        %s220 = smul.addr %s219, 8
        %s221 = scalar_lea.vmem %s3, %s220
        %p222 = pneg %p139
        %p223 = pneg %p136
        %p224 = scmp.lt.s32.totalorder %s19, 1
        %s225 = scalar_select %p224, %s19, 1
        %s226 = smul.addr %s225, 8
        %s227 = scalar_lea.vmem %s4, %s226
        %p228 = scmp.lt.s32.totalorder %s19, 1
        %s229 = scalar_select %p228, %s19, 1
        %s230 = smul.addr %s229, 2
        %s231 = smul.addr %s230, 8
        %s232 = scalar_lea.vmem %s2, %s231
        %p233 = scmp.lt.s32.totalorder %s19, 1
        %s234 = scalar_select %p233, %s19, 1
        %s235 = smul.addr %s234, 8
        %s236 = scalar_lea.vmem %s3, %s235
        %p237 = scmp.lt.s32.totalorder %s19, 1
        %s238 = scalar_select %p237, %s19, 1
        %s239 = smul.addr %s238, 8
        %s240 = scalar_lea.vmem %s4, %s239
        %vm242 = vcmask 195584
        %243 = vst.msk [vmem:[#allocation2] sm:$0xff] %vm242, 0.0
        %244 = vst.msk [vmem:[#allocation2 + $0x8] sm:$0xff] %vm242, 0.0
        %245 = vst.msk [vmem:[#allocation2 + $0x10] sm:$0xff] %vm242, 0.0
        %246 = vst.msk [vmem:[#allocation2 + $0x18] sm:$0xff] %vm242, 0.0
        %247 = vst.msk [vmem:[#allocation2 + $0x20] sm:$0xff] %vm242, 0.0
        %248 = vst.msk [vmem:[#allocation2 + $0x28] sm:$0xff] %vm242, 0.0
        %249 = vst.msk [vmem:[#allocation2 + $0x30] sm:$0xff] %vm242, 0.0
        %250 = vst.msk [vmem:[#allocation2 + $0x38] sm:$0xff] %vm242, 0.0
        %251 = vst.msk [vmem:[#allocation2 + $0x40] sm:$0xff] %vm242, 0.0
        %252 = vst.msk [vmem:[#allocation2 + $0x48] sm:$0xff] %vm242, 0.0
        %253 = vst.msk [vmem:[#allocation2 + $0x50] sm:$0xff] %vm242, 0.0
        %254 = vst.msk [vmem:[#allocation2 + $0x58] sm:$0xff] %vm242, 0.0
        %v255 = vld [vmem:[%s194] sm:$0xff]
        %v256 = vld [vmem:[%s194 + $0x8] sm:$0xff]
        %v257 = vld [vmem:[%s194 + $0x10] sm:$0xff]
        %v258 = vld [vmem:[%s194 + $0x18] sm:$0xff]
        %v259 = vld [vmem:[%s194 + $0x20] sm:$0xff]
        %v260 = vld [vmem:[%s194 + $0x28] sm:$0xff]
        %v261 = vld [vmem:[%s194 + $0x30] sm:$0xff]
        %v262 = vld [vmem:[%s194 + $0x38] sm:$0xff]
        %271 = vrot.lane.b32.xlu0 %v255, 4
        %v272 = vpop.permute.xlu0 %271
        %273 = vrot.lane.b32.xlu0 %v256, 4
        %v274 = vpop.permute.xlu0 %273
        %275 = vrot.lane.b32.xlu0 %v257, 4
        %v276 = vpop.permute.xlu0 %275
        %277 = vrot.lane.b32.xlu0 %v258, 4
        %v278 = vpop.permute.xlu0 %277
        %279 = vrot.lane.b32.xlu0 %v259, 4
        %v280 = vpop.permute.xlu0 %279
        %281 = vrot.lane.b32.xlu0 %v260, 4
        %v282 = vpop.permute.xlu0 %281
        %283 = vrot.lane.b32.xlu0 %v261, 4
        %v284 = vpop.permute.xlu0 %283
        %285 = vrot.lane.b32.xlu0 %v262, 4
        %v286 = vpop.permute.xlu0 %285
        %vm295 = vcmask 162848
        %296 = vst.msk [vmem:[#allocation2 + $0x4] sm:$0xff] %vm295, %v272
        %297 = vst.msk [vmem:[#allocation2 + $0xc] sm:$0xff] %vm295, %v274
        %298 = vst.msk [vmem:[#allocation2 + $0x1c] sm:$0xff] %vm295, %v276
        %299 = vst.msk [vmem:[#allocation2 + $0x24] sm:$0xff] %vm295, %v278
        %300 = vst.msk [vmem:[#allocation2 + $0x34] sm:$0xff] %vm295, %v280
        %301 = vst.msk [vmem:[#allocation2 + $0x3c] sm:$0xff] %vm295, %v282
        %302 = vst.msk [vmem:[#allocation2 + $0x4c] sm:$0xff] %vm295, %v284
        %303 = vst.msk [vmem:[#allocation2 + $0x54] sm:$0xff] %vm295, %v286
        %v304 = vld [vmem:[#allocation2 + $0x4] sm:$0xff]
        %v305 = vld [vmem:[#allocation2 + $0xc] sm:$0xff]
        %v306 = vld [vmem:[#allocation2 + $0x1c] sm:$0xff]
        %v307 = vld [vmem:[#allocation2 + $0x24] sm:$0xff]
        %v308 = vld [vmem:[#allocation2 + $0x34] sm:$0xff]
        %v309 = vld [vmem:[#allocation2 + $0x3c] sm:$0xff]
        %v310 = vld [vmem:[#allocation2 + $0x4c] sm:$0xff]
        %v311 = vld [vmem:[#allocation2 + $0x54] sm:$0xff]
        %320 = vrot.lane.b32.xlu0 %v304, 124
        %v321 = vpop.permute.xlu0 %320
        %322 = vrot.lane.b32.xlu0 %v305, 124
        %v323 = vpop.permute.xlu0 %322
        %324 = vrot.lane.b32.xlu0 %v306, 124
        %v325 = vpop.permute.xlu0 %324
        %326 = vrot.lane.b32.xlu0 %v307, 124
        %v327 = vpop.permute.xlu0 %326
        %328 = vrot.lane.b32.xlu0 %v308, 124
        %v329 = vpop.permute.xlu0 %328
        %330 = vrot.lane.b32.xlu0 %v309, 124
        %v331 = vpop.permute.xlu0 %330
        %332 = vrot.lane.b32.xlu0 %v310, 124
        %v333 = vpop.permute.xlu0 %332
        %334 = vrot.lane.b32.xlu0 %v311, 124
        %v335 = vpop.permute.xlu0 %334
        %v344 = vrot.slane %v329, 4
        %vm345 = vcmask 1047556
        %v346 = vsel %vm345, %v344, %v321
        %v347 = vrot.slane %v321, 4
        %v348 = vsel %vm345, %v329, %v347
        %v350 = vunpack.c.l.s4 1983009808
        %v351 = vunpack.c.0.s8 %v350
        %v352 = vperm.slane %v346, %v351
        %v354 = vunpack.c.l.s4 1983009808
        %v355 = vunpack.c.0.s8 %v354
        %v356 = vperm.slane %v348, %v355
        %v357 = vrot.slane %v333, 4
        %v358 = vsel %vm345, %v357, %v325
        %v359 = vrot.slane %v325, 4
        %v360 = vsel %vm345, %v333, %v359
        %v362 = vunpack.c.l.s4 1983009808
        %v363 = vunpack.c.0.s8 %v362
        %v364 = vperm.slane %v358, %v363
        %v366 = vunpack.c.l.s4 1983009808
        %v367 = vunpack.c.0.s8 %v366
        %v368 = vperm.slane %v360, %v367
        %v369 = vrot.slane %v364, 4
        %v370 = vsel %vm345, %v369, %v352
        %v371 = vrot.slane %v352, 4
        %v372 = vsel %vm345, %v364, %v371
        %v374 = vunpack.c.l.s4 1934713408
        %v375 = vunpack.c.0.s8 %v374
        %v376 = vperm.slane %v370, %v375
        %v378 = vunpack.c.l.s4 1934713408
        %v379 = vunpack.c.0.s8 %v378
        %v380 = vperm.slane %v372, %v379
        %v381 = vrot.slane %v368, 4
        %v382 = vsel %vm345, %v381, %v356
        %v383 = vrot.slane %v356, 4
        %v384 = vsel %vm345, %v368, %v383
        %v386 = vunpack.c.l.s4 1934713408
        %v387 = vunpack.c.0.s8 %v386
        %v388 = vperm.slane %v382, %v387
        %v390 = vunpack.c.l.s4 1934713408
        %v391 = vunpack.c.0.s8 %v390
        %v392 = vperm.slane %v384, %v391
        %v393 = vrot.slane %v376, 4
        %v394 = vsel %vm345, 0.0, %v393
        %v395 = vrot.slane %v380, 4
        %v396 = vsel %vm345, 0.0, %v395
        %v397 = vrot.slane %v388, 4
        %v398 = vsel %vm345, 0.0, %v397
        %v399 = vrot.slane %v392, 4
        %v400 = vsel %vm345, 0.0, %v399
        %v401 = vrot.slane %v331, 4
        %v402 = vsel %vm345, %v401, %v323
        %v403 = vrot.slane %v323, 4
        %v404 = vsel %vm345, %v331, %v403
        %v406 = vunpack.c.l.s4 1983009808
        %v407 = vunpack.c.0.s8 %v406
        %v408 = vperm.slane %v402, %v407
        %v410 = vunpack.c.l.s4 1983009808
        %v411 = vunpack.c.0.s8 %v410
        %v412 = vperm.slane %v404, %v411
        %v413 = vrot.slane %v335, 4
        %v414 = vsel %vm345, %v413, %v327
        %v415 = vrot.slane %v327, 4
        %v416 = vsel %vm345, %v335, %v415
        %v418 = vunpack.c.l.s4 1983009808
        %v419 = vunpack.c.0.s8 %v418
        %v420 = vperm.slane %v414, %v419
        %v422 = vunpack.c.l.s4 1983009808
        %v423 = vunpack.c.0.s8 %v422
        %v424 = vperm.slane %v416, %v423
        %v425 = vrot.slane %v420, 4
        %v426 = vsel %vm345, %v425, %v408
        %v427 = vrot.slane %v408, 4
        %v428 = vsel %vm345, %v420, %v427
        %v430 = vunpack.c.l.s4 1934713408
        %v431 = vunpack.c.0.s8 %v430
        %v432 = vperm.slane %v426, %v431
        %v434 = vunpack.c.l.s4 1934713408
        %v435 = vunpack.c.0.s8 %v434
        %v436 = vperm.slane %v428, %v435
        %v437 = vrot.slane %v424, 4
        %v438 = vsel %vm345, %v437, %v412
        %v439 = vrot.slane %v412, 4
        %v440 = vsel %vm345, %v424, %v439
        %v442 = vunpack.c.l.s4 1934713408
        %v443 = vunpack.c.0.s8 %v442
        %v444 = vperm.slane %v438, %v443
        %v446 = vunpack.c.l.s4 1934713408
        %v447 = vunpack.c.0.s8 %v446
        %v448 = vperm.slane %v440, %v447
        %v449 = vrot.slane %v432, 4
        %v450 = vsel %vm345, 0.0, %v449
        %v451 = vrot.slane %v436, 4
        %v452 = vsel %vm345, 0.0, %v451
        %v453 = vrot.slane %v444, 4
        %v454 = vsel %vm345, 0.0, %v453
        %v455 = vrot.slane %v448, 4
        %v456 = vsel %vm345, 0.0, %v455
        %458 = vrot.lane.b32.xlu0 %v394, 16
        %v459 = vpop.permute.xlu0 %458
        %462 = vrot.lane.b32.xlu0 %v380, 32
        %v463 = vpop.permute.xlu0 %462
        %466 = vrot.lane.b32.xlu0 %v396, 48
        %v467 = vpop.permute.xlu0 %466
        %470 = vrot.lane.b32.xlu0 %v388, 64
        %v471 = vpop.permute.xlu0 %470
        %474 = vrot.lane.b32.xlu0 %v398, 80
        %v475 = vpop.permute.xlu0 %474
        %478 = vrot.lane.b32.xlu0 %v392, 96
        %v479 = vpop.permute.xlu0 %478
        %482 = vrot.lane.b32.xlu0 %v400, 112
        %v483 = vpop.permute.xlu0 %482
        %486 = vrot.lane.b32.xlu0 %v450, 16
        %v487 = vpop.permute.xlu0 %486
        %490 = vrot.lane.b32.xlu0 %v436, 32
        %v491 = vpop.permute.xlu0 %490
        %494 = vrot.lane.b32.xlu0 %v452, 48
        %v495 = vpop.permute.xlu0 %494
        %498 = vrot.lane.b32.xlu0 %v444, 64
        %v499 = vpop.permute.xlu0 %498
        %502 = vrot.lane.b32.xlu0 %v454, 80
        %v503 = vpop.permute.xlu0 %502
        %506 = vrot.lane.b32.xlu0 %v448, 96
        %v507 = vpop.permute.xlu0 %506
        %510 = vrot.lane.b32.xlu0 %v456, 112
        %v511 = vpop.permute.xlu0 %510
        %vm513 = vcmask 130048
        %v514 = vsel %vm513, %v376, %v459
        %vm515 = vcmask 261120
        %v516 = vsel %vm515, %v514, %v463
        %vm517 = vcmask 392192
        %v518 = vsel %vm517, %v516, %v467
        %vm519 = vcmask 523264
        %v520 = vsel %vm519, %v518, %v471
        %vm521 = vcmask 654336
        %v522 = vsel %vm521, %v520, %v475
        %vm523 = vcmask 785408
        %v524 = vsel %vm523, %v522, %v479
        %vm525 = vcmask 916480
        %v526 = vsel %vm525, %v524, %v483
        %v527 = vsel %vm513, %v432, %v487
        %v528 = vsel %vm515, %v527, %v491
        %v529 = vsel %vm517, %v528, %v495
        %v530 = vsel %vm519, %v529, %v499
        %v531 = vsel %vm521, %v530, %v503
        %v532 = vsel %vm523, %v531, %v507
        %v533 = vsel %vm525, %v532, %v511
        %v534 = vpack.c.bf16 %v533, %v526
        %535 = vst [vmem:[#allocation3] sm:$0x33] %v534
        %v536 = vld [vmem:[#allocation2 + $0x3] sm:$0xff]
        %v537 = vld [vmem:[#allocation2 + $0xb] sm:$0xff]
        %v538 = vld [vmem:[#allocation2 + $0x1b] sm:$0xff]
        %v539 = vld [vmem:[#allocation2 + $0x23] sm:$0xff]
        %v540 = vld [vmem:[#allocation2 + $0x33] sm:$0xff]
        %v541 = vld [vmem:[#allocation2 + $0x3b] sm:$0xff]
        %v542 = vld [vmem:[#allocation2 + $0x4b] sm:$0xff]
        %v543 = vld [vmem:[#allocation2 + $0x53] sm:$0xff]
        %552 = vrot.lane.b32.xlu0 %v536, 125
        %v553 = vpop.permute.xlu0 %552
        %554 = vrot.lane.b32.xlu0 %v537, 125
        %v555 = vpop.permute.xlu0 %554
        %556 = vrot.lane.b32.xlu0 %v538, 125
        %v557 = vpop.permute.xlu0 %556
        %558 = vrot.lane.b32.xlu0 %v539, 125
        %v559 = vpop.permute.xlu0 %558
        %560 = vrot.lane.b32.xlu0 %v540, 125
        %v561 = vpop.permute.xlu0 %560
        %562 = vrot.lane.b32.xlu0 %v541, 125
        %v563 = vpop.permute.xlu0 %562
        %564 = vrot.lane.b32.xlu0 %v542, 125
        %v565 = vpop.permute.xlu0 %564
        %566 = vrot.lane.b32.xlu0 %v543, 125
        %v567 = vpop.permute.xlu0 %566
        %v576 = vrot.slane %v561, 4
        %v577 = vsel %vm345, %v576, %v553
        %v578 = vrot.slane %v553, 4
        %v579 = vsel %vm345, %v561, %v578
        %v581 = vunpack.c.l.s4 1983009808
        %v582 = vunpack.c.0.s8 %v581
        %v583 = vperm.slane %v577, %v582
        %v585 = vunpack.c.l.s4 1983009808
        %v586 = vunpack.c.0.s8 %v585
        %v587 = vperm.slane %v579, %v586
        %v588 = vrot.slane %v565, 4
        %v589 = vsel %vm345, %v588, %v557
        %v590 = vrot.slane %v557, 4
        %v591 = vsel %vm345, %v565, %v590
        %v593 = vunpack.c.l.s4 1983009808
        %v594 = vunpack.c.0.s8 %v593
        %v595 = vperm.slane %v589, %v594
        %v597 = vunpack.c.l.s4 1983009808
        %v598 = vunpack.c.0.s8 %v597
        %v599 = vperm.slane %v591, %v598
        %v600 = vrot.slane %v595, 4
        %v601 = vsel %vm345, %v600, %v583
        %v602 = vrot.slane %v583, 4
        %v603 = vsel %vm345, %v595, %v602
        %v605 = vunpack.c.l.s4 1934713408
        %v606 = vunpack.c.0.s8 %v605
        %v607 = vperm.slane %v601, %v606
        %v609 = vunpack.c.l.s4 1934713408
        %v610 = vunpack.c.0.s8 %v609
        %v611 = vperm.slane %v603, %v610
        %v612 = vrot.slane %v599, 4
        %v613 = vsel %vm345, %v612, %v587
        %v614 = vrot.slane %v587, 4
        %v615 = vsel %vm345, %v599, %v614
        %v617 = vunpack.c.l.s4 1934713408
        %v618 = vunpack.c.0.s8 %v617
        %v619 = vperm.slane %v613, %v618
        %v621 = vunpack.c.l.s4 1934713408
        %v622 = vunpack.c.0.s8 %v621
        %v623 = vperm.slane %v615, %v622
        %v624 = vrot.slane %v607, 4
        %v625 = vsel %vm345, 0.0, %v624
        %v626 = vrot.slane %v611, 4
        %v627 = vsel %vm345, 0.0, %v626
        %v628 = vrot.slane %v619, 4
        %v629 = vsel %vm345, 0.0, %v628
        %v630 = vrot.slane %v623, 4
        %v631 = vsel %vm345, 0.0, %v630
        %v632 = vrot.slane %v563, 4
        %v633 = vsel %vm345, %v632, %v555
        %v634 = vrot.slane %v555, 4
        %v635 = vsel %vm345, %v563, %v634
        %v637 = vunpack.c.l.s4 1983009808
        %v638 = vunpack.c.0.s8 %v637
        %v639 = vperm.slane %v633, %v638
        %v641 = vunpack.c.l.s4 1983009808
        %v642 = vunpack.c.0.s8 %v641
        %v643 = vperm.slane %v635, %v642
        %v644 = vrot.slane %v567, 4
        %v645 = vsel %vm345, %v644, %v559
        %v646 = vrot.slane %v559, 4
        %v647 = vsel %vm345, %v567, %v646
        %v649 = vunpack.c.l.s4 1983009808
        %v650 = vunpack.c.0.s8 %v649
        %v651 = vperm.slane %v645, %v650
        %v653 = vunpack.c.l.s4 1983009808
        %v654 = vunpack.c.0.s8 %v653
        %v655 = vperm.slane %v647, %v654
        %v656 = vrot.slane %v651, 4
        %v657 = vsel %vm345, %v656, %v639
        %v658 = vrot.slane %v639, 4
        %v659 = vsel %vm345, %v651, %v658
        %v661 = vunpack.c.l.s4 1934713408
        %v662 = vunpack.c.0.s8 %v661
        %v663 = vperm.slane %v657, %v662
        %v665 = vunpack.c.l.s4 1934713408
        %v666 = vunpack.c.0.s8 %v665
        %v667 = vperm.slane %v659, %v666
        %v668 = vrot.slane %v655, 4
        %v669 = vsel %vm345, %v668, %v643
        %v670 = vrot.slane %v643, 4
        %v671 = vsel %vm345, %v655, %v670
        %v673 = vunpack.c.l.s4 1934713408
        %v674 = vunpack.c.0.s8 %v673
        %v675 = vperm.slane %v669, %v674
        %v677 = vunpack.c.l.s4 1934713408
        %v678 = vunpack.c.0.s8 %v677
        %v679 = vperm.slane %v671, %v678
        %v680 = vrot.slane %v663, 4
        %v681 = vsel %vm345, 0.0, %v680
        %v682 = vrot.slane %v667, 4
        %v683 = vsel %vm345, 0.0, %v682
        %v684 = vrot.slane %v675, 4
        %v685 = vsel %vm345, 0.0, %v684
        %v686 = vrot.slane %v679, 4
        %v687 = vsel %vm345, 0.0, %v686
        %689 = vrot.lane.b32.xlu0 %v625, 16
        %v690 = vpop.permute.xlu0 %689
        %693 = vrot.lane.b32.xlu0 %v611, 32
        %v694 = vpop.permute.xlu0 %693
        %697 = vrot.lane.b32.xlu0 %v627, 48
        %v698 = vpop.permute.xlu0 %697
        %701 = vrot.lane.b32.xlu0 %v619, 64
        %v702 = vpop.permute.xlu0 %701
        %705 = vrot.lane.b32.xlu0 %v629, 80
        %v706 = vpop.permute.xlu0 %705
        %709 = vrot.lane.b32.xlu0 %v623, 96
        %v710 = vpop.permute.xlu0 %709
        %713 = vrot.lane.b32.xlu0 %v631, 112
        %v714 = vpop.permute.xlu0 %713
        %717 = vrot.lane.b32.xlu0 %v681, 16
        %v718 = vpop.permute.xlu0 %717
        %721 = vrot.lane.b32.xlu0 %v667, 32
        %v722 = vpop.permute.xlu0 %721
        %725 = vrot.lane.b32.xlu0 %v683, 48
        %v726 = vpop.permute.xlu0 %725
        %729 = vrot.lane.b32.xlu0 %v675, 64
        %v730 = vpop.permute.xlu0 %729
        %733 = vrot.lane.b32.xlu0 %v685, 80
        %v734 = vpop.permute.xlu0 %733
        %737 = vrot.lane.b32.xlu0 %v679, 96
        %v738 = vpop.permute.xlu0 %737
        %741 = vrot.lane.b32.xlu0 %v687, 112
        %v742 = vpop.permute.xlu0 %741
        %v744 = vsel %vm513, %v607, %v690
        %v745 = vsel %vm515, %v744, %v694
        %v746 = vsel %vm517, %v745, %v698
        %v747 = vsel %vm519, %v746, %v702
        %v748 = vsel %vm521, %v747, %v706
        %v749 = vsel %vm523, %v748, %v710
        %v750 = vsel %vm525, %v749, %v714
        %v751 = vsel %vm513, %v663, %v718
        %v752 = vsel %vm515, %v751, %v722
        %v753 = vsel %vm517, %v752, %v726
        %v754 = vsel %vm519, %v753, %v730
        %v755 = vsel %vm521, %v754, %v734
        %v756 = vsel %vm523, %v755, %v738
        %v757 = vsel %vm525, %v756, %v742
        %v758 = vpack.c.bf16 %v757, %v750
        %v760 = vrot.slane %v758, 6
        %762 = vst [vmem:[#allocation3] sm:$0xcc] %v760
        %v763 = vld [vmem:[#allocation2 + $0x3] sm:$0xff]
        %v764 = vld [vmem:[#allocation2 + $0xb] sm:$0xff]
        %v765 = vld [vmem:[#allocation2 + $0x1b] sm:$0xff]
        %v766 = vld [vmem:[#allocation2 + $0x23] sm:$0xff]
        %v767 = vld [vmem:[#allocation2 + $0x33] sm:$0xff]
        %v768 = vld [vmem:[#allocation2 + $0x3b] sm:$0xff]
        %v769 = vld [vmem:[#allocation2 + $0x4b] sm:$0xff]
        %v770 = vld [vmem:[#allocation2 + $0x53] sm:$0xff]
        %779 = vrot.lane.b32.xlu0 %v763, 124
        %v780 = vpop.permute.xlu0 %779
        %781 = vrot.lane.b32.xlu0 %v764, 124
        %v782 = vpop.permute.xlu0 %781
        %783 = vrot.lane.b32.xlu0 %v765, 124
        %v784 = vpop.permute.xlu0 %783
        %785 = vrot.lane.b32.xlu0 %v766, 124
        %v786 = vpop.permute.xlu0 %785
        %787 = vrot.lane.b32.xlu0 %v767, 124
        %v788 = vpop.permute.xlu0 %787
        %789 = vrot.lane.b32.xlu0 %v768, 124
        %v790 = vpop.permute.xlu0 %789
        %791 = vrot.lane.b32.xlu0 %v769, 124
        %v792 = vpop.permute.xlu0 %791
        %793 = vrot.lane.b32.xlu0 %v770, 124
        %v794 = vpop.permute.xlu0 %793
        %v803 = vrot.slane %v788, 4
        %v804 = vsel %vm345, %v803, %v780
        %v805 = vrot.slane %v780, 4
        %v806 = vsel %vm345, %v788, %v805
        %v808 = vunpack.c.l.s4 1983009808
        %v809 = vunpack.c.0.s8 %v808
        %v810 = vperm.slane %v804, %v809
        %v812 = vunpack.c.l.s4 1983009808
        %v813 = vunpack.c.0.s8 %v812
        %v814 = vperm.slane %v806, %v813
        %v815 = vrot.slane %v792, 4
        %v816 = vsel %vm345, %v815, %v784
        %v817 = vrot.slane %v784, 4
        %v818 = vsel %vm345, %v792, %v817
        %v820 = vunpack.c.l.s4 1983009808
        %v821 = vunpack.c.0.s8 %v820
        %v822 = vperm.slane %v816, %v821
        %v824 = vunpack.c.l.s4 1983009808
        %v825 = vunpack.c.0.s8 %v824
        %v826 = vperm.slane %v818, %v825
        %v827 = vrot.slane %v822, 4
        %v828 = vsel %vm345, %v827, %v810
        %v829 = vrot.slane %v810, 4
        %v830 = vsel %vm345, %v822, %v829
        %v832 = vunpack.c.l.s4 1934713408
        %v833 = vunpack.c.0.s8 %v832
        %v834 = vperm.slane %v828, %v833
        %v836 = vunpack.c.l.s4 1934713408
        %v837 = vunpack.c.0.s8 %v836
        %v838 = vperm.slane %v830, %v837
        %v839 = vrot.slane %v826, 4
        %v840 = vsel %vm345, %v839, %v814
        %v841 = vrot.slane %v814, 4
        %v842 = vsel %vm345, %v826, %v841
        %v844 = vunpack.c.l.s4 1934713408
        %v845 = vunpack.c.0.s8 %v844
        %v846 = vperm.slane %v840, %v845
        %v848 = vunpack.c.l.s4 1934713408
        %v849 = vunpack.c.0.s8 %v848
        %v850 = vperm.slane %v842, %v849
        %v851 = vrot.slane %v834, 4
        %v852 = vsel %vm345, 0.0, %v851
        %v853 = vrot.slane %v838, 4
        %v854 = vsel %vm345, 0.0, %v853
        %v855 = vrot.slane %v846, 4
        %v856 = vsel %vm345, 0.0, %v855
        %v857 = vrot.slane %v850, 4
        %v858 = vsel %vm345, 0.0, %v857
        %v859 = vrot.slane %v790, 4
        %v860 = vsel %vm345, %v859, %v782
        %v861 = vrot.slane %v782, 4
        %v862 = vsel %vm345, %v790, %v861
        %v864 = vunpack.c.l.s4 1983009808
        %v865 = vunpack.c.0.s8 %v864
        %v866 = vperm.slane %v860, %v865
        %v868 = vunpack.c.l.s4 1983009808
        %v869 = vunpack.c.0.s8 %v868
        %v870 = vperm.slane %v862, %v869
        %v871 = vrot.slane %v794, 4
        %v872 = vsel %vm345, %v871, %v786
        %v873 = vrot.slane %v786, 4
        %v874 = vsel %vm345, %v794, %v873
        %v876 = vunpack.c.l.s4 1983009808
        %v877 = vunpack.c.0.s8 %v876
        %v878 = vperm.slane %v872, %v877
        %v880 = vunpack.c.l.s4 1983009808
        %v881 = vunpack.c.0.s8 %v880
        %v882 = vperm.slane %v874, %v881
        %v883 = vrot.slane %v878, 4
        %v884 = vsel %vm345, %v883, %v866
        %v885 = vrot.slane %v866, 4
        %v886 = vsel %vm345, %v878, %v885
        %v888 = vunpack.c.l.s4 1934713408
        %v889 = vunpack.c.0.s8 %v888
        %v890 = vperm.slane %v884, %v889
        %v892 = vunpack.c.l.s4 1934713408
        %v893 = vunpack.c.0.s8 %v892
        %v894 = vperm.slane %v886, %v893
        %v895 = vrot.slane %v882, 4
        %v896 = vsel %vm345, %v895, %v870
        %v897 = vrot.slane %v870, 4
        %v898 = vsel %vm345, %v882, %v897
        %v900 = vunpack.c.l.s4 1934713408
        %v901 = vunpack.c.0.s8 %v900
        %v902 = vperm.slane %v896, %v901
        %v904 = vunpack.c.l.s4 1934713408
        %v905 = vunpack.c.0.s8 %v904
        %v906 = vperm.slane %v898, %v905
        %v907 = vrot.slane %v890, 4
        %v908 = vsel %vm345, 0.0, %v907
        %v909 = vrot.slane %v894, 4
        %v910 = vsel %vm345, 0.0, %v909
        %v911 = vrot.slane %v902, 4
        %v912 = vsel %vm345, 0.0, %v911
        %v913 = vrot.slane %v906, 4
        %v914 = vsel %vm345, 0.0, %v913
        %916 = vrot.lane.b32.xlu0 %v852, 16
        %v917 = vpop.permute.xlu0 %916
        %920 = vrot.lane.b32.xlu0 %v838, 32
        %v921 = vpop.permute.xlu0 %920
        %924 = vrot.lane.b32.xlu0 %v854, 48
        %v925 = vpop.permute.xlu0 %924
        %928 = vrot.lane.b32.xlu0 %v846, 64
        %v929 = vpop.permute.xlu0 %928
        %932 = vrot.lane.b32.xlu0 %v856, 80
        %v933 = vpop.permute.xlu0 %932
        %936 = vrot.lane.b32.xlu0 %v850, 96
        %v937 = vpop.permute.xlu0 %936
        %940 = vrot.lane.b32.xlu0 %v858, 112
        %v941 = vpop.permute.xlu0 %940
        %944 = vrot.lane.b32.xlu0 %v908, 16
        %v945 = vpop.permute.xlu0 %944
        %948 = vrot.lane.b32.xlu0 %v894, 32
        %v949 = vpop.permute.xlu0 %948
        %952 = vrot.lane.b32.xlu0 %v910, 48
        %v953 = vpop.permute.xlu0 %952
        %956 = vrot.lane.b32.xlu0 %v902, 64
        %v957 = vpop.permute.xlu0 %956
        %960 = vrot.lane.b32.xlu0 %v912, 80
        %v961 = vpop.permute.xlu0 %960
        %964 = vrot.lane.b32.xlu0 %v906, 96
        %v965 = vpop.permute.xlu0 %964
        %968 = vrot.lane.b32.xlu0 %v914, 112
        %v969 = vpop.permute.xlu0 %968
        %v971 = vsel %vm513, %v834, %v917
        %v972 = vsel %vm515, %v971, %v921
        %v973 = vsel %vm517, %v972, %v925
        %v974 = vsel %vm519, %v973, %v929
        %v975 = vsel %vm521, %v974, %v933
        %v976 = vsel %vm523, %v975, %v937
        %v977 = vsel %vm525, %v976, %v941
        %v978 = vsel %vm513, %v890, %v945
        %v979 = vsel %vm515, %v978, %v949
        %v980 = vsel %vm517, %v979, %v953
        %v981 = vsel %vm519, %v980, %v957
        %v982 = vsel %vm521, %v981, %v961
        %v983 = vsel %vm523, %v982, %v965
        %v984 = vsel %vm525, %v983, %v969
        %v985 = vpack.c.bf16 %v984, %v977
        %986 = vst [vmem:[#allocation3 + $0x8] sm:$0x33] %v985
        %v987 = vld [vmem:[#allocation2 + $0x3] sm:$0xff]
        %v988 = vld [vmem:[#allocation2 + $0xb] sm:$0xff]
        %v989 = vld [vmem:[#allocation2 + $0x1b] sm:$0xff]
        %v990 = vld [vmem:[#allocation2 + $0x23] sm:$0xff]
        %v991 = vld [vmem:[#allocation2 + $0x33] sm:$0xff]
        %v992 = vld [vmem:[#allocation2 + $0x3b] sm:$0xff]
        %v993 = vld [vmem:[#allocation2 + $0x4b] sm:$0xff]
        %v994 = vld [vmem:[#allocation2 + $0x53] sm:$0xff]
        %1003 = vrot.lane.b32.xlu0 %v987, 123
        %v1004 = vpop.permute.xlu0 %1003
        %1005 = vrot.lane.b32.xlu0 %v988, 123
        %v1006 = vpop.permute.xlu0 %1005
        %1007 = vrot.lane.b32.xlu0 %v989, 123
        %v1008 = vpop.permute.xlu0 %1007
        %1009 = vrot.lane.b32.xlu0 %v990, 123
        %v1010 = vpop.permute.xlu0 %1009
        %1011 = vrot.lane.b32.xlu0 %v991, 123
        %v1012 = vpop.permute.xlu0 %1011
        %1013 = vrot.lane.b32.xlu0 %v992, 123
        %v1014 = vpop.permute.xlu0 %1013
        %1015 = vrot.lane.b32.xlu0 %v993, 123
        %v1016 = vpop.permute.xlu0 %1015
        %1017 = vrot.lane.b32.xlu0 %v994, 123
        %v1018 = vpop.permute.xlu0 %1017
        %v1027 = vrot.slane %v1012, 4
        %v1028 = vsel %vm345, %v1027, %v1004
        %v1029 = vrot.slane %v1004, 4
        %v1030 = vsel %vm345, %v1012, %v1029
        %v1032 = vunpack.c.l.s4 1983009808
        %v1033 = vunpack.c.0.s8 %v1032
        %v1034 = vperm.slane %v1028, %v1033
        %v1036 = vunpack.c.l.s4 1983009808
        %v1037 = vunpack.c.0.s8 %v1036
        %v1038 = vperm.slane %v1030, %v1037
        %v1039 = vrot.slane %v1016, 4
        %v1040 = vsel %vm345, %v1039, %v1008
        %v1041 = vrot.slane %v1008, 4
        %v1042 = vsel %vm345, %v1016, %v1041
        %v1044 = vunpack.c.l.s4 1983009808
        %v1045 = vunpack.c.0.s8 %v1044
        %v1046 = vperm.slane %v1040, %v1045
        %v1048 = vunpack.c.l.s4 1983009808
        %v1049 = vunpack.c.0.s8 %v1048
        %v1050 = vperm.slane %v1042, %v1049
        %v1051 = vrot.slane %v1046, 4
        %v1052 = vsel %vm345, %v1051, %v1034
        %v1053 = vrot.slane %v1034, 4
        %v1054 = vsel %vm345, %v1046, %v1053
        %v1056 = vunpack.c.l.s4 1934713408
        %v1057 = vunpack.c.0.s8 %v1056
        %v1058 = vperm.slane %v1052, %v1057
        %v1060 = vunpack.c.l.s4 1934713408
        %v1061 = vunpack.c.0.s8 %v1060
        %v1062 = vperm.slane %v1054, %v1061
        %v1063 = vrot.slane %v1050, 4
        %v1064 = vsel %vm345, %v1063, %v1038
        %v1065 = vrot.slane %v1038, 4
        %v1066 = vsel %vm345, %v1050, %v1065
        %v1068 = vunpack.c.l.s4 1934713408
        %v1069 = vunpack.c.0.s8 %v1068
        %v1070 = vperm.slane %v1064, %v1069
        %v1072 = vunpack.c.l.s4 1934713408
        %v1073 = vunpack.c.0.s8 %v1072
        %v1074 = vperm.slane %v1066, %v1073
        %v1075 = vrot.slane %v1058, 4
        %v1076 = vsel %vm345, 0.0, %v1075
        %v1077 = vrot.slane %v1062, 4
        %v1078 = vsel %vm345, 0.0, %v1077
        %v1079 = vrot.slane %v1070, 4
        %v1080 = vsel %vm345, 0.0, %v1079
        %v1081 = vrot.slane %v1074, 4
        %v1082 = vsel %vm345, 0.0, %v1081
        %v1083 = vrot.slane %v1014, 4
        %v1084 = vsel %vm345, %v1083, %v1006
        %v1085 = vrot.slane %v1006, 4
        %v1086 = vsel %vm345, %v1014, %v1085
        %v1088 = vunpack.c.l.s4 1983009808
        %v1089 = vunpack.c.0.s8 %v1088
        %v1090 = vperm.slane %v1084, %v1089
        %v1092 = vunpack.c.l.s4 1983009808
        %v1093 = vunpack.c.0.s8 %v1092
        %v1094 = vperm.slane %v1086, %v1093
        %v1095 = vrot.slane %v1018, 4
        %v1096 = vsel %vm345, %v1095, %v1010
        %v1097 = vrot.slane %v1010, 4
        %v1098 = vsel %vm345, %v1018, %v1097
        %v1100 = vunpack.c.l.s4 1983009808
        %v1101 = vunpack.c.0.s8 %v1100
        %v1102 = vperm.slane %v1096, %v1101
        %v1104 = vunpack.c.l.s4 1983009808
        %v1105 = vunpack.c.0.s8 %v1104
        %v1106 = vperm.slane %v1098, %v1105
        %v1107 = vrot.slane %v1102, 4
        %v1108 = vsel %vm345, %v1107, %v1090
        %v1109 = vrot.slane %v1090, 4
        %v1110 = vsel %vm345, %v1102, %v1109
        %v1112 = vunpack.c.l.s4 1934713408
        %v1113 = vunpack.c.0.s8 %v1112
        %v1114 = vperm.slane %v1108, %v1113
        %v1116 = vunpack.c.l.s4 1934713408
        %v1117 = vunpack.c.0.s8 %v1116
        %v1118 = vperm.slane %v1110, %v1117
        %v1119 = vrot.slane %v1106, 4
        %v1120 = vsel %vm345, %v1119, %v1094
        %v1121 = vrot.slane %v1094, 4
        %v1122 = vsel %vm345, %v1106, %v1121
        %v1124 = vunpack.c.l.s4 1934713408
        %v1125 = vunpack.c.0.s8 %v1124
        %v1126 = vperm.slane %v1120, %v1125
        %v1128 = vunpack.c.l.s4 1934713408
        %v1129 = vunpack.c.0.s8 %v1128
        %v1130 = vperm.slane %v1122, %v1129
        %v1131 = vrot.slane %v1114, 4
        %v1132 = vsel %vm345, 0.0, %v1131
        %v1133 = vrot.slane %v1118, 4
        %v1134 = vsel %vm345, 0.0, %v1133
        %v1135 = vrot.slane %v1126, 4
        %v1136 = vsel %vm345, 0.0, %v1135
        %v1137 = vrot.slane %v1130, 4
        %v1138 = vsel %vm345, 0.0, %v1137
        %1140 = vrot.lane.b32.xlu0 %v1076, 16
        %v1141 = vpop.permute.xlu0 %1140
        %1144 = vrot.lane.b32.xlu0 %v1062, 32
        %v1145 = vpop.permute.xlu0 %1144
        %1148 = vrot.lane.b32.xlu0 %v1078, 48
        %v1149 = vpop.permute.xlu0 %1148
        %1152 = vrot.lane.b32.xlu0 %v1070, 64
        %v1153 = vpop.permute.xlu0 %1152
        %1156 = vrot.lane.b32.xlu0 %v1080, 80
        %v1157 = vpop.permute.xlu0 %1156
        %1160 = vrot.lane.b32.xlu0 %v1074, 96
        %v1161 = vpop.permute.xlu0 %1160
        %1164 = vrot.lane.b32.xlu0 %v1082, 112
        %v1165 = vpop.permute.xlu0 %1164
        %1168 = vrot.lane.b32.xlu0 %v1132, 16
        %v1169 = vpop.permute.xlu0 %1168
        %1172 = vrot.lane.b32.xlu0 %v1118, 32
        %v1173 = vpop.permute.xlu0 %1172
        %1176 = vrot.lane.b32.xlu0 %v1134, 48
        %v1177 = vpop.permute.xlu0 %1176
        %1180 = vrot.lane.b32.xlu0 %v1126, 64
        %v1181 = vpop.permute.xlu0 %1180
        %1184 = vrot.lane.b32.xlu0 %v1136, 80
        %v1185 = vpop.permute.xlu0 %1184
        %1188 = vrot.lane.b32.xlu0 %v1130, 96
        %v1189 = vpop.permute.xlu0 %1188
        %1192 = vrot.lane.b32.xlu0 %v1138, 112
        %v1193 = vpop.permute.xlu0 %1192
        %v1195 = vsel %vm513, %v1058, %v1141
        %v1196 = vsel %vm515, %v1195, %v1145
        %v1197 = vsel %vm517, %v1196, %v1149
        %v1198 = vsel %vm519, %v1197, %v1153
        %v1199 = vsel %vm521, %v1198, %v1157
        %v1200 = vsel %vm523, %v1199, %v1161
        %v1201 = vsel %vm525, %v1200, %v1165
        %v1202 = vsel %vm513, %v1114, %v1169
        %v1203 = vsel %vm515, %v1202, %v1173
        %v1204 = vsel %vm517, %v1203, %v1177
        %v1205 = vsel %vm519, %v1204, %v1181
        %v1206 = vsel %vm521, %v1205, %v1185
        %v1207 = vsel %vm523, %v1206, %v1189
        %v1208 = vsel %vm525, %v1207, %v1193
        %v1209 = vpack.c.bf16 %v1208, %v1201
        %v1211 = vrot.slane %v1209, 6
        %1213 = vst [vmem:[#allocation3 + $0x8] sm:$0xcc] %v1211
        %v1214 = vld [vmem:[#allocation2 + $0x4] sm:$0xff]
        %v1215 = vld [vmem:[#allocation2 + $0xc] sm:$0xff]
        %v1216 = vld [vmem:[#allocation2 + $0x1c] sm:$0xff]
        %v1217 = vld [vmem:[#allocation2 + $0x24] sm:$0xff]
        %v1218 = vld [vmem:[#allocation2 + $0x34] sm:$0xff]
        %v1219 = vld [vmem:[#allocation2 + $0x3c] sm:$0xff]
        %v1220 = vld [vmem:[#allocation2 + $0x4c] sm:$0xff]
        %v1221 = vld [vmem:[#allocation2 + $0x54] sm:$0xff]
        %1230 = vrot.lane.b32.xlu0 %v1214, 125
        %v1231 = vpop.permute.xlu0 %1230
        %1232 = vrot.lane.b32.xlu0 %v1215, 125
        %v1233 = vpop.permute.xlu0 %1232
        %1234 = vrot.lane.b32.xlu0 %v1216, 125
        %v1235 = vpop.permute.xlu0 %1234
        %1236 = vrot.lane.b32.xlu0 %v1217, 125
        %v1237 = vpop.permute.xlu0 %1236
        %1238 = vrot.lane.b32.xlu0 %v1218, 125
        %v1239 = vpop.permute.xlu0 %1238
        %1240 = vrot.lane.b32.xlu0 %v1219, 125
        %v1241 = vpop.permute.xlu0 %1240
        %1242 = vrot.lane.b32.xlu0 %v1220, 125
        %v1243 = vpop.permute.xlu0 %1242
        %1244 = vrot.lane.b32.xlu0 %v1221, 125
        %v1245 = vpop.permute.xlu0 %1244
        %v1254 = vrot.slane %v1239, 4
        %v1255 = vsel %vm345, %v1254, %v1231
        %v1256 = vrot.slane %v1231, 4
        %v1257 = vsel %vm345, %v1239, %v1256
        %v1259 = vunpack.c.l.s4 1983009808
        %v1260 = vunpack.c.0.s8 %v1259
        %v1261 = vperm.slane %v1255, %v1260
        %v1263 = vunpack.c.l.s4 1983009808
        %v1264 = vunpack.c.0.s8 %v1263
        %v1265 = vperm.slane %v1257, %v1264
        %v1266 = vrot.slane %v1243, 4
        %v1267 = vsel %vm345, %v1266, %v1235
        %v1268 = vrot.slane %v1235, 4
        %v1269 = vsel %vm345, %v1243, %v1268
        %v1271 = vunpack.c.l.s4 1983009808
        %v1272 = vunpack.c.0.s8 %v1271
        %v1273 = vperm.slane %v1267, %v1272
        %v1275 = vunpack.c.l.s4 1983009808
        %v1276 = vunpack.c.0.s8 %v1275
        %v1277 = vperm.slane %v1269, %v1276
        %v1278 = vrot.slane %v1273, 4
        %v1279 = vsel %vm345, %v1278, %v1261
        %v1280 = vrot.slane %v1261, 4
        %v1281 = vsel %vm345, %v1273, %v1280
        %v1283 = vunpack.c.l.s4 1934713408
        %v1284 = vunpack.c.0.s8 %v1283
        %v1285 = vperm.slane %v1279, %v1284
        %v1287 = vunpack.c.l.s4 1934713408
        %v1288 = vunpack.c.0.s8 %v1287
        %v1289 = vperm.slane %v1281, %v1288
        %v1290 = vrot.slane %v1277, 4
        %v1291 = vsel %vm345, %v1290, %v1265
        %v1292 = vrot.slane %v1265, 4
        %v1293 = vsel %vm345, %v1277, %v1292
        %v1295 = vunpack.c.l.s4 1934713408
        %v1296 = vunpack.c.0.s8 %v1295
        %v1297 = vperm.slane %v1291, %v1296
        %v1299 = vunpack.c.l.s4 1934713408
        %v1300 = vunpack.c.0.s8 %v1299
        %v1301 = vperm.slane %v1293, %v1300
        %v1302 = vrot.slane %v1285, 4
        %v1303 = vsel %vm345, 0.0, %v1302
        %v1304 = vrot.slane %v1289, 4
        %v1305 = vsel %vm345, 0.0, %v1304
        %v1306 = vrot.slane %v1297, 4
        %v1307 = vsel %vm345, 0.0, %v1306
        %v1308 = vrot.slane %v1301, 4
        %v1309 = vsel %vm345, 0.0, %v1308
        %v1310 = vrot.slane %v1241, 4
        %v1311 = vsel %vm345, %v1310, %v1233
        %v1312 = vrot.slane %v1233, 4
        %v1313 = vsel %vm345, %v1241, %v1312
        %v1315 = vunpack.c.l.s4 1983009808
        %v1316 = vunpack.c.0.s8 %v1315
        %v1317 = vperm.slane %v1311, %v1316
        %v1319 = vunpack.c.l.s4 1983009808
        %v1320 = vunpack.c.0.s8 %v1319
        %v1321 = vperm.slane %v1313, %v1320
        %v1322 = vrot.slane %v1245, 4
        %v1323 = vsel %vm345, %v1322, %v1237
        %v1324 = vrot.slane %v1237, 4
        %v1325 = vsel %vm345, %v1245, %v1324
        %v1327 = vunpack.c.l.s4 1983009808
        %v1328 = vunpack.c.0.s8 %v1327
        %v1329 = vperm.slane %v1323, %v1328
        %v1331 = vunpack.c.l.s4 1983009808
        %v1332 = vunpack.c.0.s8 %v1331
        %v1333 = vperm.slane %v1325, %v1332
        %v1334 = vrot.slane %v1329, 4
        %v1335 = vsel %vm345, %v1334, %v1317
        %v1336 = vrot.slane %v1317, 4
        %v1337 = vsel %vm345, %v1329, %v1336
        %v1339 = vunpack.c.l.s4 1934713408
        %v1340 = vunpack.c.0.s8 %v1339
        %v1341 = vperm.slane %v1335, %v1340
        %v1343 = vunpack.c.l.s4 1934713408
        %v1344 = vunpack.c.0.s8 %v1343
        %v1345 = vperm.slane %v1337, %v1344
        %v1346 = vrot.slane %v1333, 4
        %v1347 = vsel %vm345, %v1346, %v1321
        %v1348 = vrot.slane %v1321, 4
        %v1349 = vsel %vm345, %v1333, %v1348
        %v1351 = vunpack.c.l.s4 1934713408
        %v1352 = vunpack.c.0.s8 %v1351
        %v1353 = vperm.slane %v1347, %v1352
        %v1355 = vunpack.c.l.s4 1934713408
        %v1356 = vunpack.c.0.s8 %v1355
        %v1357 = vperm.slane %v1349, %v1356
        %v1358 = vrot.slane %v1341, 4
        %v1359 = vsel %vm345, 0.0, %v1358
        %v1360 = vrot.slane %v1345, 4
        %v1361 = vsel %vm345, 0.0, %v1360
        %v1362 = vrot.slane %v1353, 4
        %v1363 = vsel %vm345, 0.0, %v1362
        %v1364 = vrot.slane %v1357, 4
        %v1365 = vsel %vm345, 0.0, %v1364
        %1367 = vrot.lane.b32.xlu0 %v1303, 16
        %v1368 = vpop.permute.xlu0 %1367
        %1371 = vrot.lane.b32.xlu0 %v1289, 32
        %v1372 = vpop.permute.xlu0 %1371
        %1375 = vrot.lane.b32.xlu0 %v1305, 48
        %v1376 = vpop.permute.xlu0 %1375
        %1379 = vrot.lane.b32.xlu0 %v1297, 64
        %v1380 = vpop.permute.xlu0 %1379
        %1383 = vrot.lane.b32.xlu0 %v1307, 80
        %v1384 = vpop.permute.xlu0 %1383
        %1387 = vrot.lane.b32.xlu0 %v1301, 96
        %v1388 = vpop.permute.xlu0 %1387
        %1391 = vrot.lane.b32.xlu0 %v1309, 112
        %v1392 = vpop.permute.xlu0 %1391
        %1395 = vrot.lane.b32.xlu0 %v1359, 16
        %v1396 = vpop.permute.xlu0 %1395
        %1399 = vrot.lane.b32.xlu0 %v1345, 32
        %v1400 = vpop.permute.xlu0 %1399
        %1403 = vrot.lane.b32.xlu0 %v1361, 48
        %v1404 = vpop.permute.xlu0 %1403
        %1407 = vrot.lane.b32.xlu0 %v1353, 64
        %v1408 = vpop.permute.xlu0 %1407
        %1411 = vrot.lane.b32.xlu0 %v1363, 80
        %v1412 = vpop.permute.xlu0 %1411
        %1415 = vrot.lane.b32.xlu0 %v1357, 96
        %v1416 = vpop.permute.xlu0 %1415
        %1419 = vrot.lane.b32.xlu0 %v1365, 112
        %v1420 = vpop.permute.xlu0 %1419
        %v1422 = vsel %vm513, %v1285, %v1368
        %v1423 = vsel %vm515, %v1422, %v1372
        %v1424 = vsel %vm517, %v1423, %v1376
        %v1425 = vsel %vm519, %v1424, %v1380
        %v1426 = vsel %vm521, %v1425, %v1384
        %v1427 = vsel %vm523, %v1426, %v1388
        %v1428 = vsel %vm525, %v1427, %v1392
        %v1429 = vsel %vm513, %v1341, %v1396
        %v1430 = vsel %vm515, %v1429, %v1400
        %v1431 = vsel %vm517, %v1430, %v1404
        %v1432 = vsel %vm519, %v1431, %v1408
        %v1433 = vsel %vm521, %v1432, %v1412
        %v1434 = vsel %vm523, %v1433, %v1416
        %v1435 = vsel %vm525, %v1434, %v1420
        %v1436 = vpack.c.bf16 %v1435, %v1428
        %1437 = vst [vmem:[#allocation3 + $0x10] sm:$0x33] %v1436
        %v1438 = vld [vmem:[#allocation2 + $0x4] sm:$0xff]
        %v1439 = vld [vmem:[#allocation2 + $0xc] sm:$0xff]
        %v1440 = vld [vmem:[#allocation2 + $0x1c] sm:$0xff]
        %v1441 = vld [vmem:[#allocation2 + $0x24] sm:$0xff]
        %v1442 = vld [vmem:[#allocation2 + $0x34] sm:$0xff]
        %v1443 = vld [vmem:[#allocation2 + $0x3c] sm:$0xff]
        %v1444 = vld [vmem:[#allocation2 + $0x4c] sm:$0xff]
        %v1445 = vld [vmem:[#allocation2 + $0x54] sm:$0xff]
        %1454 = vrot.lane.b32.xlu0 %v1438, 124
        %v1455 = vpop.permute.xlu0 %1454
        %1456 = vrot.lane.b32.xlu0 %v1439, 124
        %v1457 = vpop.permute.xlu0 %1456
        %1458 = vrot.lane.b32.xlu0 %v1440, 124
        %v1459 = vpop.permute.xlu0 %1458
        %1460 = vrot.lane.b32.xlu0 %v1441, 124
        %v1461 = vpop.permute.xlu0 %1460
        %1462 = vrot.lane.b32.xlu0 %v1442, 124
        %v1463 = vpop.permute.xlu0 %1462
        %1464 = vrot.lane.b32.xlu0 %v1443, 124
        %v1465 = vpop.permute.xlu0 %1464
        %1466 = vrot.lane.b32.xlu0 %v1444, 124
        %v1467 = vpop.permute.xlu0 %1466
        %1468 = vrot.lane.b32.xlu0 %v1445, 124
        %v1469 = vpop.permute.xlu0 %1468
        %v1478 = vrot.slane %v1463, 4
        %v1479 = vsel %vm345, %v1478, %v1455
        %v1480 = vrot.slane %v1455, 4
        %v1481 = vsel %vm345, %v1463, %v1480
        %v1483 = vunpack.c.l.s4 1983009808
        %v1484 = vunpack.c.0.s8 %v1483
        %v1485 = vperm.slane %v1479, %v1484
        %v1487 = vunpack.c.l.s4 1983009808
        %v1488 = vunpack.c.0.s8 %v1487
        %v1489 = vperm.slane %v1481, %v1488
        %v1490 = vrot.slane %v1467, 4
        %v1491 = vsel %vm345, %v1490, %v1459
        %v1492 = vrot.slane %v1459, 4
        %v1493 = vsel %vm345, %v1467, %v1492
        %v1495 = vunpack.c.l.s4 1983009808
        %v1496 = vunpack.c.0.s8 %v1495
        %v1497 = vperm.slane %v1491, %v1496
        %v1499 = vunpack.c.l.s4 1983009808
        %v1500 = vunpack.c.0.s8 %v1499
        %v1501 = vperm.slane %v1493, %v1500
        %v1502 = vrot.slane %v1497, 4
        %v1503 = vsel %vm345, %v1502, %v1485
        %v1504 = vrot.slane %v1485, 4
        %v1505 = vsel %vm345, %v1497, %v1504
        %v1507 = vunpack.c.l.s4 1934713408
        %v1508 = vunpack.c.0.s8 %v1507
        %v1509 = vperm.slane %v1503, %v1508
        %v1511 = vunpack.c.l.s4 1934713408
        %v1512 = vunpack.c.0.s8 %v1511
        %v1513 = vperm.slane %v1505, %v1512
        %v1514 = vrot.slane %v1501, 4
        %v1515 = vsel %vm345, %v1514, %v1489
        %v1516 = vrot.slane %v1489, 4
        %v1517 = vsel %vm345, %v1501, %v1516
        %v1519 = vunpack.c.l.s4 1934713408
        %v1520 = vunpack.c.0.s8 %v1519
        %v1521 = vperm.slane %v1515, %v1520
        %v1523 = vunpack.c.l.s4 1934713408
        %v1524 = vunpack.c.0.s8 %v1523
        %v1525 = vperm.slane %v1517, %v1524
        %v1526 = vrot.slane %v1509, 4
        %v1527 = vsel %vm345, 0.0, %v1526
        %v1528 = vrot.slane %v1513, 4
        %v1529 = vsel %vm345, 0.0, %v1528
        %v1530 = vrot.slane %v1521, 4
        %v1531 = vsel %vm345, 0.0, %v1530
        %v1532 = vrot.slane %v1525, 4
        %v1533 = vsel %vm345, 0.0, %v1532
        %v1534 = vrot.slane %v1465, 4
        %v1535 = vsel %vm345, %v1534, %v1457
        %v1536 = vrot.slane %v1457, 4
        %v1537 = vsel %vm345, %v1465, %v1536
        %v1539 = vunpack.c.l.s4 1983009808
        %v1540 = vunpack.c.0.s8 %v1539
        %v1541 = vperm.slane %v1535, %v1540
        %v1543 = vunpack.c.l.s4 1983009808
        %v1544 = vunpack.c.0.s8 %v1543
        %v1545 = vperm.slane %v1537, %v1544
        %v1546 = vrot.slane %v1469, 4
        %v1547 = vsel %vm345, %v1546, %v1461
        %v1548 = vrot.slane %v1461, 4
        %v1549 = vsel %vm345, %v1469, %v1548
        %v1551 = vunpack.c.l.s4 1983009808
        %v1552 = vunpack.c.0.s8 %v1551
        %v1553 = vperm.slane %v1547, %v1552
        %v1555 = vunpack.c.l.s4 1983009808
        %v1556 = vunpack.c.0.s8 %v1555
        %v1557 = vperm.slane %v1549, %v1556
        %v1558 = vrot.slane %v1553, 4
        %v1559 = vsel %vm345, %v1558, %v1541
        %v1560 = vrot.slane %v1541, 4
        %v1561 = vsel %vm345, %v1553, %v1560
        %v1563 = vunpack.c.l.s4 1934713408
        %v1564 = vunpack.c.0.s8 %v1563
        %v1565 = vperm.slane %v1559, %v1564
        %v1567 = vunpack.c.l.s4 1934713408
        %v1568 = vunpack.c.0.s8 %v1567
        %v1569 = vperm.slane %v1561, %v1568
        %v1570 = vrot.slane %v1557, 4
        %v1571 = vsel %vm345, %v1570, %v1545
        %v1572 = vrot.slane %v1545, 4
        %v1573 = vsel %vm345, %v1557, %v1572
        %v1575 = vunpack.c.l.s4 1934713408
        %v1576 = vunpack.c.0.s8 %v1575
        %v1577 = vperm.slane %v1571, %v1576
        %v1579 = vunpack.c.l.s4 1934713408
        %v1580 = vunpack.c.0.s8 %v1579
        %v1581 = vperm.slane %v1573, %v1580
        %v1582 = vrot.slane %v1565, 4
        %v1583 = vsel %vm345, 0.0, %v1582
        %v1584 = vrot.slane %v1569, 4
        %v1585 = vsel %vm345, 0.0, %v1584
        %v1586 = vrot.slane %v1577, 4
        %v1587 = vsel %vm345, 0.0, %v1586
        %v1588 = vrot.slane %v1581, 4
        %v1589 = vsel %vm345, 0.0, %v1588
        %1591 = vrot.lane.b32.xlu0 %v1527, 16
        %v1592 = vpop.permute.xlu0 %1591
        %1595 = vrot.lane.b32.xlu0 %v1513, 32
        %v1596 = vpop.permute.xlu0 %1595
        %1599 = vrot.lane.b32.xlu0 %v1529, 48
        %v1600 = vpop.permute.xlu0 %1599
        %1603 = vrot.lane.b32.xlu0 %v1521, 64
        %v1604 = vpop.permute.xlu0 %1603
        %1607 = vrot.lane.b32.xlu0 %v1531, 80
        %v1608 = vpop.permute.xlu0 %1607
        %1611 = vrot.lane.b32.xlu0 %v1525, 96
        %v1612 = vpop.permute.xlu0 %1611
        %1615 = vrot.lane.b32.xlu0 %v1533, 112
        %v1616 = vpop.permute.xlu0 %1615
        %1619 = vrot.lane.b32.xlu0 %v1583, 16
        %v1620 = vpop.permute.xlu0 %1619
        %1623 = vrot.lane.b32.xlu0 %v1569, 32
        %v1624 = vpop.permute.xlu0 %1623
        %1627 = vrot.lane.b32.xlu0 %v1585, 48
        %v1628 = vpop.permute.xlu0 %1627
        %1631 = vrot.lane.b32.xlu0 %v1577, 64
        %v1632 = vpop.permute.xlu0 %1631
        %1635 = vrot.lane.b32.xlu0 %v1587, 80
        %v1636 = vpop.permute.xlu0 %1635
        %1639 = vrot.lane.b32.xlu0 %v1581, 96
        %v1640 = vpop.permute.xlu0 %1639
        %1643 = vrot.lane.b32.xlu0 %v1589, 112
        %v1644 = vpop.permute.xlu0 %1643
        %v1646 = vsel %vm513, %v1509, %v1592
        %v1647 = vsel %vm515, %v1646, %v1596
        %v1648 = vsel %vm517, %v1647, %v1600
        %v1649 = vsel %vm519, %v1648, %v1604
        %v1650 = vsel %vm521, %v1649, %v1608
        %v1651 = vsel %vm523, %v1650, %v1612
        %v1652 = vsel %vm525, %v1651, %v1616
        %v1653 = vsel %vm513, %v1565, %v1620
        %v1654 = vsel %vm515, %v1653, %v1624
        %v1655 = vsel %vm517, %v1654, %v1628
        %v1656 = vsel %vm519, %v1655, %v1632
        %v1657 = vsel %vm521, %v1656, %v1636
        %v1658 = vsel %vm523, %v1657, %v1640
        %v1659 = vsel %vm525, %v1658, %v1644
        %v1660 = vpack.c.bf16 %v1659, %v1652
        %v1662 = vrot.slane %v1660, 6
        %1664 = vst [vmem:[#allocation3 + $0x10] sm:$0xcc] %v1662
        %v1665 = vld [vmem:[#allocation2 + $0x4] sm:$0xff]
        %v1666 = vld [vmem:[#allocation2 + $0xc] sm:$0xff]
        %v1667 = vld [vmem:[#allocation2 + $0x1c] sm:$0xff]
        %v1668 = vld [vmem:[#allocation2 + $0x24] sm:$0xff]
        %v1669 = vld [vmem:[#allocation2 + $0x34] sm:$0xff]
        %v1670 = vld [vmem:[#allocation2 + $0x3c] sm:$0xff]
        %v1671 = vld [vmem:[#allocation2 + $0x4c] sm:$0xff]
        %v1672 = vld [vmem:[#allocation2 + $0x54] sm:$0xff]
        %1681 = vrot.lane.b32.xlu0 %v1665, 123
        %v1682 = vpop.permute.xlu0 %1681
        %1683 = vrot.lane.b32.xlu0 %v1666, 123
        %v1684 = vpop.permute.xlu0 %1683
        %1685 = vrot.lane.b32.xlu0 %v1667, 123
        %v1686 = vpop.permute.xlu0 %1685
        %1687 = vrot.lane.b32.xlu0 %v1668, 123
        %v1688 = vpop.permute.xlu0 %1687
        %1689 = vrot.lane.b32.xlu0 %v1669, 123
        %v1690 = vpop.permute.xlu0 %1689
        %1691 = vrot.lane.b32.xlu0 %v1670, 123
        %v1692 = vpop.permute.xlu0 %1691
        %1693 = vrot.lane.b32.xlu0 %v1671, 123
        %v1694 = vpop.permute.xlu0 %1693
        %1695 = vrot.lane.b32.xlu0 %v1672, 123
        %v1696 = vpop.permute.xlu0 %1695
        %v1705 = vrot.slane %v1690, 4
        %v1706 = vsel %vm345, %v1705, %v1682
        %v1707 = vrot.slane %v1682, 4
        %v1708 = vsel %vm345, %v1690, %v1707
        %v1710 = vunpack.c.l.s4 1983009808
        %v1711 = vunpack.c.0.s8 %v1710
        %v1712 = vperm.slane %v1706, %v1711
        %v1714 = vunpack.c.l.s4 1983009808
        %v1715 = vunpack.c.0.s8 %v1714
        %v1716 = vperm.slane %v1708, %v1715
        %v1717 = vrot.slane %v1694, 4
        %v1718 = vsel %vm345, %v1717, %v1686
        %v1719 = vrot.slane %v1686, 4
        %v1720 = vsel %vm345, %v1694, %v1719
        %v1722 = vunpack.c.l.s4 1983009808
        %v1723 = vunpack.c.0.s8 %v1722
        %v1724 = vperm.slane %v1718, %v1723
        %v1726 = vunpack.c.l.s4 1983009808
        %v1727 = vunpack.c.0.s8 %v1726
        %v1728 = vperm.slane %v1720, %v1727
        %v1729 = vrot.slane %v1724, 4
        %v1730 = vsel %vm345, %v1729, %v1712
        %v1731 = vrot.slane %v1712, 4
        %v1732 = vsel %vm345, %v1724, %v1731
        %v1734 = vunpack.c.l.s4 1934713408
        %v1735 = vunpack.c.0.s8 %v1734
        %v1736 = vperm.slane %v1730, %v1735
        %v1738 = vunpack.c.l.s4 1934713408
        %v1739 = vunpack.c.0.s8 %v1738
        %v1740 = vperm.slane %v1732, %v1739
        %v1741 = vrot.slane %v1728, 4
        %v1742 = vsel %vm345, %v1741, %v1716
        %v1743 = vrot.slane %v1716, 4
        %v1744 = vsel %vm345, %v1728, %v1743
        %v1746 = vunpack.c.l.s4 1934713408
        %v1747 = vunpack.c.0.s8 %v1746
        %v1748 = vperm.slane %v1742, %v1747
        %v1750 = vunpack.c.l.s4 1934713408
        %v1751 = vunpack.c.0.s8 %v1750
        %v1752 = vperm.slane %v1744, %v1751
        %v1753 = vrot.slane %v1736, 4
        %v1754 = vsel %vm345, 0.0, %v1753
        %v1755 = vrot.slane %v1740, 4
        %v1756 = vsel %vm345, 0.0, %v1755
        %v1757 = vrot.slane %v1748, 4
        %v1758 = vsel %vm345, 0.0, %v1757
        %v1759 = vrot.slane %v1752, 4
        %v1760 = vsel %vm345, 0.0, %v1759
        %v1761 = vrot.slane %v1692, 4
        %v1762 = vsel %vm345, %v1761, %v1684
        %v1763 = vrot.slane %v1684, 4
        %v1764 = vsel %vm345, %v1692, %v1763
        %v1766 = vunpack.c.l.s4 1983009808
        %v1767 = vunpack.c.0.s8 %v1766
        %v1768 = vperm.slane %v1762, %v1767
        %v1770 = vunpack.c.l.s4 1983009808
        %v1771 = vunpack.c.0.s8 %v1770
        %v1772 = vperm.slane %v1764, %v1771
        %v1773 = vrot.slane %v1696, 4
        %v1774 = vsel %vm345, %v1773, %v1688
        %v1775 = vrot.slane %v1688, 4
        %v1776 = vsel %vm345, %v1696, %v1775
        %v1778 = vunpack.c.l.s4 1983009808
        %v1779 = vunpack.c.0.s8 %v1778
        %v1780 = vperm.slane %v1774, %v1779
        %v1782 = vunpack.c.l.s4 1983009808
        %v1783 = vunpack.c.0.s8 %v1782
        %v1784 = vperm.slane %v1776, %v1783
        %v1785 = vrot.slane %v1780, 4
        %v1786 = vsel %vm345, %v1785, %v1768
        %v1787 = vrot.slane %v1768, 4
        %v1788 = vsel %vm345, %v1780, %v1787
        %v1790 = vunpack.c.l.s4 1934713408
        %v1791 = vunpack.c.0.s8 %v1790
        %v1792 = vperm.slane %v1786, %v1791
        %v1794 = vunpack.c.l.s4 1934713408
        %v1795 = vunpack.c.0.s8 %v1794
        %v1796 = vperm.slane %v1788, %v1795
        %v1797 = vrot.slane %v1784, 4
        %v1798 = vsel %vm345, %v1797, %v1772
        %v1799 = vrot.slane %v1772, 4
        %v1800 = vsel %vm345, %v1784, %v1799
        %v1802 = vunpack.c.l.s4 1934713408
        %v1803 = vunpack.c.0.s8 %v1802
        %v1804 = vperm.slane %v1798, %v1803
        %v1806 = vunpack.c.l.s4 1934713408
        %v1807 = vunpack.c.0.s8 %v1806
        %v1808 = vperm.slane %v1800, %v1807
        %v1809 = vrot.slane %v1792, 4
        %v1810 = vsel %vm345, 0.0, %v1809
        %v1811 = vrot.slane %v1796, 4
        %v1812 = vsel %vm345, 0.0, %v1811
        %v1813 = vrot.slane %v1804, 4
        %v1814 = vsel %vm345, 0.0, %v1813
        %v1815 = vrot.slane %v1808, 4
        %v1816 = vsel %vm345, 0.0, %v1815
        %1818 = vrot.lane.b32.xlu0 %v1754, 16
        %v1819 = vpop.permute.xlu0 %1818
        %1822 = vrot.lane.b32.xlu0 %v1740, 32
        %v1823 = vpop.permute.xlu0 %1822
        %1826 = vrot.lane.b32.xlu0 %v1756, 48
        %v1827 = vpop.permute.xlu0 %1826
        %1830 = vrot.lane.b32.xlu0 %v1748, 64
        %v1831 = vpop.permute.xlu0 %1830
        %1834 = vrot.lane.b32.xlu0 %v1758, 80
        %v1835 = vpop.permute.xlu0 %1834
        %1838 = vrot.lane.b32.xlu0 %v1752, 96
        %v1839 = vpop.permute.xlu0 %1838
        %1842 = vrot.lane.b32.xlu0 %v1760, 112
        %v1843 = vpop.permute.xlu0 %1842
        %1846 = vrot.lane.b32.xlu0 %v1810, 16
        %v1847 = vpop.permute.xlu0 %1846
        %1850 = vrot.lane.b32.xlu0 %v1796, 32
        %v1851 = vpop.permute.xlu0 %1850
        %1854 = vrot.lane.b32.xlu0 %v1812, 48
        %v1855 = vpop.permute.xlu0 %1854
        %1858 = vrot.lane.b32.xlu0 %v1804, 64
        %v1859 = vpop.permute.xlu0 %1858
        %1862 = vrot.lane.b32.xlu0 %v1814, 80
        %v1863 = vpop.permute.xlu0 %1862
        %1866 = vrot.lane.b32.xlu0 %v1808, 96
        %v1867 = vpop.permute.xlu0 %1866
        %1870 = vrot.lane.b32.xlu0 %v1816, 112
        %v1871 = vpop.permute.xlu0 %1870
        %v1873 = vsel %vm513, %v1736, %v1819
        %v1874 = vsel %vm515, %v1873, %v1823
        %v1875 = vsel %vm517, %v1874, %v1827
        %v1876 = vsel %vm519, %v1875, %v1831
        %v1877 = vsel %vm521, %v1876, %v1835
        %v1878 = vsel %vm523, %v1877, %v1839
        %v1879 = vsel %vm525, %v1878, %v1843
        %v1880 = vsel %vm513, %v1792, %v1847
        %v1881 = vsel %vm515, %v1880, %v1851
        %v1882 = vsel %vm517, %v1881, %v1855
        %v1883 = vsel %vm519, %v1882, %v1859
        %v1884 = vsel %vm521, %v1883, %v1863
        %v1885 = vsel %vm523, %v1884, %v1867
        %v1886 = vsel %vm525, %v1885, %v1871
        %v1887 = vpack.c.bf16 %v1886, %v1879
        %1888 = vst [vmem:[#allocation3 + $0x18] sm:$0x33] %v1887
        %v1889 = vld [vmem:[#allocation2 + $0x5] sm:$0xff]
        %v1890 = vld [vmem:[#allocation2 + $0xd] sm:$0xff]
        %v1891 = vld [vmem:[#allocation2 + $0x1d] sm:$0xff]
        %v1892 = vld [vmem:[#allocation2 + $0x25] sm:$0xff]
        %v1893 = vld [vmem:[#allocation2 + $0x35] sm:$0xff]
        %v1894 = vld [vmem:[#allocation2 + $0x3d] sm:$0xff]
        %v1895 = vld [vmem:[#allocation2 + $0x4d] sm:$0xff]
        %v1896 = vld [vmem:[#allocation2 + $0x55] sm:$0xff]
        %1905 = vrot.lane.b32.xlu0 %v1889, 125
        %v1906 = vpop.permute.xlu0 %1905
        %1907 = vrot.lane.b32.xlu0 %v1890, 125
        %v1908 = vpop.permute.xlu0 %1907
        %1909 = vrot.lane.b32.xlu0 %v1891, 125
        %v1910 = vpop.permute.xlu0 %1909
        %1911 = vrot.lane.b32.xlu0 %v1892, 125
        %v1912 = vpop.permute.xlu0 %1911
        %1913 = vrot.lane.b32.xlu0 %v1893, 125
        %v1914 = vpop.permute.xlu0 %1913
        %1915 = vrot.lane.b32.xlu0 %v1894, 125
        %v1916 = vpop.permute.xlu0 %1915
        %1917 = vrot.lane.b32.xlu0 %v1895, 125
        %v1918 = vpop.permute.xlu0 %1917
        %1919 = vrot.lane.b32.xlu0 %v1896, 125
        %v1920 = vpop.permute.xlu0 %1919
        %v1929 = vrot.slane %v1914, 4
        %v1930 = vsel %vm345, %v1929, %v1906
        %v1931 = vrot.slane %v1906, 4
        %v1932 = vsel %vm345, %v1914, %v1931
        %v1934 = vunpack.c.l.s4 1983009808
        %v1935 = vunpack.c.0.s8 %v1934
        %v1936 = vperm.slane %v1930, %v1935
        %v1938 = vunpack.c.l.s4 1983009808
        %v1939 = vunpack.c.0.s8 %v1938
        %v1940 = vperm.slane %v1932, %v1939
        %v1941 = vrot.slane %v1918, 4
        %v1942 = vsel %vm345, %v1941, %v1910
        %v1943 = vrot.slane %v1910, 4
        %v1944 = vsel %vm345, %v1918, %v1943
        %v1946 = vunpack.c.l.s4 1983009808
        %v1947 = vunpack.c.0.s8 %v1946
        %v1948 = vperm.slane %v1942, %v1947
        %v1950 = vunpack.c.l.s4 1983009808
        %v1951 = vunpack.c.0.s8 %v1950
        %v1952 = vperm.slane %v1944, %v1951
        %v1953 = vrot.slane %v1948, 4
        %v1954 = vsel %vm345, %v1953, %v1936
        %v1955 = vrot.slane %v1936, 4
        %v1956 = vsel %vm345, %v1948, %v1955
        %v1958 = vunpack.c.l.s4 1934713408
        %v1959 = vunpack.c.0.s8 %v1958
        %v1960 = vperm.slane %v1954, %v1959
        %v1962 = vunpack.c.l.s4 1934713408
        %v1963 = vunpack.c.0.s8 %v1962
        %v1964 = vperm.slane %v1956, %v1963
        %v1965 = vrot.slane %v1952, 4
        %v1966 = vsel %vm345, %v1965, %v1940
        %v1967 = vrot.slane %v1940, 4
        %v1968 = vsel %vm345, %v1952, %v1967
        %v1970 = vunpack.c.l.s4 1934713408
        %v1971 = vunpack.c.0.s8 %v1970
        %v1972 = vperm.slane %v1966, %v1971
        %v1974 = vunpack.c.l.s4 1934713408
        %v1975 = vunpack.c.0.s8 %v1974
        %v1976 = vperm.slane %v1968, %v1975
        %v1977 = vrot.slane %v1960, 4
        %v1978 = vsel %vm345, 0.0, %v1977
        %v1979 = vrot.slane %v1964, 4
        %v1980 = vsel %vm345, 0.0, %v1979
        %v1981 = vrot.slane %v1972, 4
        %v1982 = vsel %vm345, 0.0, %v1981
        %v1983 = vrot.slane %v1976, 4
        %v1984 = vsel %vm345, 0.0, %v1983
        %v1985 = vrot.slane %v1916, 4
        %v1986 = vsel %vm345, %v1985, %v1908
        %v1987 = vrot.slane %v1908, 4
        %v1988 = vsel %vm345, %v1916, %v1987
        %v1990 = vunpack.c.l.s4 1983009808
        %v1991 = vunpack.c.0.s8 %v1990
        %v1992 = vperm.slane %v1986, %v1991
        %v1994 = vunpack.c.l.s4 1983009808
        %v1995 = vunpack.c.0.s8 %v1994
        %v1996 = vperm.slane %v1988, %v1995
        %v1997 = vrot.slane %v1920, 4
        %v1998 = vsel %vm345, %v1997, %v1912
        %v1999 = vrot.slane %v1912, 4
        %v2000 = vsel %vm345, %v1920, %v1999
        %v2002 = vunpack.c.l.s4 1983009808
        %v2003 = vunpack.c.0.s8 %v2002
        %v2004 = vperm.slane %v1998, %v2003
        %v2006 = vunpack.c.l.s4 1983009808
        %v2007 = vunpack.c.0.s8 %v2006
        %v2008 = vperm.slane %v2000, %v2007
        %v2009 = vrot.slane %v2004, 4
        %v2010 = vsel %vm345, %v2009, %v1992
        %v2011 = vrot.slane %v1992, 4
        %v2012 = vsel %vm345, %v2004, %v2011
        %v2014 = vunpack.c.l.s4 1934713408
        %v2015 = vunpack.c.0.s8 %v2014
        %v2016 = vperm.slane %v2010, %v2015
        %v2018 = vunpack.c.l.s4 1934713408
        %v2019 = vunpack.c.0.s8 %v2018
        %v2020 = vperm.slane %v2012, %v2019
        %v2021 = vrot.slane %v2008, 4
        %v2022 = vsel %vm345, %v2021, %v1996
        %v2023 = vrot.slane %v1996, 4
        %v2024 = vsel %vm345, %v2008, %v2023
        %v2026 = vunpack.c.l.s4 1934713408
        %v2027 = vunpack.c.0.s8 %v2026
        %v2028 = vperm.slane %v2022, %v2027
        %v2030 = vunpack.c.l.s4 1934713408
        %v2031 = vunpack.c.0.s8 %v2030
        %v2032 = vperm.slane %v2024, %v2031
        %v2033 = vrot.slane %v2016, 4
        %v2034 = vsel %vm345, 0.0, %v2033
        %v2035 = vrot.slane %v2020, 4
        %v2036 = vsel %vm345, 0.0, %v2035
        %v2037 = vrot.slane %v2028, 4
        %v2038 = vsel %vm345, 0.0, %v2037
        %v2039 = vrot.slane %v2032, 4
        %v2040 = vsel %vm345, 0.0, %v2039
        %2042 = vrot.lane.b32.xlu0 %v1978, 16
        %v2043 = vpop.permute.xlu0 %2042
        %2046 = vrot.lane.b32.xlu0 %v1964, 32
        %v2047 = vpop.permute.xlu0 %2046
        %2050 = vrot.lane.b32.xlu0 %v1980, 48
        %v2051 = vpop.permute.xlu0 %2050
        %2054 = vrot.lane.b32.xlu0 %v1972, 64
        %v2055 = vpop.permute.xlu0 %2054
        %2058 = vrot.lane.b32.xlu0 %v1982, 80
        %v2059 = vpop.permute.xlu0 %2058
        %2062 = vrot.lane.b32.xlu0 %v1976, 96
        %v2063 = vpop.permute.xlu0 %2062
        %2066 = vrot.lane.b32.xlu0 %v1984, 112
        %v2067 = vpop.permute.xlu0 %2066
        %2070 = vrot.lane.b32.xlu0 %v2034, 16
        %v2071 = vpop.permute.xlu0 %2070
        %2074 = vrot.lane.b32.xlu0 %v2020, 32
        %v2075 = vpop.permute.xlu0 %2074
        %2078 = vrot.lane.b32.xlu0 %v2036, 48
        %v2079 = vpop.permute.xlu0 %2078
        %2082 = vrot.lane.b32.xlu0 %v2028, 64
        %v2083 = vpop.permute.xlu0 %2082
        %2086 = vrot.lane.b32.xlu0 %v2038, 80
        %v2087 = vpop.permute.xlu0 %2086
        %2090 = vrot.lane.b32.xlu0 %v2032, 96
        %v2091 = vpop.permute.xlu0 %2090
        %2094 = vrot.lane.b32.xlu0 %v2040, 112
        %v2095 = vpop.permute.xlu0 %2094
        %v2097 = vsel %vm513, %v1960, %v2043
        %v2098 = vsel %vm515, %v2097, %v2047
        %v2099 = vsel %vm517, %v2098, %v2051
        %v2100 = vsel %vm519, %v2099, %v2055
        %v2101 = vsel %vm521, %v2100, %v2059
        %v2102 = vsel %vm523, %v2101, %v2063
        %v2103 = vsel %vm525, %v2102, %v2067
        %v2104 = vsel %vm513, %v2016, %v2071
        %v2105 = vsel %vm515, %v2104, %v2075
        %v2106 = vsel %vm517, %v2105, %v2079
        %v2107 = vsel %vm519, %v2106, %v2083
        %v2108 = vsel %vm521, %v2107, %v2087
        %v2109 = vsel %vm523, %v2108, %v2091
        %v2110 = vsel %vm525, %v2109, %v2095
        %v2111 = vpack.c.bf16 %v2110, %v2103
        %v2113 = vrot.slane %v2111, 6
        %2115 = vst [vmem:[#allocation3 + $0x18] sm:$0xcc] %v2113
        %v2116 = vld [vmem:[#allocation2 + $0x5] sm:$0xff]
        %v2117 = vld [vmem:[#allocation2 + $0xd] sm:$0xff]
        %v2118 = vld [vmem:[#allocation2 + $0x1d] sm:$0xff]
        %v2119 = vld [vmem:[#allocation2 + $0x25] sm:$0xff]
        %v2120 = vld [vmem:[#allocation2 + $0x35] sm:$0xff]
        %v2121 = vld [vmem:[#allocation2 + $0x3d] sm:$0xff]
        %v2122 = vld [vmem:[#allocation2 + $0x4d] sm:$0xff]
        %v2123 = vld [vmem:[#allocation2 + $0x55] sm:$0xff]
        %2132 = vrot.lane.b32.xlu0 %v2116, 124
        %v2133 = vpop.permute.xlu0 %2132
        %2134 = vrot.lane.b32.xlu0 %v2117, 124
        %v2135 = vpop.permute.xlu0 %2134
        %2136 = vrot.lane.b32.xlu0 %v2118, 124
        %v2137 = vpop.permute.xlu0 %2136
        %2138 = vrot.lane.b32.xlu0 %v2119, 124
        %v2139 = vpop.permute.xlu0 %2138
        %2140 = vrot.lane.b32.xlu0 %v2120, 124
        %v2141 = vpop.permute.xlu0 %2140
        %2142 = vrot.lane.b32.xlu0 %v2121, 124
        %v2143 = vpop.permute.xlu0 %2142
        %2144 = vrot.lane.b32.xlu0 %v2122, 124
        %v2145 = vpop.permute.xlu0 %2144
        %2146 = vrot.lane.b32.xlu0 %v2123, 124
        %v2147 = vpop.permute.xlu0 %2146
        %v2156 = vrot.slane %v2141, 4
        %v2157 = vsel %vm345, %v2156, %v2133
        %v2158 = vrot.slane %v2133, 4
        %v2159 = vsel %vm345, %v2141, %v2158
        %v2161 = vunpack.c.l.s4 1983009808
        %v2162 = vunpack.c.0.s8 %v2161
        %v2163 = vperm.slane %v2157, %v2162
        %v2165 = vunpack.c.l.s4 1983009808
        %v2166 = vunpack.c.0.s8 %v2165
        %v2167 = vperm.slane %v2159, %v2166
        %v2168 = vrot.slane %v2145, 4
        %v2169 = vsel %vm345, %v2168, %v2137
        %v2170 = vrot.slane %v2137, 4
        %v2171 = vsel %vm345, %v2145, %v2170
        %v2173 = vunpack.c.l.s4 1983009808
        %v2174 = vunpack.c.0.s8 %v2173
        %v2175 = vperm.slane %v2169, %v2174
        %v2177 = vunpack.c.l.s4 1983009808
        %v2178 = vunpack.c.0.s8 %v2177
        %v2179 = vperm.slane %v2171, %v2178
        %v2180 = vrot.slane %v2175, 4
        %v2181 = vsel %vm345, %v2180, %v2163
        %v2182 = vrot.slane %v2163, 4
        %v2183 = vsel %vm345, %v2175, %v2182
        %v2185 = vunpack.c.l.s4 1934713408
        %v2186 = vunpack.c.0.s8 %v2185
        %v2187 = vperm.slane %v2181, %v2186
        %v2189 = vunpack.c.l.s4 1934713408
        %v2190 = vunpack.c.0.s8 %v2189
        %v2191 = vperm.slane %v2183, %v2190
        %v2192 = vrot.slane %v2179, 4
        %v2193 = vsel %vm345, %v2192, %v2167
        %v2194 = vrot.slane %v2167, 4
        %v2195 = vsel %vm345, %v2179, %v2194
        %v2197 = vunpack.c.l.s4 1934713408
        %v2198 = vunpack.c.0.s8 %v2197
        %v2199 = vperm.slane %v2193, %v2198
        %v2201 = vunpack.c.l.s4 1934713408
        %v2202 = vunpack.c.0.s8 %v2201
        %v2203 = vperm.slane %v2195, %v2202
        %v2204 = vrot.slane %v2187, 4
        %v2205 = vsel %vm345, 0.0, %v2204
        %v2206 = vrot.slane %v2191, 4
        %v2207 = vsel %vm345, 0.0, %v2206
        %v2208 = vrot.slane %v2199, 4
        %v2209 = vsel %vm345, 0.0, %v2208
        %v2210 = vrot.slane %v2203, 4
        %v2211 = vsel %vm345, 0.0, %v2210
        %v2212 = vrot.slane %v2143, 4
        %v2213 = vsel %vm345, %v2212, %v2135
        %v2214 = vrot.slane %v2135, 4
        %v2215 = vsel %vm345, %v2143, %v2214
        %v2217 = vunpack.c.l.s4 1983009808
        %v2218 = vunpack.c.0.s8 %v2217
        %v2219 = vperm.slane %v2213, %v2218
        %v2221 = vunpack.c.l.s4 1983009808
        %v2222 = vunpack.c.0.s8 %v2221
        %v2223 = vperm.slane %v2215, %v2222
        %v2224 = vrot.slane %v2147, 4
        %v2225 = vsel %vm345, %v2224, %v2139
        %v2226 = vrot.slane %v2139, 4
        %v2227 = vsel %vm345, %v2147, %v2226
        %v2229 = vunpack.c.l.s4 1983009808
        %v2230 = vunpack.c.0.s8 %v2229
        %v2231 = vperm.slane %v2225, %v2230
        %v2233 = vunpack.c.l.s4 1983009808
        %v2234 = vunpack.c.0.s8 %v2233
        %v2235 = vperm.slane %v2227, %v2234
        %v2236 = vrot.slane %v2231, 4
        %v2237 = vsel %vm345, %v2236, %v2219
        %v2238 = vrot.slane %v2219, 4
        %v2239 = vsel %vm345, %v2231, %v2238
        %v2241 = vunpack.c.l.s4 1934713408
        %v2242 = vunpack.c.0.s8 %v2241
        %v2243 = vperm.slane %v2237, %v2242
        %v2245 = vunpack.c.l.s4 1934713408
        %v2246 = vunpack.c.0.s8 %v2245
        %v2247 = vperm.slane %v2239, %v2246
        %v2248 = vrot.slane %v2235, 4
        %v2249 = vsel %vm345, %v2248, %v2223
        %v2250 = vrot.slane %v2223, 4
        %v2251 = vsel %vm345, %v2235, %v2250
        %v2253 = vunpack.c.l.s4 1934713408
        %v2254 = vunpack.c.0.s8 %v2253
        %v2255 = vperm.slane %v2249, %v2254
        %v2257 = vunpack.c.l.s4 1934713408
        %v2258 = vunpack.c.0.s8 %v2257
        %v2259 = vperm.slane %v2251, %v2258
        %v2260 = vrot.slane %v2243, 4
        %v2261 = vsel %vm345, 0.0, %v2260
        %v2262 = vrot.slane %v2247, 4
        %v2263 = vsel %vm345, 0.0, %v2262
        %v2264 = vrot.slane %v2255, 4
        %v2265 = vsel %vm345, 0.0, %v2264
        %v2266 = vrot.slane %v2259, 4
        %v2267 = vsel %vm345, 0.0, %v2266
        %2269 = vrot.lane.b32.xlu0 %v2205, 16
        %v2270 = vpop.permute.xlu0 %2269
        %2273 = vrot.lane.b32.xlu0 %v2191, 32
        %v2274 = vpop.permute.xlu0 %2273
        %2277 = vrot.lane.b32.xlu0 %v2207, 48
        %v2278 = vpop.permute.xlu0 %2277
        %2281 = vrot.lane.b32.xlu0 %v2199, 64
        %v2282 = vpop.permute.xlu0 %2281
        %2285 = vrot.lane.b32.xlu0 %v2209, 80
        %v2286 = vpop.permute.xlu0 %2285
        %2289 = vrot.lane.b32.xlu0 %v2203, 96
        %v2290 = vpop.permute.xlu0 %2289
        %2293 = vrot.lane.b32.xlu0 %v2211, 112
        %v2294 = vpop.permute.xlu0 %2293
        %2297 = vrot.lane.b32.xlu0 %v2261, 16
        %v2298 = vpop.permute.xlu0 %2297
        %2301 = vrot.lane.b32.xlu0 %v2247, 32
        %v2302 = vpop.permute.xlu0 %2301
        %2305 = vrot.lane.b32.xlu0 %v2263, 48
        %v2306 = vpop.permute.xlu0 %2305
        %2309 = vrot.lane.b32.xlu0 %v2255, 64
        %v2310 = vpop.permute.xlu0 %2309
        %2313 = vrot.lane.b32.xlu0 %v2265, 80
        %v2314 = vpop.permute.xlu0 %2313
        %2317 = vrot.lane.b32.xlu0 %v2259, 96
        %v2318 = vpop.permute.xlu0 %2317
        %2321 = vrot.lane.b32.xlu0 %v2267, 112
        %v2322 = vpop.permute.xlu0 %2321
        %v2324 = vsel %vm513, %v2187, %v2270
        %v2325 = vsel %vm515, %v2324, %v2274
        %v2326 = vsel %vm517, %v2325, %v2278
        %v2327 = vsel %vm519, %v2326, %v2282
        %v2328 = vsel %vm521, %v2327, %v2286
        %v2329 = vsel %vm523, %v2328, %v2290
        %v2330 = vsel %vm525, %v2329, %v2294
        %v2331 = vsel %vm513, %v2243, %v2298
        %v2332 = vsel %vm515, %v2331, %v2302
        %v2333 = vsel %vm517, %v2332, %v2306
        %v2334 = vsel %vm519, %v2333, %v2310
        %v2335 = vsel %vm521, %v2334, %v2314
        %v2336 = vsel %vm523, %v2335, %v2318
        %v2337 = vsel %vm525, %v2336, %v2322
        %v2338 = vpack.c.bf16 %v2337, %v2330
        %2339 = vst [vmem:[#allocation3 + $0x20] sm:$0x33] %v2338
        %v2340 = vld [vmem:[#allocation2 + $0x5] sm:$0xff]
        %v2341 = vld [vmem:[#allocation2 + $0xd] sm:$0xff]
        %v2342 = vld [vmem:[#allocation2 + $0x1d] sm:$0xff]
        %v2343 = vld [vmem:[#allocation2 + $0x25] sm:$0xff]
        %v2344 = vld [vmem:[#allocation2 + $0x35] sm:$0xff]
        %v2345 = vld [vmem:[#allocation2 + $0x3d] sm:$0xff]
        %v2346 = vld [vmem:[#allocation2 + $0x4d] sm:$0xff]
        %v2347 = vld [vmem:[#allocation2 + $0x55] sm:$0xff]
        %2356 = vrot.lane.b32.xlu0 %v2340, 123
        %v2357 = vpop.permute.xlu0 %2356
        %2358 = vrot.lane.b32.xlu0 %v2341, 123
        %v2359 = vpop.permute.xlu0 %2358
        %2360 = vrot.lane.b32.xlu0 %v2342, 123
        %v2361 = vpop.permute.xlu0 %2360
        %2362 = vrot.lane.b32.xlu0 %v2343, 123
        %v2363 = vpop.permute.xlu0 %2362
        %2364 = vrot.lane.b32.xlu0 %v2344, 123
        %v2365 = vpop.permute.xlu0 %2364
        %2366 = vrot.lane.b32.xlu0 %v2345, 123
        %v2367 = vpop.permute.xlu0 %2366
        %2368 = vrot.lane.b32.xlu0 %v2346, 123
        %v2369 = vpop.permute.xlu0 %2368
        %2370 = vrot.lane.b32.xlu0 %v2347, 123
        %v2371 = vpop.permute.xlu0 %2370
        %v2380 = vrot.slane %v2365, 4
        %v2381 = vsel %vm345, %v2380, %v2357
        %v2382 = vrot.slane %v2357, 4
        %v2383 = vsel %vm345, %v2365, %v2382
        %v2385 = vunpack.c.l.s4 1983009808
        %v2386 = vunpack.c.0.s8 %v2385
        %v2387 = vperm.slane %v2381, %v2386
        %v2389 = vunpack.c.l.s4 1983009808
        %v2390 = vunpack.c.0.s8 %v2389
        %v2391 = vperm.slane %v2383, %v2390
        %v2392 = vrot.slane %v2369, 4
        %v2393 = vsel %vm345, %v2392, %v2361
        %v2394 = vrot.slane %v2361, 4
        %v2395 = vsel %vm345, %v2369, %v2394
        %v2397 = vunpack.c.l.s4 1983009808
        %v2398 = vunpack.c.0.s8 %v2397
        %v2399 = vperm.slane %v2393, %v2398
        %v2401 = vunpack.c.l.s4 1983009808
        %v2402 = vunpack.c.0.s8 %v2401
        %v2403 = vperm.slane %v2395, %v2402
        %v2404 = vrot.slane %v2399, 4
        %v2405 = vsel %vm345, %v2404, %v2387
        %v2406 = vrot.slane %v2387, 4
        %v2407 = vsel %vm345, %v2399, %v2406
        %v2409 = vunpack.c.l.s4 1934713408
        %v2410 = vunpack.c.0.s8 %v2409
        %v2411 = vperm.slane %v2405, %v2410
        %v2413 = vunpack.c.l.s4 1934713408
        %v2414 = vunpack.c.0.s8 %v2413
        %v2415 = vperm.slane %v2407, %v2414
        %v2416 = vrot.slane %v2403, 4
        %v2417 = vsel %vm345, %v2416, %v2391
        %v2418 = vrot.slane %v2391, 4
        %v2419 = vsel %vm345, %v2403, %v2418
        %v2421 = vunpack.c.l.s4 1934713408
        %v2422 = vunpack.c.0.s8 %v2421
        %v2423 = vperm.slane %v2417, %v2422
        %v2425 = vunpack.c.l.s4 1934713408
        %v2426 = vunpack.c.0.s8 %v2425
        %v2427 = vperm.slane %v2419, %v2426
        %v2428 = vrot.slane %v2411, 4
        %v2429 = vsel %vm345, 0.0, %v2428
        %v2430 = vrot.slane %v2415, 4
        %v2431 = vsel %vm345, 0.0, %v2430
        %v2432 = vrot.slane %v2423, 4
        %v2433 = vsel %vm345, 0.0, %v2432
        %v2434 = vrot.slane %v2427, 4
        %v2435 = vsel %vm345, 0.0, %v2434
        %v2436 = vrot.slane %v2367, 4
        %v2437 = vsel %vm345, %v2436, %v2359
        %v2438 = vrot.slane %v2359, 4
        %v2439 = vsel %vm345, %v2367, %v2438
        %v2441 = vunpack.c.l.s4 1983009808
        %v2442 = vunpack.c.0.s8 %v2441
        %v2443 = vperm.slane %v2437, %v2442
        %v2445 = vunpack.c.l.s4 1983009808
        %v2446 = vunpack.c.0.s8 %v2445
        %v2447 = vperm.slane %v2439, %v2446
        %v2448 = vrot.slane %v2371, 4
        %v2449 = vsel %vm345, %v2448, %v2363
        %v2450 = vrot.slane %v2363, 4
        %v2451 = vsel %vm345, %v2371, %v2450
        %v2453 = vunpack.c.l.s4 1983009808
        %v2454 = vunpack.c.0.s8 %v2453
        %v2455 = vperm.slane %v2449, %v2454
        %v2457 = vunpack.c.l.s4 1983009808
        %v2458 = vunpack.c.0.s8 %v2457
        %v2459 = vperm.slane %v2451, %v2458
        %v2460 = vrot.slane %v2455, 4
        %v2461 = vsel %vm345, %v2460, %v2443
        %v2462 = vrot.slane %v2443, 4
        %v2463 = vsel %vm345, %v2455, %v2462
        %v2465 = vunpack.c.l.s4 1934713408
        %v2466 = vunpack.c.0.s8 %v2465
        %v2467 = vperm.slane %v2461, %v2466
        %v2469 = vunpack.c.l.s4 1934713408
        %v2470 = vunpack.c.0.s8 %v2469
        %v2471 = vperm.slane %v2463, %v2470
        %v2472 = vrot.slane %v2459, 4
        %v2473 = vsel %vm345, %v2472, %v2447
        %v2474 = vrot.slane %v2447, 4
        %v2475 = vsel %vm345, %v2459, %v2474
        %v2477 = vunpack.c.l.s4 1934713408
        %v2478 = vunpack.c.0.s8 %v2477
        %v2479 = vperm.slane %v2473, %v2478
        %v2481 = vunpack.c.l.s4 1934713408
        %v2482 = vunpack.c.0.s8 %v2481
        %v2483 = vperm.slane %v2475, %v2482
        %v2484 = vrot.slane %v2467, 4
        %v2485 = vsel %vm345, 0.0, %v2484
        %v2486 = vrot.slane %v2471, 4
        %v2487 = vsel %vm345, 0.0, %v2486
        %v2488 = vrot.slane %v2479, 4
        %v2489 = vsel %vm345, 0.0, %v2488
        %v2490 = vrot.slane %v2483, 4
        %v2491 = vsel %vm345, 0.0, %v2490
        %2493 = vrot.lane.b32.xlu0 %v2429, 16
        %v2494 = vpop.permute.xlu0 %2493
        %2497 = vrot.lane.b32.xlu0 %v2415, 32
        %v2498 = vpop.permute.xlu0 %2497
        %2501 = vrot.lane.b32.xlu0 %v2431, 48
        %v2502 = vpop.permute.xlu0 %2501
        %2505 = vrot.lane.b32.xlu0 %v2423, 64
        %v2506 = vpop.permute.xlu0 %2505
        %2509 = vrot.lane.b32.xlu0 %v2433, 80
        %v2510 = vpop.permute.xlu0 %2509
        %2513 = vrot.lane.b32.xlu0 %v2427, 96
        %v2514 = vpop.permute.xlu0 %2513
        %2517 = vrot.lane.b32.xlu0 %v2435, 112
        %v2518 = vpop.permute.xlu0 %2517
        %2521 = vrot.lane.b32.xlu0 %v2485, 16
        %v2522 = vpop.permute.xlu0 %2521
        %2525 = vrot.lane.b32.xlu0 %v2471, 32
        %v2526 = vpop.permute.xlu0 %2525
        %2529 = vrot.lane.b32.xlu0 %v2487, 48
        %v2530 = vpop.permute.xlu0 %2529
        %2533 = vrot.lane.b32.xlu0 %v2479, 64
        %v2534 = vpop.permute.xlu0 %2533
        %2537 = vrot.lane.b32.xlu0 %v2489, 80
        %v2538 = vpop.permute.xlu0 %2537
        %2541 = vrot.lane.b32.xlu0 %v2483, 96
        %v2542 = vpop.permute.xlu0 %2541
        %2545 = vrot.lane.b32.xlu0 %v2491, 112
        %v2546 = vpop.permute.xlu0 %2545
        %v2548 = vsel %vm513, %v2411, %v2494
        %v2549 = vsel %vm515, %v2548, %v2498
        %v2550 = vsel %vm517, %v2549, %v2502
        %v2551 = vsel %vm519, %v2550, %v2506
        %v2552 = vsel %vm521, %v2551, %v2510
        %v2553 = vsel %vm523, %v2552, %v2514
        %v2554 = vsel %vm525, %v2553, %v2518
        %v2555 = vsel %vm513, %v2467, %v2522
        %v2556 = vsel %vm515, %v2555, %v2526
        %v2557 = vsel %vm517, %v2556, %v2530
        %v2558 = vsel %vm519, %v2557, %v2534
        %v2559 = vsel %vm521, %v2558, %v2538
        %v2560 = vsel %vm523, %v2559, %v2542
        %v2561 = vsel %vm525, %v2560, %v2546
        %v2562 = vpack.c.bf16 %v2561, %v2554
        %v2564 = vrot.slane %v2562, 6
        %2566 = vst [vmem:[#allocation3 + $0x20] sm:$0xcc] %v2564
        %v2567 = vld [vmem:[#allocation2 + $0x2] sm:$0xff]
        %v2568 = vld [vmem:[#allocation2 + $0xa] sm:$0xff]
        %v2569 = vld [vmem:[#allocation2 + $0x1a] sm:$0xff]
        %v2570 = vld [vmem:[#allocation2 + $0x22] sm:$0xff]
        %v2571 = vld [vmem:[#allocation2 + $0x32] sm:$0xff]
        %v2572 = vld [vmem:[#allocation2 + $0x3a] sm:$0xff]
        %v2573 = vld [vmem:[#allocation2 + $0x4a] sm:$0xff]
        %v2574 = vld [vmem:[#allocation2 + $0x52] sm:$0xff]
        %2583 = vrot.lane.b32.xlu0 %v2567, 126
        %v2584 = vpop.permute.xlu0 %2583
        %2585 = vrot.lane.b32.xlu0 %v2568, 126
        %v2586 = vpop.permute.xlu0 %2585
        %2587 = vrot.lane.b32.xlu0 %v2569, 126
        %v2588 = vpop.permute.xlu0 %2587
        %2589 = vrot.lane.b32.xlu0 %v2570, 126
        %v2590 = vpop.permute.xlu0 %2589
        %2591 = vrot.lane.b32.xlu0 %v2571, 126
        %v2592 = vpop.permute.xlu0 %2591
        %2593 = vrot.lane.b32.xlu0 %v2572, 126
        %v2594 = vpop.permute.xlu0 %2593
        %2595 = vrot.lane.b32.xlu0 %v2573, 126
        %v2596 = vpop.permute.xlu0 %2595
        %2597 = vrot.lane.b32.xlu0 %v2574, 126
        %v2598 = vpop.permute.xlu0 %2597
        %v2607 = vrot.slane %v2592, 4
        %v2608 = vsel %vm345, %v2607, %v2584
        %v2609 = vrot.slane %v2584, 4
        %v2610 = vsel %vm345, %v2592, %v2609
        %v2612 = vunpack.c.l.s4 1983009808
        %v2613 = vunpack.c.0.s8 %v2612
        %v2614 = vperm.slane %v2608, %v2613
        %v2616 = vunpack.c.l.s4 1983009808
        %v2617 = vunpack.c.0.s8 %v2616
        %v2618 = vperm.slane %v2610, %v2617
        %v2619 = vrot.slane %v2596, 4
        %v2620 = vsel %vm345, %v2619, %v2588
        %v2621 = vrot.slane %v2588, 4
        %v2622 = vsel %vm345, %v2596, %v2621
        %v2624 = vunpack.c.l.s4 1983009808
        %v2625 = vunpack.c.0.s8 %v2624
        %v2626 = vperm.slane %v2620, %v2625
        %v2628 = vunpack.c.l.s4 1983009808
        %v2629 = vunpack.c.0.s8 %v2628
        %v2630 = vperm.slane %v2622, %v2629
        %v2631 = vrot.slane %v2626, 4
        %v2632 = vsel %vm345, %v2631, %v2614
        %v2633 = vrot.slane %v2614, 4
        %v2634 = vsel %vm345, %v2626, %v2633
        %v2636 = vunpack.c.l.s4 1934713408
        %v2637 = vunpack.c.0.s8 %v2636
        %v2638 = vperm.slane %v2632, %v2637
        %v2640 = vunpack.c.l.s4 1934713408
        %v2641 = vunpack.c.0.s8 %v2640
        %v2642 = vperm.slane %v2634, %v2641
        %v2643 = vrot.slane %v2630, 4
        %v2644 = vsel %vm345, %v2643, %v2618
        %v2645 = vrot.slane %v2618, 4
        %v2646 = vsel %vm345, %v2630, %v2645
        %v2648 = vunpack.c.l.s4 1934713408
        %v2649 = vunpack.c.0.s8 %v2648
        %v2650 = vperm.slane %v2644, %v2649
        %v2652 = vunpack.c.l.s4 1934713408
        %v2653 = vunpack.c.0.s8 %v2652
        %v2654 = vperm.slane %v2646, %v2653
        %v2655 = vrot.slane %v2638, 4
        %v2656 = vsel %vm345, 0.0, %v2655
        %v2657 = vrot.slane %v2642, 4
        %v2658 = vsel %vm345, 0.0, %v2657
        %v2659 = vrot.slane %v2650, 4
        %v2660 = vsel %vm345, 0.0, %v2659
        %v2661 = vrot.slane %v2654, 4
        %v2662 = vsel %vm345, 0.0, %v2661
        %v2663 = vrot.slane %v2594, 4
        %v2664 = vsel %vm345, %v2663, %v2586
        %v2665 = vrot.slane %v2586, 4
        %v2666 = vsel %vm345, %v2594, %v2665
        %v2668 = vunpack.c.l.s4 1983009808
        %v2669 = vunpack.c.0.s8 %v2668
        %v2670 = vperm.slane %v2664, %v2669
        %v2672 = vunpack.c.l.s4 1983009808
        %v2673 = vunpack.c.0.s8 %v2672
        %v2674 = vperm.slane %v2666, %v2673
        %v2675 = vrot.slane %v2598, 4
        %v2676 = vsel %vm345, %v2675, %v2590
        %v2677 = vrot.slane %v2590, 4
        %v2678 = vsel %vm345, %v2598, %v2677
        %v2680 = vunpack.c.l.s4 1983009808
        %v2681 = vunpack.c.0.s8 %v2680
        %v2682 = vperm.slane %v2676, %v2681
        %v2684 = vunpack.c.l.s4 1983009808
        %v2685 = vunpack.c.0.s8 %v2684
        %v2686 = vperm.slane %v2678, %v2685
        %v2687 = vrot.slane %v2682, 4
        %v2688 = vsel %vm345, %v2687, %v2670
        %v2689 = vrot.slane %v2670, 4
        %v2690 = vsel %vm345, %v2682, %v2689
        %v2692 = vunpack.c.l.s4 1934713408
        %v2693 = vunpack.c.0.s8 %v2692
        %v2694 = vperm.slane %v2688, %v2693
        %v2696 = vunpack.c.l.s4 1934713408
        %v2697 = vunpack.c.0.s8 %v2696
        %v2698 = vperm.slane %v2690, %v2697
        %v2699 = vrot.slane %v2686, 4
        %v2700 = vsel %vm345, %v2699, %v2674
        %v2701 = vrot.slane %v2674, 4
        %v2702 = vsel %vm345, %v2686, %v2701
        %v2704 = vunpack.c.l.s4 1934713408
        %v2705 = vunpack.c.0.s8 %v2704
        %v2706 = vperm.slane %v2700, %v2705
        %v2708 = vunpack.c.l.s4 1934713408
        %v2709 = vunpack.c.0.s8 %v2708
        %v2710 = vperm.slane %v2702, %v2709
        %v2711 = vrot.slane %v2694, 4
        %v2712 = vsel %vm345, 0.0, %v2711
        %v2713 = vrot.slane %v2698, 4
        %v2714 = vsel %vm345, 0.0, %v2713
        %v2715 = vrot.slane %v2706, 4
        %v2716 = vsel %vm345, 0.0, %v2715
        %v2717 = vrot.slane %v2710, 4
        %v2718 = vsel %vm345, 0.0, %v2717
        %2720 = vrot.lane.b32.xlu0 %v2656, 16
        %v2721 = vpop.permute.xlu0 %2720
        %2724 = vrot.lane.b32.xlu0 %v2642, 32
        %v2725 = vpop.permute.xlu0 %2724
        %2728 = vrot.lane.b32.xlu0 %v2658, 48
        %v2729 = vpop.permute.xlu0 %2728
        %2732 = vrot.lane.b32.xlu0 %v2650, 64
        %v2733 = vpop.permute.xlu0 %2732
        %2736 = vrot.lane.b32.xlu0 %v2660, 80
        %v2737 = vpop.permute.xlu0 %2736
        %2740 = vrot.lane.b32.xlu0 %v2654, 96
        %v2741 = vpop.permute.xlu0 %2740
        %2744 = vrot.lane.b32.xlu0 %v2662, 112
        %v2745 = vpop.permute.xlu0 %2744
        %2748 = vrot.lane.b32.xlu0 %v2712, 16
        %v2749 = vpop.permute.xlu0 %2748
        %2752 = vrot.lane.b32.xlu0 %v2698, 32
        %v2753 = vpop.permute.xlu0 %2752
        %2756 = vrot.lane.b32.xlu0 %v2714, 48
        %v2757 = vpop.permute.xlu0 %2756
        %2760 = vrot.lane.b32.xlu0 %v2706, 64
        %v2761 = vpop.permute.xlu0 %2760
        %2764 = vrot.lane.b32.xlu0 %v2716, 80
        %v2765 = vpop.permute.xlu0 %2764
        %2768 = vrot.lane.b32.xlu0 %v2710, 96
        %v2769 = vpop.permute.xlu0 %2768
        %2772 = vrot.lane.b32.xlu0 %v2718, 112
        %v2773 = vpop.permute.xlu0 %2772
        %v2775 = vsel %vm513, %v2638, %v2721
        %v2776 = vsel %vm515, %v2775, %v2725
        %v2777 = vsel %vm517, %v2776, %v2729
        %v2778 = vsel %vm519, %v2777, %v2733
        %v2779 = vsel %vm521, %v2778, %v2737
        %v2780 = vsel %vm523, %v2779, %v2741
        %v2781 = vsel %vm525, %v2780, %v2745
        %v2782 = vsel %vm513, %v2694, %v2749
        %v2783 = vsel %vm515, %v2782, %v2753
        %v2784 = vsel %vm517, %v2783, %v2757
        %v2785 = vsel %vm519, %v2784, %v2761
        %v2786 = vsel %vm521, %v2785, %v2765
        %v2787 = vsel %vm523, %v2786, %v2769
        %v2788 = vsel %vm525, %v2787, %v2773
        %v2789 = vpack.c.bf16 %v2788, %v2781
        %2790 = vst [vmem:[#allocation3 + $0x28] sm:$0x33] %v2789
        %v2791 = vld [vmem:[#allocation2 + $0x2] sm:$0xff]
        %v2792 = vld [vmem:[#allocation2 + $0xa] sm:$0xff]
        %v2793 = vld [vmem:[#allocation2 + $0x1a] sm:$0xff]
        %v2794 = vld [vmem:[#allocation2 + $0x22] sm:$0xff]
        %v2795 = vld [vmem:[#allocation2 + $0x32] sm:$0xff]
        %v2796 = vld [vmem:[#allocation2 + $0x3a] sm:$0xff]
        %v2797 = vld [vmem:[#allocation2 + $0x4a] sm:$0xff]
        %v2798 = vld [vmem:[#allocation2 + $0x52] sm:$0xff]
        %2807 = vrot.lane.b32.xlu0 %v2791, 124
        %v2808 = vpop.permute.xlu0 %2807
        %2809 = vrot.lane.b32.xlu0 %v2792, 124
        %v2810 = vpop.permute.xlu0 %2809
        %2811 = vrot.lane.b32.xlu0 %v2793, 124
        %v2812 = vpop.permute.xlu0 %2811
        %2813 = vrot.lane.b32.xlu0 %v2794, 124
        %v2814 = vpop.permute.xlu0 %2813
        %2815 = vrot.lane.b32.xlu0 %v2795, 124
        %v2816 = vpop.permute.xlu0 %2815
        %2817 = vrot.lane.b32.xlu0 %v2796, 124
        %v2818 = vpop.permute.xlu0 %2817
        %2819 = vrot.lane.b32.xlu0 %v2797, 124
        %v2820 = vpop.permute.xlu0 %2819
        %2821 = vrot.lane.b32.xlu0 %v2798, 124
        %v2822 = vpop.permute.xlu0 %2821
        %v2831 = vrot.slane %v2816, 4
        %v2832 = vsel %vm345, %v2831, %v2808
        %v2833 = vrot.slane %v2808, 4
        %v2834 = vsel %vm345, %v2816, %v2833
        %v2836 = vunpack.c.l.s4 1983009808
        %v2837 = vunpack.c.0.s8 %v2836
        %v2838 = vperm.slane %v2832, %v2837
        %v2840 = vunpack.c.l.s4 1983009808
        %v2841 = vunpack.c.0.s8 %v2840
        %v2842 = vperm.slane %v2834, %v2841
        %v2843 = vrot.slane %v2820, 4
        %v2844 = vsel %vm345, %v2843, %v2812
        %v2845 = vrot.slane %v2812, 4
        %v2846 = vsel %vm345, %v2820, %v2845
        %v2848 = vunpack.c.l.s4 1983009808
        %v2849 = vunpack.c.0.s8 %v2848
        %v2850 = vperm.slane %v2844, %v2849
        %v2852 = vunpack.c.l.s4 1983009808
        %v2853 = vunpack.c.0.s8 %v2852
        %v2854 = vperm.slane %v2846, %v2853
        %v2855 = vrot.slane %v2850, 4
        %v2856 = vsel %vm345, %v2855, %v2838
        %v2857 = vrot.slane %v2838, 4
        %v2858 = vsel %vm345, %v2850, %v2857
        %v2860 = vunpack.c.l.s4 1934713408
        %v2861 = vunpack.c.0.s8 %v2860
        %v2862 = vperm.slane %v2856, %v2861
        %v2864 = vunpack.c.l.s4 1934713408
        %v2865 = vunpack.c.0.s8 %v2864
        %v2866 = vperm.slane %v2858, %v2865
        %v2867 = vrot.slane %v2854, 4
        %v2868 = vsel %vm345, %v2867, %v2842
        %v2869 = vrot.slane %v2842, 4
        %v2870 = vsel %vm345, %v2854, %v2869
        %v2872 = vunpack.c.l.s4 1934713408
        %v2873 = vunpack.c.0.s8 %v2872
        %v2874 = vperm.slane %v2868, %v2873
        %v2876 = vunpack.c.l.s4 1934713408
        %v2877 = vunpack.c.0.s8 %v2876
        %v2878 = vperm.slane %v2870, %v2877
        %v2879 = vrot.slane %v2862, 4
        %v2880 = vsel %vm345, 0.0, %v2879
        %v2881 = vrot.slane %v2866, 4
        %v2882 = vsel %vm345, 0.0, %v2881
        %v2883 = vrot.slane %v2874, 4
        %v2884 = vsel %vm345, 0.0, %v2883
        %v2885 = vrot.slane %v2878, 4
        %v2886 = vsel %vm345, 0.0, %v2885
        %v2887 = vrot.slane %v2818, 4
        %v2888 = vsel %vm345, %v2887, %v2810
        %v2889 = vrot.slane %v2810, 4
        %v2890 = vsel %vm345, %v2818, %v2889
        %v2892 = vunpack.c.l.s4 1983009808
        %v2893 = vunpack.c.0.s8 %v2892
        %v2894 = vperm.slane %v2888, %v2893
        %v2896 = vunpack.c.l.s4 1983009808
        %v2897 = vunpack.c.0.s8 %v2896
        %v2898 = vperm.slane %v2890, %v2897
        %v2899 = vrot.slane %v2822, 4
        %v2900 = vsel %vm345, %v2899, %v2814
        %v2901 = vrot.slane %v2814, 4
        %v2902 = vsel %vm345, %v2822, %v2901
        %v2904 = vunpack.c.l.s4 1983009808
        %v2905 = vunpack.c.0.s8 %v2904
        %v2906 = vperm.slane %v2900, %v2905
        %v2908 = vunpack.c.l.s4 1983009808
        %v2909 = vunpack.c.0.s8 %v2908
        %v2910 = vperm.slane %v2902, %v2909
        %v2911 = vrot.slane %v2906, 4
        %v2912 = vsel %vm345, %v2911, %v2894
        %v2913 = vrot.slane %v2894, 4
        %v2914 = vsel %vm345, %v2906, %v2913
        %v2916 = vunpack.c.l.s4 1934713408
        %v2917 = vunpack.c.0.s8 %v2916
        %v2918 = vperm.slane %v2912, %v2917
        %v2920 = vunpack.c.l.s4 1934713408
        %v2921 = vunpack.c.0.s8 %v2920
        %v2922 = vperm.slane %v2914, %v2921
        %v2923 = vrot.slane %v2910, 4
        %v2924 = vsel %vm345, %v2923, %v2898
        %v2925 = vrot.slane %v2898, 4
        %v2926 = vsel %vm345, %v2910, %v2925
        %v2928 = vunpack.c.l.s4 1934713408
        %v2929 = vunpack.c.0.s8 %v2928
        %v2930 = vperm.slane %v2924, %v2929
        %v2932 = vunpack.c.l.s4 1934713408
        %v2933 = vunpack.c.0.s8 %v2932
        %v2934 = vperm.slane %v2926, %v2933
        %v2935 = vrot.slane %v2918, 4
        %v2936 = vsel %vm345, 0.0, %v2935
        %v2937 = vrot.slane %v2922, 4
        %v2938 = vsel %vm345, 0.0, %v2937
        %v2939 = vrot.slane %v2930, 4
        %v2940 = vsel %vm345, 0.0, %v2939
        %v2941 = vrot.slane %v2934, 4
        %v2942 = vsel %vm345, 0.0, %v2941
        %2944 = vrot.lane.b32.xlu0 %v2880, 16
        %v2945 = vpop.permute.xlu0 %2944
        %2948 = vrot.lane.b32.xlu0 %v2866, 32
        %v2949 = vpop.permute.xlu0 %2948
        %2952 = vrot.lane.b32.xlu0 %v2882, 48
        %v2953 = vpop.permute.xlu0 %2952
        %2956 = vrot.lane.b32.xlu0 %v2874, 64
        %v2957 = vpop.permute.xlu0 %2956
        %2960 = vrot.lane.b32.xlu0 %v2884, 80
        %v2961 = vpop.permute.xlu0 %2960
        %2964 = vrot.lane.b32.xlu0 %v2878, 96
        %v2965 = vpop.permute.xlu0 %2964
        %2968 = vrot.lane.b32.xlu0 %v2886, 112
        %v2969 = vpop.permute.xlu0 %2968
        %2972 = vrot.lane.b32.xlu0 %v2936, 16
        %v2973 = vpop.permute.xlu0 %2972
        %2976 = vrot.lane.b32.xlu0 %v2922, 32
        %v2977 = vpop.permute.xlu0 %2976
        %2980 = vrot.lane.b32.xlu0 %v2938, 48
        %v2981 = vpop.permute.xlu0 %2980
        %2984 = vrot.lane.b32.xlu0 %v2930, 64
        %v2985 = vpop.permute.xlu0 %2984
        %2988 = vrot.lane.b32.xlu0 %v2940, 80
        %v2989 = vpop.permute.xlu0 %2988
        %2992 = vrot.lane.b32.xlu0 %v2934, 96
        %v2993 = vpop.permute.xlu0 %2992
        %2996 = vrot.lane.b32.xlu0 %v2942, 112
        %v2997 = vpop.permute.xlu0 %2996
        %v2999 = vsel %vm513, %v2862, %v2945
        %v3000 = vsel %vm515, %v2999, %v2949
        %v3001 = vsel %vm517, %v3000, %v2953
        %v3002 = vsel %vm519, %v3001, %v2957
        %v3003 = vsel %vm521, %v3002, %v2961
        %v3004 = vsel %vm523, %v3003, %v2965
        %v3005 = vsel %vm525, %v3004, %v2969
        %v3006 = vsel %vm513, %v2918, %v2973
        %v3007 = vsel %vm515, %v3006, %v2977
        %v3008 = vsel %vm517, %v3007, %v2981
        %v3009 = vsel %vm519, %v3008, %v2985
        %v3010 = vsel %vm521, %v3009, %v2989
        %v3011 = vsel %vm523, %v3010, %v2993
        %v3012 = vsel %vm525, %v3011, %v2997
        %v3013 = vpack.c.bf16 %v3012, %v3005
        %v3015 = vrot.slane %v3013, 6
        %3017 = vst [vmem:[#allocation3 + $0x28] sm:$0xcc] %v3015
        %v3018 = vld [vmem:[#allocation2 + $0x2] sm:$0xff]
        %v3019 = vld [vmem:[#allocation2 + $0xa] sm:$0xff]
        %v3020 = vld [vmem:[#allocation2 + $0x1a] sm:$0xff]
        %v3021 = vld [vmem:[#allocation2 + $0x22] sm:$0xff]
        %v3022 = vld [vmem:[#allocation2 + $0x32] sm:$0xff]
        %v3023 = vld [vmem:[#allocation2 + $0x3a] sm:$0xff]
        %v3024 = vld [vmem:[#allocation2 + $0x4a] sm:$0xff]
        %v3025 = vld [vmem:[#allocation2 + $0x52] sm:$0xff]
        %3034 = vrot.lane.b32.xlu0 %v3018, 122
        %v3035 = vpop.permute.xlu0 %3034
        %3036 = vrot.lane.b32.xlu0 %v3019, 122
        %v3037 = vpop.permute.xlu0 %3036
        %3038 = vrot.lane.b32.xlu0 %v3020, 122
        %v3039 = vpop.permute.xlu0 %3038
        %3040 = vrot.lane.b32.xlu0 %v3021, 122
        %v3041 = vpop.permute.xlu0 %3040
        %3042 = vrot.lane.b32.xlu0 %v3022, 122
        %v3043 = vpop.permute.xlu0 %3042
        %3044 = vrot.lane.b32.xlu0 %v3023, 122
        %v3045 = vpop.permute.xlu0 %3044
        %3046 = vrot.lane.b32.xlu0 %v3024, 122
        %v3047 = vpop.permute.xlu0 %3046
        %3048 = vrot.lane.b32.xlu0 %v3025, 122
        %v3049 = vpop.permute.xlu0 %3048
        %v3058 = vrot.slane %v3043, 4
        %v3059 = vsel %vm345, %v3058, %v3035
        %v3060 = vrot.slane %v3035, 4
        %v3061 = vsel %vm345, %v3043, %v3060
        %v3063 = vunpack.c.l.s4 1983009808
        %v3064 = vunpack.c.0.s8 %v3063
        %v3065 = vperm.slane %v3059, %v3064
        %v3067 = vunpack.c.l.s4 1983009808
        %v3068 = vunpack.c.0.s8 %v3067
        %v3069 = vperm.slane %v3061, %v3068
        %v3070 = vrot.slane %v3047, 4
        %v3071 = vsel %vm345, %v3070, %v3039
        %v3072 = vrot.slane %v3039, 4
        %v3073 = vsel %vm345, %v3047, %v3072
        %v3075 = vunpack.c.l.s4 1983009808
        %v3076 = vunpack.c.0.s8 %v3075
        %v3077 = vperm.slane %v3071, %v3076
        %v3079 = vunpack.c.l.s4 1983009808
        %v3080 = vunpack.c.0.s8 %v3079
        %v3081 = vperm.slane %v3073, %v3080
        %v3082 = vrot.slane %v3077, 4
        %v3083 = vsel %vm345, %v3082, %v3065
        %v3084 = vrot.slane %v3065, 4
        %v3085 = vsel %vm345, %v3077, %v3084
        %v3087 = vunpack.c.l.s4 1934713408
        %v3088 = vunpack.c.0.s8 %v3087
        %v3089 = vperm.slane %v3083, %v3088
        %v3091 = vunpack.c.l.s4 1934713408
        %v3092 = vunpack.c.0.s8 %v3091
        %v3093 = vperm.slane %v3085, %v3092
        %v3094 = vrot.slane %v3081, 4
        %v3095 = vsel %vm345, %v3094, %v3069
        %v3096 = vrot.slane %v3069, 4
        %v3097 = vsel %vm345, %v3081, %v3096
        %v3099 = vunpack.c.l.s4 1934713408
        %v3100 = vunpack.c.0.s8 %v3099
        %v3101 = vperm.slane %v3095, %v3100
        %v3103 = vunpack.c.l.s4 1934713408
        %v3104 = vunpack.c.0.s8 %v3103
        %v3105 = vperm.slane %v3097, %v3104
        %v3106 = vrot.slane %v3089, 4
        %v3107 = vsel %vm345, 0.0, %v3106
        %v3108 = vrot.slane %v3093, 4
        %v3109 = vsel %vm345, 0.0, %v3108
        %v3110 = vrot.slane %v3101, 4
        %v3111 = vsel %vm345, 0.0, %v3110
        %v3112 = vrot.slane %v3105, 4
        %v3113 = vsel %vm345, 0.0, %v3112
        %v3114 = vrot.slane %v3045, 4
        %v3115 = vsel %vm345, %v3114, %v3037
        %v3116 = vrot.slane %v3037, 4
        %v3117 = vsel %vm345, %v3045, %v3116
        %v3119 = vunpack.c.l.s4 1983009808
        %v3120 = vunpack.c.0.s8 %v3119
        %v3121 = vperm.slane %v3115, %v3120
        %v3123 = vunpack.c.l.s4 1983009808
        %v3124 = vunpack.c.0.s8 %v3123
        %v3125 = vperm.slane %v3117, %v3124
        %v3126 = vrot.slane %v3049, 4
        %v3127 = vsel %vm345, %v3126, %v3041
        %v3128 = vrot.slane %v3041, 4
        %v3129 = vsel %vm345, %v3049, %v3128
        %v3131 = vunpack.c.l.s4 1983009808
        %v3132 = vunpack.c.0.s8 %v3131
        %v3133 = vperm.slane %v3127, %v3132
        %v3135 = vunpack.c.l.s4 1983009808
        %v3136 = vunpack.c.0.s8 %v3135
        %v3137 = vperm.slane %v3129, %v3136
        %v3138 = vrot.slane %v3133, 4
        %v3139 = vsel %vm345, %v3138, %v3121
        %v3140 = vrot.slane %v3121, 4
        %v3141 = vsel %vm345, %v3133, %v3140
        %v3143 = vunpack.c.l.s4 1934713408
        %v3144 = vunpack.c.0.s8 %v3143
        %v3145 = vperm.slane %v3139, %v3144
        %v3147 = vunpack.c.l.s4 1934713408
        %v3148 = vunpack.c.0.s8 %v3147
        %v3149 = vperm.slane %v3141, %v3148
        %v3150 = vrot.slane %v3137, 4
        %v3151 = vsel %vm345, %v3150, %v3125
        %v3152 = vrot.slane %v3125, 4
        %v3153 = vsel %vm345, %v3137, %v3152
        %v3155 = vunpack.c.l.s4 1934713408
        %v3156 = vunpack.c.0.s8 %v3155
        %v3157 = vperm.slane %v3151, %v3156
        %v3159 = vunpack.c.l.s4 1934713408
        %v3160 = vunpack.c.0.s8 %v3159
        %v3161 = vperm.slane %v3153, %v3160
        %v3162 = vrot.slane %v3145, 4
        %v3163 = vsel %vm345, 0.0, %v3162
        %v3164 = vrot.slane %v3149, 4
        %v3165 = vsel %vm345, 0.0, %v3164
        %v3166 = vrot.slane %v3157, 4
        %v3167 = vsel %vm345, 0.0, %v3166
        %v3168 = vrot.slane %v3161, 4
        %v3169 = vsel %vm345, 0.0, %v3168
        %3171 = vrot.lane.b32.xlu0 %v3107, 16
        %v3172 = vpop.permute.xlu0 %3171
        %3175 = vrot.lane.b32.xlu0 %v3093, 32
        %v3176 = vpop.permute.xlu0 %3175
        %3179 = vrot.lane.b32.xlu0 %v3109, 48
        %v3180 = vpop.permute.xlu0 %3179
        %3183 = vrot.lane.b32.xlu0 %v3101, 64
        %v3184 = vpop.permute.xlu0 %3183
        %3187 = vrot.lane.b32.xlu0 %v3111, 80
        %v3188 = vpop.permute.xlu0 %3187
        %3191 = vrot.lane.b32.xlu0 %v3105, 96
        %v3192 = vpop.permute.xlu0 %3191
        %3195 = vrot.lane.b32.xlu0 %v3113, 112
        %v3196 = vpop.permute.xlu0 %3195
        %3199 = vrot.lane.b32.xlu0 %v3163, 16
        %v3200 = vpop.permute.xlu0 %3199
        %3203 = vrot.lane.b32.xlu0 %v3149, 32
        %v3204 = vpop.permute.xlu0 %3203
        %3207 = vrot.lane.b32.xlu0 %v3165, 48
        %v3208 = vpop.permute.xlu0 %3207
        %3211 = vrot.lane.b32.xlu0 %v3157, 64
        %v3212 = vpop.permute.xlu0 %3211
        %3215 = vrot.lane.b32.xlu0 %v3167, 80
        %v3216 = vpop.permute.xlu0 %3215
        %3219 = vrot.lane.b32.xlu0 %v3161, 96
        %v3220 = vpop.permute.xlu0 %3219
        %3223 = vrot.lane.b32.xlu0 %v3169, 112
        %v3224 = vpop.permute.xlu0 %3223
        %v3226 = vsel %vm513, %v3089, %v3172
        %v3227 = vsel %vm515, %v3226, %v3176
        %v3228 = vsel %vm517, %v3227, %v3180
        %v3229 = vsel %vm519, %v3228, %v3184
        %v3230 = vsel %vm521, %v3229, %v3188
        %v3231 = vsel %vm523, %v3230, %v3192
        %v3232 = vsel %vm525, %v3231, %v3196
        %v3233 = vsel %vm513, %v3145, %v3200
        %v3234 = vsel %vm515, %v3233, %v3204
        %v3235 = vsel %vm517, %v3234, %v3208
        %v3236 = vsel %vm519, %v3235, %v3212
        %v3237 = vsel %vm521, %v3236, %v3216
        %v3238 = vsel %vm523, %v3237, %v3220
        %v3239 = vsel %vm525, %v3238, %v3224
        %v3240 = vpack.c.bf16 %v3239, %v3232
        %3241 = vst [vmem:[#allocation3 + $0x30] sm:$0x33] %v3240
        %v3242 = vld [vmem:[#allocation2 + $0x4] sm:$0xff]
        %v3243 = vld [vmem:[#allocation2 + $0xc] sm:$0xff]
        %v3244 = vld [vmem:[#allocation2 + $0x1c] sm:$0xff]
        %v3245 = vld [vmem:[#allocation2 + $0x24] sm:$0xff]
        %v3246 = vld [vmem:[#allocation2 + $0x34] sm:$0xff]
        %v3247 = vld [vmem:[#allocation2 + $0x3c] sm:$0xff]
        %v3248 = vld [vmem:[#allocation2 + $0x4c] sm:$0xff]
        %v3249 = vld [vmem:[#allocation2 + $0x54] sm:$0xff]
        %3258 = vrot.lane.b32.xlu0 %v3242, 126
        %v3259 = vpop.permute.xlu0 %3258
        %3260 = vrot.lane.b32.xlu0 %v3243, 126
        %v3261 = vpop.permute.xlu0 %3260
        %3262 = vrot.lane.b32.xlu0 %v3244, 126
        %v3263 = vpop.permute.xlu0 %3262
        %3264 = vrot.lane.b32.xlu0 %v3245, 126
        %v3265 = vpop.permute.xlu0 %3264
        %3266 = vrot.lane.b32.xlu0 %v3246, 126
        %v3267 = vpop.permute.xlu0 %3266
        %3268 = vrot.lane.b32.xlu0 %v3247, 126
        %v3269 = vpop.permute.xlu0 %3268
        %3270 = vrot.lane.b32.xlu0 %v3248, 126
        %v3271 = vpop.permute.xlu0 %3270
        %3272 = vrot.lane.b32.xlu0 %v3249, 126
        %v3273 = vpop.permute.xlu0 %3272
        %v3282 = vrot.slane %v3267, 4
        %v3283 = vsel %vm345, %v3282, %v3259
        %v3284 = vrot.slane %v3259, 4
        %v3285 = vsel %vm345, %v3267, %v3284
        %v3287 = vunpack.c.l.s4 1983009808
        %v3288 = vunpack.c.0.s8 %v3287
        %v3289 = vperm.slane %v3283, %v3288
        %v3291 = vunpack.c.l.s4 1983009808
        %v3292 = vunpack.c.0.s8 %v3291
        %v3293 = vperm.slane %v3285, %v3292
        %v3294 = vrot.slane %v3271, 4
        %v3295 = vsel %vm345, %v3294, %v3263
        %v3296 = vrot.slane %v3263, 4
        %v3297 = vsel %vm345, %v3271, %v3296
        %v3299 = vunpack.c.l.s4 1983009808
        %v3300 = vunpack.c.0.s8 %v3299
        %v3301 = vperm.slane %v3295, %v3300
        %v3303 = vunpack.c.l.s4 1983009808
        %v3304 = vunpack.c.0.s8 %v3303
        %v3305 = vperm.slane %v3297, %v3304
        %v3306 = vrot.slane %v3301, 4
        %v3307 = vsel %vm345, %v3306, %v3289
        %v3308 = vrot.slane %v3289, 4
        %v3309 = vsel %vm345, %v3301, %v3308
        %v3311 = vunpack.c.l.s4 1934713408
        %v3312 = vunpack.c.0.s8 %v3311
        %v3313 = vperm.slane %v3307, %v3312
        %v3315 = vunpack.c.l.s4 1934713408
        %v3316 = vunpack.c.0.s8 %v3315
        %v3317 = vperm.slane %v3309, %v3316
        %v3318 = vrot.slane %v3305, 4
        %v3319 = vsel %vm345, %v3318, %v3293
        %v3320 = vrot.slane %v3293, 4
        %v3321 = vsel %vm345, %v3305, %v3320
        %v3323 = vunpack.c.l.s4 1934713408
        %v3324 = vunpack.c.0.s8 %v3323
        %v3325 = vperm.slane %v3319, %v3324
        %v3327 = vunpack.c.l.s4 1934713408
        %v3328 = vunpack.c.0.s8 %v3327
        %v3329 = vperm.slane %v3321, %v3328
        %v3330 = vrot.slane %v3313, 4
        %v3331 = vsel %vm345, 0.0, %v3330
        %v3332 = vrot.slane %v3317, 4
        %v3333 = vsel %vm345, 0.0, %v3332
        %v3334 = vrot.slane %v3325, 4
        %v3335 = vsel %vm345, 0.0, %v3334
        %v3336 = vrot.slane %v3329, 4
        %v3337 = vsel %vm345, 0.0, %v3336
        %v3338 = vrot.slane %v3269, 4
        %v3339 = vsel %vm345, %v3338, %v3261
        %v3340 = vrot.slane %v3261, 4
        %v3341 = vsel %vm345, %v3269, %v3340
        %v3343 = vunpack.c.l.s4 1983009808
        %v3344 = vunpack.c.0.s8 %v3343
        %v3345 = vperm.slane %v3339, %v3344
        %v3347 = vunpack.c.l.s4 1983009808
        %v3348 = vunpack.c.0.s8 %v3347
        %v3349 = vperm.slane %v3341, %v3348
        %v3350 = vrot.slane %v3273, 4
        %v3351 = vsel %vm345, %v3350, %v3265
        %v3352 = vrot.slane %v3265, 4
        %v3353 = vsel %vm345, %v3273, %v3352
        %v3355 = vunpack.c.l.s4 1983009808
        %v3356 = vunpack.c.0.s8 %v3355
        %v3357 = vperm.slane %v3351, %v3356
        %v3359 = vunpack.c.l.s4 1983009808
        %v3360 = vunpack.c.0.s8 %v3359
        %v3361 = vperm.slane %v3353, %v3360
        %v3362 = vrot.slane %v3357, 4
        %v3363 = vsel %vm345, %v3362, %v3345
        %v3364 = vrot.slane %v3345, 4
        %v3365 = vsel %vm345, %v3357, %v3364
        %v3367 = vunpack.c.l.s4 1934713408
        %v3368 = vunpack.c.0.s8 %v3367
        %v3369 = vperm.slane %v3363, %v3368
        %v3371 = vunpack.c.l.s4 1934713408
        %v3372 = vunpack.c.0.s8 %v3371
        %v3373 = vperm.slane %v3365, %v3372
        %v3374 = vrot.slane %v3361, 4
        %v3375 = vsel %vm345, %v3374, %v3349
        %v3376 = vrot.slane %v3349, 4
        %v3377 = vsel %vm345, %v3361, %v3376
        %v3379 = vunpack.c.l.s4 1934713408
        %v3380 = vunpack.c.0.s8 %v3379
        %v3381 = vperm.slane %v3375, %v3380
        %v3383 = vunpack.c.l.s4 1934713408
        %v3384 = vunpack.c.0.s8 %v3383
        %v3385 = vperm.slane %v3377, %v3384
        %v3386 = vrot.slane %v3369, 4
        %v3387 = vsel %vm345, 0.0, %v3386
        %v3388 = vrot.slane %v3373, 4
        %v3389 = vsel %vm345, 0.0, %v3388
        %v3390 = vrot.slane %v3381, 4
        %v3391 = vsel %vm345, 0.0, %v3390
        %v3392 = vrot.slane %v3385, 4
        %v3393 = vsel %vm345, 0.0, %v3392
        %3395 = vrot.lane.b32.xlu0 %v3331, 16
        %v3396 = vpop.permute.xlu0 %3395
        %3399 = vrot.lane.b32.xlu0 %v3317, 32
        %v3400 = vpop.permute.xlu0 %3399
        %3403 = vrot.lane.b32.xlu0 %v3333, 48
        %v3404 = vpop.permute.xlu0 %3403
        %3407 = vrot.lane.b32.xlu0 %v3325, 64
        %v3408 = vpop.permute.xlu0 %3407
        %3411 = vrot.lane.b32.xlu0 %v3335, 80
        %v3412 = vpop.permute.xlu0 %3411
        %3415 = vrot.lane.b32.xlu0 %v3329, 96
        %v3416 = vpop.permute.xlu0 %3415
        %3419 = vrot.lane.b32.xlu0 %v3337, 112
        %v3420 = vpop.permute.xlu0 %3419
        %3423 = vrot.lane.b32.xlu0 %v3387, 16
        %v3424 = vpop.permute.xlu0 %3423
        %3427 = vrot.lane.b32.xlu0 %v3373, 32
        %v3428 = vpop.permute.xlu0 %3427
        %3431 = vrot.lane.b32.xlu0 %v3389, 48
        %v3432 = vpop.permute.xlu0 %3431
        %3435 = vrot.lane.b32.xlu0 %v3381, 64
        %v3436 = vpop.permute.xlu0 %3435
        %3439 = vrot.lane.b32.xlu0 %v3391, 80
        %v3440 = vpop.permute.xlu0 %3439
        %3443 = vrot.lane.b32.xlu0 %v3385, 96
        %v3444 = vpop.permute.xlu0 %3443
        %3447 = vrot.lane.b32.xlu0 %v3393, 112
        %v3448 = vpop.permute.xlu0 %3447
        %v3450 = vsel %vm513, %v3313, %v3396
        %v3451 = vsel %vm515, %v3450, %v3400
        %v3452 = vsel %vm517, %v3451, %v3404
        %v3453 = vsel %vm519, %v3452, %v3408
        %v3454 = vsel %vm521, %v3453, %v3412
        %v3455 = vsel %vm523, %v3454, %v3416
        %v3456 = vsel %vm525, %v3455, %v3420
        %v3457 = vsel %vm513, %v3369, %v3424
        %v3458 = vsel %vm515, %v3457, %v3428
        %v3459 = vsel %vm517, %v3458, %v3432
        %v3460 = vsel %vm519, %v3459, %v3436
        %v3461 = vsel %vm521, %v3460, %v3440
        %v3462 = vsel %vm523, %v3461, %v3444
        %v3463 = vsel %vm525, %v3462, %v3448
        %v3464 = vpack.c.bf16 %v3463, %v3456
        %v3466 = vrot.slane %v3464, 6
        %3468 = vst [vmem:[#allocation3 + $0x30] sm:$0xcc] %v3466
        %v3469 = vld [vmem:[#allocation2 + $0x4] sm:$0xff]
        %v3470 = vld [vmem:[#allocation2 + $0xc] sm:$0xff]
        %v3471 = vld [vmem:[#allocation2 + $0x1c] sm:$0xff]
        %v3472 = vld [vmem:[#allocation2 + $0x24] sm:$0xff]
        %v3473 = vld [vmem:[#allocation2 + $0x34] sm:$0xff]
        %v3474 = vld [vmem:[#allocation2 + $0x3c] sm:$0xff]
        %v3475 = vld [vmem:[#allocation2 + $0x4c] sm:$0xff]
        %v3476 = vld [vmem:[#allocation2 + $0x54] sm:$0xff]
        %3485 = vrot.lane.b32.xlu0 %v3469, 124
        %v3486 = vpop.permute.xlu0 %3485
        %3487 = vrot.lane.b32.xlu0 %v3470, 124
        %v3488 = vpop.permute.xlu0 %3487
        %3489 = vrot.lane.b32.xlu0 %v3471, 124
        %v3490 = vpop.permute.xlu0 %3489
        %3491 = vrot.lane.b32.xlu0 %v3472, 124
        %v3492 = vpop.permute.xlu0 %3491
        %3493 = vrot.lane.b32.xlu0 %v3473, 124
        %v3494 = vpop.permute.xlu0 %3493
        %3495 = vrot.lane.b32.xlu0 %v3474, 124
        %v3496 = vpop.permute.xlu0 %3495
        %3497 = vrot.lane.b32.xlu0 %v3475, 124
        %v3498 = vpop.permute.xlu0 %3497
        %3499 = vrot.lane.b32.xlu0 %v3476, 124
        %v3500 = vpop.permute.xlu0 %3499
        %v3509 = vrot.slane %v3494, 4
        %v3510 = vsel %vm345, %v3509, %v3486
        %v3511 = vrot.slane %v3486, 4
        %v3512 = vsel %vm345, %v3494, %v3511
        %v3514 = vunpack.c.l.s4 1983009808
        %v3515 = vunpack.c.0.s8 %v3514
        %v3516 = vperm.slane %v3510, %v3515
        %v3518 = vunpack.c.l.s4 1983009808
        %v3519 = vunpack.c.0.s8 %v3518
        %v3520 = vperm.slane %v3512, %v3519
        %v3521 = vrot.slane %v3498, 4
        %v3522 = vsel %vm345, %v3521, %v3490
        %v3523 = vrot.slane %v3490, 4
        %v3524 = vsel %vm345, %v3498, %v3523
        %v3526 = vunpack.c.l.s4 1983009808
        %v3527 = vunpack.c.0.s8 %v3526
        %v3528 = vperm.slane %v3522, %v3527
        %v3530 = vunpack.c.l.s4 1983009808
        %v3531 = vunpack.c.0.s8 %v3530
        %v3532 = vperm.slane %v3524, %v3531
        %v3533 = vrot.slane %v3528, 4
        %v3534 = vsel %vm345, %v3533, %v3516
        %v3535 = vrot.slane %v3516, 4
        %v3536 = vsel %vm345, %v3528, %v3535
        %v3538 = vunpack.c.l.s4 1934713408
        %v3539 = vunpack.c.0.s8 %v3538
        %v3540 = vperm.slane %v3534, %v3539
        %v3542 = vunpack.c.l.s4 1934713408
        %v3543 = vunpack.c.0.s8 %v3542
        %v3544 = vperm.slane %v3536, %v3543
        %v3545 = vrot.slane %v3532, 4
        %v3546 = vsel %vm345, %v3545, %v3520
        %v3547 = vrot.slane %v3520, 4
        %v3548 = vsel %vm345, %v3532, %v3547
        %v3550 = vunpack.c.l.s4 1934713408
        %v3551 = vunpack.c.0.s8 %v3550
        %v3552 = vperm.slane %v3546, %v3551
        %v3554 = vunpack.c.l.s4 1934713408
        %v3555 = vunpack.c.0.s8 %v3554
        %v3556 = vperm.slane %v3548, %v3555
        %v3557 = vrot.slane %v3540, 4
        %v3558 = vsel %vm345, 0.0, %v3557
        %v3559 = vrot.slane %v3544, 4
        %v3560 = vsel %vm345, 0.0, %v3559
        %v3561 = vrot.slane %v3552, 4
        %v3562 = vsel %vm345, 0.0, %v3561
        %v3563 = vrot.slane %v3556, 4
        %v3564 = vsel %vm345, 0.0, %v3563
        %v3565 = vrot.slane %v3496, 4
        %v3566 = vsel %vm345, %v3565, %v3488
        %v3567 = vrot.slane %v3488, 4
        %v3568 = vsel %vm345, %v3496, %v3567
        %v3570 = vunpack.c.l.s4 1983009808
        %v3571 = vunpack.c.0.s8 %v3570
        %v3572 = vperm.slane %v3566, %v3571
        %v3574 = vunpack.c.l.s4 1983009808
        %v3575 = vunpack.c.0.s8 %v3574
        %v3576 = vperm.slane %v3568, %v3575
        %v3577 = vrot.slane %v3500, 4
        %v3578 = vsel %vm345, %v3577, %v3492
        %v3579 = vrot.slane %v3492, 4
        %v3580 = vsel %vm345, %v3500, %v3579
        %v3582 = vunpack.c.l.s4 1983009808
        %v3583 = vunpack.c.0.s8 %v3582
        %v3584 = vperm.slane %v3578, %v3583
        %v3586 = vunpack.c.l.s4 1983009808
        %v3587 = vunpack.c.0.s8 %v3586
        %v3588 = vperm.slane %v3580, %v3587
        %v3589 = vrot.slane %v3584, 4
        %v3590 = vsel %vm345, %v3589, %v3572
        %v3591 = vrot.slane %v3572, 4
        %v3592 = vsel %vm345, %v3584, %v3591
        %v3594 = vunpack.c.l.s4 1934713408
        %v3595 = vunpack.c.0.s8 %v3594
        %v3596 = vperm.slane %v3590, %v3595
        %v3598 = vunpack.c.l.s4 1934713408
        %v3599 = vunpack.c.0.s8 %v3598
        %v3600 = vperm.slane %v3592, %v3599
        %v3601 = vrot.slane %v3588, 4
        %v3602 = vsel %vm345, %v3601, %v3576
        %v3603 = vrot.slane %v3576, 4
        %v3604 = vsel %vm345, %v3588, %v3603
        %v3606 = vunpack.c.l.s4 1934713408
        %v3607 = vunpack.c.0.s8 %v3606
        %v3608 = vperm.slane %v3602, %v3607
        %v3610 = vunpack.c.l.s4 1934713408
        %v3611 = vunpack.c.0.s8 %v3610
        %v3612 = vperm.slane %v3604, %v3611
        %v3613 = vrot.slane %v3596, 4
        %v3614 = vsel %vm345, 0.0, %v3613
        %v3615 = vrot.slane %v3600, 4
        %v3616 = vsel %vm345, 0.0, %v3615
        %v3617 = vrot.slane %v3608, 4
        %v3618 = vsel %vm345, 0.0, %v3617
        %v3619 = vrot.slane %v3612, 4
        %v3620 = vsel %vm345, 0.0, %v3619
        %3622 = vrot.lane.b32.xlu0 %v3558, 16
        %v3623 = vpop.permute.xlu0 %3622
        %3626 = vrot.lane.b32.xlu0 %v3544, 32
        %v3627 = vpop.permute.xlu0 %3626
        %3630 = vrot.lane.b32.xlu0 %v3560, 48
        %v3631 = vpop.permute.xlu0 %3630
        %3634 = vrot.lane.b32.xlu0 %v3552, 64
        %v3635 = vpop.permute.xlu0 %3634
        %3638 = vrot.lane.b32.xlu0 %v3562, 80
        %v3639 = vpop.permute.xlu0 %3638
        %3642 = vrot.lane.b32.xlu0 %v3556, 96
        %v3643 = vpop.permute.xlu0 %3642
        %3646 = vrot.lane.b32.xlu0 %v3564, 112
        %v3647 = vpop.permute.xlu0 %3646
        %3650 = vrot.lane.b32.xlu0 %v3614, 16
        %v3651 = vpop.permute.xlu0 %3650
        %3654 = vrot.lane.b32.xlu0 %v3600, 32
        %v3655 = vpop.permute.xlu0 %3654
        %3658 = vrot.lane.b32.xlu0 %v3616, 48
        %v3659 = vpop.permute.xlu0 %3658
        %3662 = vrot.lane.b32.xlu0 %v3608, 64
        %v3663 = vpop.permute.xlu0 %3662
        %3666 = vrot.lane.b32.xlu0 %v3618, 80
        %v3667 = vpop.permute.xlu0 %3666
        %3670 = vrot.lane.b32.xlu0 %v3612, 96
        %v3671 = vpop.permute.xlu0 %3670
        %3674 = vrot.lane.b32.xlu0 %v3620, 112
        %v3675 = vpop.permute.xlu0 %3674
        %v3677 = vsel %vm513, %v3540, %v3623
        %v3678 = vsel %vm515, %v3677, %v3627
        %v3679 = vsel %vm517, %v3678, %v3631
        %v3680 = vsel %vm519, %v3679, %v3635
        %v3681 = vsel %vm521, %v3680, %v3639
        %v3682 = vsel %vm523, %v3681, %v3643
        %v3683 = vsel %vm525, %v3682, %v3647
        %v3684 = vsel %vm513, %v3596, %v3651
        %v3685 = vsel %vm515, %v3684, %v3655
        %v3686 = vsel %vm517, %v3685, %v3659
        %v3687 = vsel %vm519, %v3686, %v3663
        %v3688 = vsel %vm521, %v3687, %v3667
        %v3689 = vsel %vm523, %v3688, %v3671
        %v3690 = vsel %vm525, %v3689, %v3675
        %v3691 = vpack.c.bf16 %v3690, %v3683
        %3692 = vst [vmem:[#allocation3 + $0x38] sm:$0x33] %v3691
        %v3693 = vld [vmem:[#allocation2 + $0x4] sm:$0xff]
        %v3694 = vld [vmem:[#allocation2 + $0xc] sm:$0xff]
        %v3695 = vld [vmem:[#allocation2 + $0x1c] sm:$0xff]
        %v3696 = vld [vmem:[#allocation2 + $0x24] sm:$0xff]
        %v3697 = vld [vmem:[#allocation2 + $0x34] sm:$0xff]
        %v3698 = vld [vmem:[#allocation2 + $0x3c] sm:$0xff]
        %v3699 = vld [vmem:[#allocation2 + $0x4c] sm:$0xff]
        %v3700 = vld [vmem:[#allocation2 + $0x54] sm:$0xff]
        %3709 = vrot.lane.b32.xlu0 %v3693, 122
        %v3710 = vpop.permute.xlu0 %3709
        %3711 = vrot.lane.b32.xlu0 %v3694, 122
        %v3712 = vpop.permute.xlu0 %3711
        %3713 = vrot.lane.b32.xlu0 %v3695, 122
        %v3714 = vpop.permute.xlu0 %3713
        %3715 = vrot.lane.b32.xlu0 %v3696, 122
        %v3716 = vpop.permute.xlu0 %3715
        %3717 = vrot.lane.b32.xlu0 %v3697, 122
        %v3718 = vpop.permute.xlu0 %3717
        %3719 = vrot.lane.b32.xlu0 %v3698, 122
        %v3720 = vpop.permute.xlu0 %3719
        %3721 = vrot.lane.b32.xlu0 %v3699, 122
        %v3722 = vpop.permute.xlu0 %3721
        %3723 = vrot.lane.b32.xlu0 %v3700, 122
        %v3724 = vpop.permute.xlu0 %3723
        %v3733 = vrot.slane %v3718, 4
        %v3734 = vsel %vm345, %v3733, %v3710
        %v3735 = vrot.slane %v3710, 4
        %v3736 = vsel %vm345, %v3718, %v3735
        %v3738 = vunpack.c.l.s4 1983009808
        %v3739 = vunpack.c.0.s8 %v3738
        %v3740 = vperm.slane %v3734, %v3739
        %v3742 = vunpack.c.l.s4 1983009808
        %v3743 = vunpack.c.0.s8 %v3742
        %v3744 = vperm.slane %v3736, %v3743
        %v3745 = vrot.slane %v3722, 4
        %v3746 = vsel %vm345, %v3745, %v3714
        %v3747 = vrot.slane %v3714, 4
        %v3748 = vsel %vm345, %v3722, %v3747
        %v3750 = vunpack.c.l.s4 1983009808
        %v3751 = vunpack.c.0.s8 %v3750
        %v3752 = vperm.slane %v3746, %v3751
        %v3754 = vunpack.c.l.s4 1983009808
        %v3755 = vunpack.c.0.s8 %v3754
        %v3756 = vperm.slane %v3748, %v3755
        %v3757 = vrot.slane %v3752, 4
        %v3758 = vsel %vm345, %v3757, %v3740
        %v3759 = vrot.slane %v3740, 4
        %v3760 = vsel %vm345, %v3752, %v3759
        %v3762 = vunpack.c.l.s4 1934713408
        %v3763 = vunpack.c.0.s8 %v3762
        %v3764 = vperm.slane %v3758, %v3763
        %v3766 = vunpack.c.l.s4 1934713408
        %v3767 = vunpack.c.0.s8 %v3766
        %v3768 = vperm.slane %v3760, %v3767
        %v3769 = vrot.slane %v3756, 4
        %v3770 = vsel %vm345, %v3769, %v3744
        %v3771 = vrot.slane %v3744, 4
        %v3772 = vsel %vm345, %v3756, %v3771
        %v3774 = vunpack.c.l.s4 1934713408
        %v3775 = vunpack.c.0.s8 %v3774
        %v3776 = vperm.slane %v3770, %v3775
        %v3778 = vunpack.c.l.s4 1934713408
        %v3779 = vunpack.c.0.s8 %v3778
        %v3780 = vperm.slane %v3772, %v3779
        %v3781 = vrot.slane %v3764, 4
        %v3782 = vsel %vm345, 0.0, %v3781
        %v3783 = vrot.slane %v3768, 4
        %v3784 = vsel %vm345, 0.0, %v3783
        %v3785 = vrot.slane %v3776, 4
        %v3786 = vsel %vm345, 0.0, %v3785
        %v3787 = vrot.slane %v3780, 4
        %v3788 = vsel %vm345, 0.0, %v3787
        %v3789 = vrot.slane %v3720, 4
        %v3790 = vsel %vm345, %v3789, %v3712
        %v3791 = vrot.slane %v3712, 4
        %v3792 = vsel %vm345, %v3720, %v3791
        %v3794 = vunpack.c.l.s4 1983009808
        %v3795 = vunpack.c.0.s8 %v3794
        %v3796 = vperm.slane %v3790, %v3795
        %v3798 = vunpack.c.l.s4 1983009808
        %v3799 = vunpack.c.0.s8 %v3798
        %v3800 = vperm.slane %v3792, %v3799
        %v3801 = vrot.slane %v3724, 4
        %v3802 = vsel %vm345, %v3801, %v3716
        %v3803 = vrot.slane %v3716, 4
        %v3804 = vsel %vm345, %v3724, %v3803
        %v3806 = vunpack.c.l.s4 1983009808
        %v3807 = vunpack.c.0.s8 %v3806
        %v3808 = vperm.slane %v3802, %v3807
        %v3810 = vunpack.c.l.s4 1983009808
        %v3811 = vunpack.c.0.s8 %v3810
        %v3812 = vperm.slane %v3804, %v3811
        %v3813 = vrot.slane %v3808, 4
        %v3814 = vsel %vm345, %v3813, %v3796
        %v3815 = vrot.slane %v3796, 4
        %v3816 = vsel %vm345, %v3808, %v3815
        %v3818 = vunpack.c.l.s4 1934713408
        %v3819 = vunpack.c.0.s8 %v3818
        %v3820 = vperm.slane %v3814, %v3819
        %v3822 = vunpack.c.l.s4 1934713408
        %v3823 = vunpack.c.0.s8 %v3822
        %v3824 = vperm.slane %v3816, %v3823
        %v3825 = vrot.slane %v3812, 4
        %v3826 = vsel %vm345, %v3825, %v3800
        %v3827 = vrot.slane %v3800, 4
        %v3828 = vsel %vm345, %v3812, %v3827
        %v3830 = vunpack.c.l.s4 1934713408
        %v3831 = vunpack.c.0.s8 %v3830
        %v3832 = vperm.slane %v3826, %v3831
        %v3834 = vunpack.c.l.s4 1934713408
        %v3835 = vunpack.c.0.s8 %v3834
        %v3836 = vperm.slane %v3828, %v3835
        %v3837 = vrot.slane %v3820, 4
        %v3838 = vsel %vm345, 0.0, %v3837
        %v3839 = vrot.slane %v3824, 4
        %v3840 = vsel %vm345, 0.0, %v3839
        %v3841 = vrot.slane %v3832, 4
        %v3842 = vsel %vm345, 0.0, %v3841
        %v3843 = vrot.slane %v3836, 4
        %v3844 = vsel %vm345, 0.0, %v3843
        %3846 = vrot.lane.b32.xlu0 %v3782, 16
        %v3847 = vpop.permute.xlu0 %3846
        %3850 = vrot.lane.b32.xlu0 %v3768, 32
        %v3851 = vpop.permute.xlu0 %3850
        %3854 = vrot.lane.b32.xlu0 %v3784, 48
        %v3855 = vpop.permute.xlu0 %3854
        %3858 = vrot.lane.b32.xlu0 %v3776, 64
        %v3859 = vpop.permute.xlu0 %3858
        %3862 = vrot.lane.b32.xlu0 %v3786, 80
        %v3863 = vpop.permute.xlu0 %3862
        %3866 = vrot.lane.b32.xlu0 %v3780, 96
        %v3867 = vpop.permute.xlu0 %3866
        %3870 = vrot.lane.b32.xlu0 %v3788, 112
        %v3871 = vpop.permute.xlu0 %3870
        %3874 = vrot.lane.b32.xlu0 %v3838, 16
        %v3875 = vpop.permute.xlu0 %3874
        %3878 = vrot.lane.b32.xlu0 %v3824, 32
        %v3879 = vpop.permute.xlu0 %3878
        %3882 = vrot.lane.b32.xlu0 %v3840, 48
        %v3883 = vpop.permute.xlu0 %3882
        %3886 = vrot.lane.b32.xlu0 %v3832, 64
        %v3887 = vpop.permute.xlu0 %3886
        %3890 = vrot.lane.b32.xlu0 %v3842, 80
        %v3891 = vpop.permute.xlu0 %3890
        %3894 = vrot.lane.b32.xlu0 %v3836, 96
        %v3895 = vpop.permute.xlu0 %3894
        %3898 = vrot.lane.b32.xlu0 %v3844, 112
        %v3899 = vpop.permute.xlu0 %3898
        %v3901 = vsel %vm513, %v3764, %v3847
        %v3902 = vsel %vm515, %v3901, %v3851
        %v3903 = vsel %vm517, %v3902, %v3855
        %v3904 = vsel %vm519, %v3903, %v3859
        %v3905 = vsel %vm521, %v3904, %v3863
        %v3906 = vsel %vm523, %v3905, %v3867
        %v3907 = vsel %vm525, %v3906, %v3871
        %v3908 = vsel %vm513, %v3820, %v3875
        %v3909 = vsel %vm515, %v3908, %v3879
        %v3910 = vsel %vm517, %v3909, %v3883
        %v3911 = vsel %vm519, %v3910, %v3887
        %v3912 = vsel %vm521, %v3911, %v3891
        %v3913 = vsel %vm523, %v3912, %v3895
        %v3914 = vsel %vm525, %v3913, %v3899
        %v3915 = vpack.c.bf16 %v3914, %v3907
        %v3917 = vrot.slane %v3915, 6
        %3919 = vst [vmem:[#allocation3 + $0x38] sm:$0xcc] %v3917
        %v3920 = vld [vmem:[#allocation2 + $0x6] sm:$0xff]
        %v3921 = vld [vmem:[#allocation2 + $0xe] sm:$0xff]
        %v3922 = vld [vmem:[#allocation2 + $0x1e] sm:$0xff]
        %v3923 = vld [vmem:[#allocation2 + $0x26] sm:$0xff]
        %v3924 = vld [vmem:[#allocation2 + $0x36] sm:$0xff]
        %v3925 = vld [vmem:[#allocation2 + $0x3e] sm:$0xff]
        %v3926 = vld [vmem:[#allocation2 + $0x4e] sm:$0xff]
        %v3927 = vld [vmem:[#allocation2 + $0x56] sm:$0xff]
        %3936 = vrot.lane.b32.xlu0 %v3920, 126
        %v3937 = vpop.permute.xlu0 %3936
        %3938 = vrot.lane.b32.xlu0 %v3921, 126
        %v3939 = vpop.permute.xlu0 %3938
        %3940 = vrot.lane.b32.xlu0 %v3922, 126
        %v3941 = vpop.permute.xlu0 %3940
        %3942 = vrot.lane.b32.xlu0 %v3923, 126
        %v3943 = vpop.permute.xlu0 %3942
        %3944 = vrot.lane.b32.xlu0 %v3924, 126
        %v3945 = vpop.permute.xlu0 %3944
        %3946 = vrot.lane.b32.xlu0 %v3925, 126
        %v3947 = vpop.permute.xlu0 %3946
        %3948 = vrot.lane.b32.xlu0 %v3926, 126
        %v3949 = vpop.permute.xlu0 %3948
        %3950 = vrot.lane.b32.xlu0 %v3927, 126
        %v3951 = vpop.permute.xlu0 %3950
        %v3960 = vrot.slane %v3945, 4
        %v3961 = vsel %vm345, %v3960, %v3937
        %v3962 = vrot.slane %v3937, 4
        %v3963 = vsel %vm345, %v3945, %v3962
        %v3965 = vunpack.c.l.s4 1983009808
        %v3966 = vunpack.c.0.s8 %v3965
        %v3967 = vperm.slane %v3961, %v3966
        %v3969 = vunpack.c.l.s4 1983009808
        %v3970 = vunpack.c.0.s8 %v3969
        %v3971 = vperm.slane %v3963, %v3970
        %v3972 = vrot.slane %v3949, 4
        %v3973 = vsel %vm345, %v3972, %v3941
        %v3974 = vrot.slane %v3941, 4
        %v3975 = vsel %vm345, %v3949, %v3974
        %v3977 = vunpack.c.l.s4 1983009808
        %v3978 = vunpack.c.0.s8 %v3977
        %v3979 = vperm.slane %v3973, %v3978
        %v3981 = vunpack.c.l.s4 1983009808
        %v3982 = vunpack.c.0.s8 %v3981
        %v3983 = vperm.slane %v3975, %v3982
        %v3984 = vrot.slane %v3979, 4
        %v3985 = vsel %vm345, %v3984, %v3967
        %v3986 = vrot.slane %v3967, 4
        %v3987 = vsel %vm345, %v3979, %v3986
        %v3989 = vunpack.c.l.s4 1934713408
        %v3990 = vunpack.c.0.s8 %v3989
        %v3991 = vperm.slane %v3985, %v3990
        %v3993 = vunpack.c.l.s4 1934713408
        %v3994 = vunpack.c.0.s8 %v3993
        %v3995 = vperm.slane %v3987, %v3994
        %v3996 = vrot.slane %v3983, 4
        %v3997 = vsel %vm345, %v3996, %v3971
        %v3998 = vrot.slane %v3971, 4
        %v3999 = vsel %vm345, %v3983, %v3998
        %v4001 = vunpack.c.l.s4 1934713408
        %v4002 = vunpack.c.0.s8 %v4001
        %v4003 = vperm.slane %v3997, %v4002
        %v4005 = vunpack.c.l.s4 1934713408
        %v4006 = vunpack.c.0.s8 %v4005
        %v4007 = vperm.slane %v3999, %v4006
        %v4008 = vrot.slane %v3991, 4
        %v4009 = vsel %vm345, 0.0, %v4008
        %v4010 = vrot.slane %v3995, 4
        %v4011 = vsel %vm345, 0.0, %v4010
        %v4012 = vrot.slane %v4003, 4
        %v4013 = vsel %vm345, 0.0, %v4012
        %v4014 = vrot.slane %v4007, 4
        %v4015 = vsel %vm345, 0.0, %v4014
        %v4016 = vrot.slane %v3947, 4
        %v4017 = vsel %vm345, %v4016, %v3939
        %v4018 = vrot.slane %v3939, 4
        %v4019 = vsel %vm345, %v3947, %v4018
        %v4021 = vunpack.c.l.s4 1983009808
        %v4022 = vunpack.c.0.s8 %v4021
        %v4023 = vperm.slane %v4017, %v4022
        %v4025 = vunpack.c.l.s4 1983009808
        %v4026 = vunpack.c.0.s8 %v4025
        %v4027 = vperm.slane %v4019, %v4026
        %v4028 = vrot.slane %v3951, 4
        %v4029 = vsel %vm345, %v4028, %v3943
        %v4030 = vrot.slane %v3943, 4
        %v4031 = vsel %vm345, %v3951, %v4030
        %v4033 = vunpack.c.l.s4 1983009808
        %v4034 = vunpack.c.0.s8 %v4033
        %v4035 = vperm.slane %v4029, %v4034
        %v4037 = vunpack.c.l.s4 1983009808
        %v4038 = vunpack.c.0.s8 %v4037
        %v4039 = vperm.slane %v4031, %v4038
        %v4040 = vrot.slane %v4035, 4
        %v4041 = vsel %vm345, %v4040, %v4023
        %v4042 = vrot.slane %v4023, 4
        %v4043 = vsel %vm345, %v4035, %v4042
        %v4045 = vunpack.c.l.s4 1934713408
        %v4046 = vunpack.c.0.s8 %v4045
        %v4047 = vperm.slane %v4041, %v4046
        %v4049 = vunpack.c.l.s4 1934713408
        %v4050 = vunpack.c.0.s8 %v4049
        %v4051 = vperm.slane %v4043, %v4050
        %v4052 = vrot.slane %v4039, 4
        %v4053 = vsel %vm345, %v4052, %v4027
        %v4054 = vrot.slane %v4027, 4
        %v4055 = vsel %vm345, %v4039, %v4054
        %v4057 = vunpack.c.l.s4 1934713408
        %v4058 = vunpack.c.0.s8 %v4057
        %v4059 = vperm.slane %v4053, %v4058
        %v4061 = vunpack.c.l.s4 1934713408
        %v4062 = vunpack.c.0.s8 %v4061
        %v4063 = vperm.slane %v4055, %v4062
        %v4064 = vrot.slane %v4047, 4
        %v4065 = vsel %vm345, 0.0, %v4064
        %v4066 = vrot.slane %v4051, 4
        %v4067 = vsel %vm345, 0.0, %v4066
        %v4068 = vrot.slane %v4059, 4
        %v4069 = vsel %vm345, 0.0, %v4068
        %v4070 = vrot.slane %v4063, 4
        %v4071 = vsel %vm345, 0.0, %v4070
        %4073 = vrot.lane.b32.xlu0 %v4009, 16
        %v4074 = vpop.permute.xlu0 %4073
        %4077 = vrot.lane.b32.xlu0 %v3995, 32
        %v4078 = vpop.permute.xlu0 %4077
        %4081 = vrot.lane.b32.xlu0 %v4011, 48
        %v4082 = vpop.permute.xlu0 %4081
        %4085 = vrot.lane.b32.xlu0 %v4003, 64
        %v4086 = vpop.permute.xlu0 %4085
        %4089 = vrot.lane.b32.xlu0 %v4013, 80
        %v4090 = vpop.permute.xlu0 %4089
        %4093 = vrot.lane.b32.xlu0 %v4007, 96
        %v4094 = vpop.permute.xlu0 %4093
        %4097 = vrot.lane.b32.xlu0 %v4015, 112
        %v4098 = vpop.permute.xlu0 %4097
        %4101 = vrot.lane.b32.xlu0 %v4065, 16
        %v4102 = vpop.permute.xlu0 %4101
        %4105 = vrot.lane.b32.xlu0 %v4051, 32
        %v4106 = vpop.permute.xlu0 %4105
        %4109 = vrot.lane.b32.xlu0 %v4067, 48
        %v4110 = vpop.permute.xlu0 %4109
        %4113 = vrot.lane.b32.xlu0 %v4059, 64
        %v4114 = vpop.permute.xlu0 %4113
        %4117 = vrot.lane.b32.xlu0 %v4069, 80
        %v4118 = vpop.permute.xlu0 %4117
        %4121 = vrot.lane.b32.xlu0 %v4063, 96
        %v4122 = vpop.permute.xlu0 %4121
        %4125 = vrot.lane.b32.xlu0 %v4071, 112
        %v4126 = vpop.permute.xlu0 %4125
        %v4128 = vsel %vm513, %v3991, %v4074
        %v4129 = vsel %vm515, %v4128, %v4078
        %v4130 = vsel %vm517, %v4129, %v4082
        %v4131 = vsel %vm519, %v4130, %v4086
        %v4132 = vsel %vm521, %v4131, %v4090
        %v4133 = vsel %vm523, %v4132, %v4094
        %v4134 = vsel %vm525, %v4133, %v4098
        %v4135 = vsel %vm513, %v4047, %v4102
        %v4136 = vsel %vm515, %v4135, %v4106
        %v4137 = vsel %vm517, %v4136, %v4110
        %v4138 = vsel %vm519, %v4137, %v4114
        %v4139 = vsel %vm521, %v4138, %v4118
        %v4140 = vsel %vm523, %v4139, %v4122
        %v4141 = vsel %vm525, %v4140, %v4126
        %v4142 = vpack.c.bf16 %v4141, %v4134
        %4143 = vst [vmem:[#allocation3 + $0x40] sm:$0x33] %v4142
        %v4144 = vld [vmem:[#allocation2 + $0x6] sm:$0xff]
        %v4145 = vld [vmem:[#allocation2 + $0xe] sm:$0xff]
        %v4146 = vld [vmem:[#allocation2 + $0x1e] sm:$0xff]
        %v4147 = vld [vmem:[#allocation2 + $0x26] sm:$0xff]
        %v4148 = vld [vmem:[#allocation2 + $0x36] sm:$0xff]
        %v4149 = vld [vmem:[#allocation2 + $0x3e] sm:$0xff]
        %v4150 = vld [vmem:[#allocation2 + $0x4e] sm:$0xff]
        %v4151 = vld [vmem:[#allocation2 + $0x56] sm:$0xff]
        %4160 = vrot.lane.b32.xlu0 %v4144, 124
        %v4161 = vpop.permute.xlu0 %4160
        %4162 = vrot.lane.b32.xlu0 %v4145, 124
        %v4163 = vpop.permute.xlu0 %4162
        %4164 = vrot.lane.b32.xlu0 %v4146, 124
        %v4165 = vpop.permute.xlu0 %4164
        %4166 = vrot.lane.b32.xlu0 %v4147, 124
        %v4167 = vpop.permute.xlu0 %4166
        %4168 = vrot.lane.b32.xlu0 %v4148, 124
        %v4169 = vpop.permute.xlu0 %4168
        %4170 = vrot.lane.b32.xlu0 %v4149, 124
        %v4171 = vpop.permute.xlu0 %4170
        %4172 = vrot.lane.b32.xlu0 %v4150, 124
        %v4173 = vpop.permute.xlu0 %4172
        %4174 = vrot.lane.b32.xlu0 %v4151, 124
        %v4175 = vpop.permute.xlu0 %4174
        %v4184 = vrot.slane %v4169, 4
        %v4185 = vsel %vm345, %v4184, %v4161
        %v4186 = vrot.slane %v4161, 4
        %v4187 = vsel %vm345, %v4169, %v4186
        %v4189 = vunpack.c.l.s4 1983009808
        %v4190 = vunpack.c.0.s8 %v4189
        %v4191 = vperm.slane %v4185, %v4190
        %v4193 = vunpack.c.l.s4 1983009808
        %v4194 = vunpack.c.0.s8 %v4193
        %v4195 = vperm.slane %v4187, %v4194
        %v4196 = vrot.slane %v4173, 4
        %v4197 = vsel %vm345, %v4196, %v4165
        %v4198 = vrot.slane %v4165, 4
        %v4199 = vsel %vm345, %v4173, %v4198
        %v4201 = vunpack.c.l.s4 1983009808
        %v4202 = vunpack.c.0.s8 %v4201
        %v4203 = vperm.slane %v4197, %v4202
        %v4205 = vunpack.c.l.s4 1983009808
        %v4206 = vunpack.c.0.s8 %v4205
        %v4207 = vperm.slane %v4199, %v4206
        %v4208 = vrot.slane %v4203, 4
        %v4209 = vsel %vm345, %v4208, %v4191
        %v4210 = vrot.slane %v4191, 4
        %v4211 = vsel %vm345, %v4203, %v4210
        %v4213 = vunpack.c.l.s4 1934713408
        %v4214 = vunpack.c.0.s8 %v4213
        %v4215 = vperm.slane %v4209, %v4214
        %v4217 = vunpack.c.l.s4 1934713408
        %v4218 = vunpack.c.0.s8 %v4217
        %v4219 = vperm.slane %v4211, %v4218
        %v4220 = vrot.slane %v4207, 4
        %v4221 = vsel %vm345, %v4220, %v4195
        %v4222 = vrot.slane %v4195, 4
        %v4223 = vsel %vm345, %v4207, %v4222
        %v4225 = vunpack.c.l.s4 1934713408
        %v4226 = vunpack.c.0.s8 %v4225
        %v4227 = vperm.slane %v4221, %v4226
        %v4229 = vunpack.c.l.s4 1934713408
        %v4230 = vunpack.c.0.s8 %v4229
        %v4231 = vperm.slane %v4223, %v4230
        %v4232 = vrot.slane %v4215, 4
        %v4233 = vsel %vm345, 0.0, %v4232
        %v4234 = vrot.slane %v4219, 4
        %v4235 = vsel %vm345, 0.0, %v4234
        %v4236 = vrot.slane %v4227, 4
        %v4237 = vsel %vm345, 0.0, %v4236
        %v4238 = vrot.slane %v4231, 4
        %v4239 = vsel %vm345, 0.0, %v4238
        %v4240 = vrot.slane %v4171, 4
        %v4241 = vsel %vm345, %v4240, %v4163
        %v4242 = vrot.slane %v4163, 4
        %v4243 = vsel %vm345, %v4171, %v4242
        %v4245 = vunpack.c.l.s4 1983009808
        %v4246 = vunpack.c.0.s8 %v4245
        %v4247 = vperm.slane %v4241, %v4246
        %v4249 = vunpack.c.l.s4 1983009808
        %v4250 = vunpack.c.0.s8 %v4249
        %v4251 = vperm.slane %v4243, %v4250
        %v4252 = vrot.slane %v4175, 4
        %v4253 = vsel %vm345, %v4252, %v4167
        %v4254 = vrot.slane %v4167, 4
        %v4255 = vsel %vm345, %v4175, %v4254
        %v4257 = vunpack.c.l.s4 1983009808
        %v4258 = vunpack.c.0.s8 %v4257
        %v4259 = vperm.slane %v4253, %v4258
        %v4261 = vunpack.c.l.s4 1983009808
        %v4262 = vunpack.c.0.s8 %v4261
        %v4263 = vperm.slane %v4255, %v4262
        %v4264 = vrot.slane %v4259, 4
        %v4265 = vsel %vm345, %v4264, %v4247
        %v4266 = vrot.slane %v4247, 4
        %v4267 = vsel %vm345, %v4259, %v4266
        %v4269 = vunpack.c.l.s4 1934713408
        %v4270 = vunpack.c.0.s8 %v4269
        %v4271 = vperm.slane %v4265, %v4270
        %v4273 = vunpack.c.l.s4 1934713408
        %v4274 = vunpack.c.0.s8 %v4273
        %v4275 = vperm.slane %v4267, %v4274
        %v4276 = vrot.slane %v4263, 4
        %v4277 = vsel %vm345, %v4276, %v4251
        %v4278 = vrot.slane %v4251, 4
        %v4279 = vsel %vm345, %v4263, %v4278
        %v4281 = vunpack.c.l.s4 1934713408
        %v4282 = vunpack.c.0.s8 %v4281
        %v4283 = vperm.slane %v4277, %v4282
        %v4285 = vunpack.c.l.s4 1934713408
        %v4286 = vunpack.c.0.s8 %v4285
        %v4287 = vperm.slane %v4279, %v4286
        %v4288 = vrot.slane %v4271, 4
        %v4289 = vsel %vm345, 0.0, %v4288
        %v4290 = vrot.slane %v4275, 4
        %v4291 = vsel %vm345, 0.0, %v4290
        %v4292 = vrot.slane %v4283, 4
        %v4293 = vsel %vm345, 0.0, %v4292
        %v4294 = vrot.slane %v4287, 4
        %v4295 = vsel %vm345, 0.0, %v4294
        %4297 = vrot.lane.b32.xlu0 %v4233, 16
        %v4298 = vpop.permute.xlu0 %4297
        %4301 = vrot.lane.b32.xlu0 %v4219, 32
        %v4302 = vpop.permute.xlu0 %4301
        %4305 = vrot.lane.b32.xlu0 %v4235, 48
        %v4306 = vpop.permute.xlu0 %4305
        %4309 = vrot.lane.b32.xlu0 %v4227, 64
        %v4310 = vpop.permute.xlu0 %4309
        %4313 = vrot.lane.b32.xlu0 %v4237, 80
        %v4314 = vpop.permute.xlu0 %4313
        %4317 = vrot.lane.b32.xlu0 %v4231, 96
        %v4318 = vpop.permute.xlu0 %4317
        %4321 = vrot.lane.b32.xlu0 %v4239, 112
        %v4322 = vpop.permute.xlu0 %4321
        %4325 = vrot.lane.b32.xlu0 %v4289, 16
        %v4326 = vpop.permute.xlu0 %4325
        %4329 = vrot.lane.b32.xlu0 %v4275, 32
        %v4330 = vpop.permute.xlu0 %4329
        %4333 = vrot.lane.b32.xlu0 %v4291, 48
        %v4334 = vpop.permute.xlu0 %4333
        %4337 = vrot.lane.b32.xlu0 %v4283, 64
        %v4338 = vpop.permute.xlu0 %4337
        %4341 = vrot.lane.b32.xlu0 %v4293, 80
        %v4342 = vpop.permute.xlu0 %4341
        %4345 = vrot.lane.b32.xlu0 %v4287, 96
        %v4346 = vpop.permute.xlu0 %4345
        %4349 = vrot.lane.b32.xlu0 %v4295, 112
        %v4350 = vpop.permute.xlu0 %4349
        %v4352 = vsel %vm513, %v4215, %v4298
        %v4353 = vsel %vm515, %v4352, %v4302
        %v4354 = vsel %vm517, %v4353, %v4306
        %v4355 = vsel %vm519, %v4354, %v4310
        %v4356 = vsel %vm521, %v4355, %v4314
        %v4357 = vsel %vm523, %v4356, %v4318
        %v4358 = vsel %vm525, %v4357, %v4322
        %v4359 = vsel %vm513, %v4271, %v4326
        %v4360 = vsel %vm515, %v4359, %v4330
        %v4361 = vsel %vm517, %v4360, %v4334
        %v4362 = vsel %vm519, %v4361, %v4338
        %v4363 = vsel %vm521, %v4362, %v4342
        %v4364 = vsel %vm523, %v4363, %v4346
        %v4365 = vsel %vm525, %v4364, %v4350
        %v4366 = vpack.c.bf16 %v4365, %v4358
        %v4368 = vrot.slane %v4366, 6
        %4370 = vst [vmem:[#allocation3 + $0x40] sm:$0xcc] %v4368
        %v4371 = vld [vmem:[#allocation2 + $0x6] sm:$0xff]
        %v4372 = vld [vmem:[#allocation2 + $0xe] sm:$0xff]
        %v4373 = vld [vmem:[#allocation2 + $0x1e] sm:$0xff]
        %v4374 = vld [vmem:[#allocation2 + $0x26] sm:$0xff]
        %v4375 = vld [vmem:[#allocation2 + $0x36] sm:$0xff]
        %v4376 = vld [vmem:[#allocation2 + $0x3e] sm:$0xff]
        %v4377 = vld [vmem:[#allocation2 + $0x4e] sm:$0xff]
        %v4378 = vld [vmem:[#allocation2 + $0x56] sm:$0xff]
        %4387 = vrot.lane.b32.xlu0 %v4371, 122
        %v4388 = vpop.permute.xlu0 %4387
        %4389 = vrot.lane.b32.xlu0 %v4372, 122
        %v4390 = vpop.permute.xlu0 %4389
        %4391 = vrot.lane.b32.xlu0 %v4373, 122
        %v4392 = vpop.permute.xlu0 %4391
        %4393 = vrot.lane.b32.xlu0 %v4374, 122
        %v4394 = vpop.permute.xlu0 %4393
        %4395 = vrot.lane.b32.xlu0 %v4375, 122
        %v4396 = vpop.permute.xlu0 %4395
        %4397 = vrot.lane.b32.xlu0 %v4376, 122
        %v4398 = vpop.permute.xlu0 %4397
        %4399 = vrot.lane.b32.xlu0 %v4377, 122
        %v4400 = vpop.permute.xlu0 %4399
        %4401 = vrot.lane.b32.xlu0 %v4378, 122
        %v4402 = vpop.permute.xlu0 %4401
        %v4411 = vrot.slane %v4396, 4
        %v4412 = vsel %vm345, %v4411, %v4388
        %v4413 = vrot.slane %v4388, 4
        %v4414 = vsel %vm345, %v4396, %v4413
        %v4416 = vunpack.c.l.s4 1983009808
        %v4417 = vunpack.c.0.s8 %v4416
        %v4418 = vperm.slane %v4412, %v4417
        %v4420 = vunpack.c.l.s4 1983009808
        %v4421 = vunpack.c.0.s8 %v4420
        %v4422 = vperm.slane %v4414, %v4421
        %v4423 = vrot.slane %v4400, 4
        %v4424 = vsel %vm345, %v4423, %v4392
        %v4425 = vrot.slane %v4392, 4
        %v4426 = vsel %vm345, %v4400, %v4425
        %v4428 = vunpack.c.l.s4 1983009808
        %v4429 = vunpack.c.0.s8 %v4428
        %v4430 = vperm.slane %v4424, %v4429
        %v4432 = vunpack.c.l.s4 1983009808
        %v4433 = vunpack.c.0.s8 %v4432
        %v4434 = vperm.slane %v4426, %v4433
        %v4435 = vrot.slane %v4430, 4
        %v4436 = vsel %vm345, %v4435, %v4418
        %v4437 = vrot.slane %v4418, 4
        %v4438 = vsel %vm345, %v4430, %v4437
        %v4440 = vunpack.c.l.s4 1934713408
        %v4441 = vunpack.c.0.s8 %v4440
        %v4442 = vperm.slane %v4436, %v4441
        %v4444 = vunpack.c.l.s4 1934713408
        %v4445 = vunpack.c.0.s8 %v4444
        %v4446 = vperm.slane %v4438, %v4445
        %v4447 = vrot.slane %v4434, 4
        %v4448 = vsel %vm345, %v4447, %v4422
        %v4449 = vrot.slane %v4422, 4
        %v4450 = vsel %vm345, %v4434, %v4449
        %v4452 = vunpack.c.l.s4 1934713408
        %v4453 = vunpack.c.0.s8 %v4452
        %v4454 = vperm.slane %v4448, %v4453
        %v4456 = vunpack.c.l.s4 1934713408
        %v4457 = vunpack.c.0.s8 %v4456
        %v4458 = vperm.slane %v4450, %v4457
        %v4459 = vrot.slane %v4442, 4
        %v4460 = vsel %vm345, 0.0, %v4459
        %v4461 = vrot.slane %v4446, 4
        %v4462 = vsel %vm345, 0.0, %v4461
        %v4463 = vrot.slane %v4454, 4
        %v4464 = vsel %vm345, 0.0, %v4463
        %v4465 = vrot.slane %v4458, 4
        %v4466 = vsel %vm345, 0.0, %v4465
        %v4467 = vrot.slane %v4398, 4
        %v4468 = vsel %vm345, %v4467, %v4390
        %v4469 = vrot.slane %v4390, 4
        %v4470 = vsel %vm345, %v4398, %v4469
        %v4472 = vunpack.c.l.s4 1983009808
        %v4473 = vunpack.c.0.s8 %v4472
        %v4474 = vperm.slane %v4468, %v4473
        %v4476 = vunpack.c.l.s4 1983009808
        %v4477 = vunpack.c.0.s8 %v4476
        %v4478 = vperm.slane %v4470, %v4477
        %v4479 = vrot.slane %v4402, 4
        %v4480 = vsel %vm345, %v4479, %v4394
        %v4481 = vrot.slane %v4394, 4
        %v4482 = vsel %vm345, %v4402, %v4481
        %v4484 = vunpack.c.l.s4 1983009808
        %v4485 = vunpack.c.0.s8 %v4484
        %v4486 = vperm.slane %v4480, %v4485
        %v4488 = vunpack.c.l.s4 1983009808
        %v4489 = vunpack.c.0.s8 %v4488
        %v4490 = vperm.slane %v4482, %v4489
        %v4491 = vrot.slane %v4486, 4
        %v4492 = vsel %vm345, %v4491, %v4474
        %v4493 = vrot.slane %v4474, 4
        %v4494 = vsel %vm345, %v4486, %v4493
        %v4496 = vunpack.c.l.s4 1934713408
        %v4497 = vunpack.c.0.s8 %v4496
        %v4498 = vperm.slane %v4492, %v4497
        %v4500 = vunpack.c.l.s4 1934713408
        %v4501 = vunpack.c.0.s8 %v4500
        %v4502 = vperm.slane %v4494, %v4501
        %v4503 = vrot.slane %v4490, 4
        %v4504 = vsel %vm345, %v4503, %v4478
        %v4505 = vrot.slane %v4478, 4
        %v4506 = vsel %vm345, %v4490, %v4505
        %v4508 = vunpack.c.l.s4 1934713408
        %v4509 = vunpack.c.0.s8 %v4508
        %v4510 = vperm.slane %v4504, %v4509
        %v4512 = vunpack.c.l.s4 1934713408
        %v4513 = vunpack.c.0.s8 %v4512
        %v4514 = vperm.slane %v4506, %v4513
        %v4515 = vrot.slane %v4498, 4
        %v4516 = vsel %vm345, 0.0, %v4515
        %v4517 = vrot.slane %v4502, 4
        %v4518 = vsel %vm345, 0.0, %v4517
        %v4519 = vrot.slane %v4510, 4
        %v4520 = vsel %vm345, 0.0, %v4519
        %v4521 = vrot.slane %v4514, 4
        %v4522 = vsel %vm345, 0.0, %v4521
        %4524 = vrot.lane.b32.xlu0 %v4460, 16
        %v4525 = vpop.permute.xlu0 %4524
        %4528 = vrot.lane.b32.xlu0 %v4446, 32
        %v4529 = vpop.permute.xlu0 %4528
        %4532 = vrot.lane.b32.xlu0 %v4462, 48
        %v4533 = vpop.permute.xlu0 %4532
        %4536 = vrot.lane.b32.xlu0 %v4454, 64
        %v4537 = vpop.permute.xlu0 %4536
        %4540 = vrot.lane.b32.xlu0 %v4464, 80
        %v4541 = vpop.permute.xlu0 %4540
        %4544 = vrot.lane.b32.xlu0 %v4458, 96
        %v4545 = vpop.permute.xlu0 %4544
        %4548 = vrot.lane.b32.xlu0 %v4466, 112
        %v4549 = vpop.permute.xlu0 %4548
        %4552 = vrot.lane.b32.xlu0 %v4516, 16
        %v4553 = vpop.permute.xlu0 %4552
        %4556 = vrot.lane.b32.xlu0 %v4502, 32
        %v4557 = vpop.permute.xlu0 %4556
        %4560 = vrot.lane.b32.xlu0 %v4518, 48
        %v4561 = vpop.permute.xlu0 %4560
        %4564 = vrot.lane.b32.xlu0 %v4510, 64
        %v4565 = vpop.permute.xlu0 %4564
        %4568 = vrot.lane.b32.xlu0 %v4520, 80
        %v4569 = vpop.permute.xlu0 %4568
        %4572 = vrot.lane.b32.xlu0 %v4514, 96
        %v4573 = vpop.permute.xlu0 %4572
        %4576 = vrot.lane.b32.xlu0 %v4522, 112
        %v4577 = vpop.permute.xlu0 %4576
        %v4579 = vsel %vm513, %v4442, %v4525
        %v4580 = vsel %vm515, %v4579, %v4529
        %v4581 = vsel %vm517, %v4580, %v4533
        %v4582 = vsel %vm519, %v4581, %v4537
        %v4583 = vsel %vm521, %v4582, %v4541
        %v4584 = vsel %vm523, %v4583, %v4545
        %v4585 = vsel %vm525, %v4584, %v4549
        %v4586 = vsel %vm513, %v4498, %v4553
        %v4587 = vsel %vm515, %v4586, %v4557
        %v4588 = vsel %vm517, %v4587, %v4561
        %v4589 = vsel %vm519, %v4588, %v4565
        %v4590 = vsel %vm521, %v4589, %v4569
        %v4591 = vsel %vm523, %v4590, %v4573
        %v4592 = vsel %vm525, %v4591, %v4577
        %v4593 = vpack.c.bf16 %v4592, %v4585
        %4594 = vst [vmem:[#allocation3 + $0x48] sm:$0x33] %v4593
        %v4595 = vld [vmem:[#allocation2] sm:$0xff]
        %v4596 = vld [vmem:[#allocation2 + $0x8] sm:$0xff]
        %v4597 = vld [vmem:[#allocation2 + $0x18] sm:$0xff]
        %v4598 = vld [vmem:[#allocation2 + $0x20] sm:$0xff]
        %v4599 = vld [vmem:[#allocation2 + $0x30] sm:$0xff]
        %v4600 = vld [vmem:[#allocation2 + $0x38] sm:$0xff]
        %v4601 = vld [vmem:[#allocation2 + $0x48] sm:$0xff]
        %v4602 = vld [vmem:[#allocation2 + $0x50] sm:$0xff]
        %v4603 = vrot.slane %v4599, 4
        %v4604 = vsel %vm345, %v4603, %v4595
        %v4605 = vrot.slane %v4595, 4
        %v4606 = vsel %vm345, %v4599, %v4605
        %v4608 = vunpack.c.l.s4 1983009808
        %v4609 = vunpack.c.0.s8 %v4608
        %v4610 = vperm.slane %v4604, %v4609
        %v4612 = vunpack.c.l.s4 1983009808
        %v4613 = vunpack.c.0.s8 %v4612
        %v4614 = vperm.slane %v4606, %v4613
        %v4615 = vrot.slane %v4601, 4
        %v4616 = vsel %vm345, %v4615, %v4597
        %v4617 = vrot.slane %v4597, 4
        %v4618 = vsel %vm345, %v4601, %v4617
        %v4620 = vunpack.c.l.s4 1983009808
        %v4621 = vunpack.c.0.s8 %v4620
        %v4622 = vperm.slane %v4616, %v4621
        %v4624 = vunpack.c.l.s4 1983009808
        %v4625 = vunpack.c.0.s8 %v4624
        %v4626 = vperm.slane %v4618, %v4625
        %v4627 = vrot.slane %v4622, 4
        %v4628 = vsel %vm345, %v4627, %v4610
        %v4629 = vrot.slane %v4610, 4
        %v4630 = vsel %vm345, %v4622, %v4629
        %v4632 = vunpack.c.l.s4 1934713408
        %v4633 = vunpack.c.0.s8 %v4632
        %v4634 = vperm.slane %v4628, %v4633
        %v4636 = vunpack.c.l.s4 1934713408
        %v4637 = vunpack.c.0.s8 %v4636
        %v4638 = vperm.slane %v4630, %v4637
        %v4639 = vrot.slane %v4626, 4
        %v4640 = vsel %vm345, %v4639, %v4614
        %v4641 = vrot.slane %v4614, 4
        %v4642 = vsel %vm345, %v4626, %v4641
        %v4644 = vunpack.c.l.s4 1934713408
        %v4645 = vunpack.c.0.s8 %v4644
        %v4646 = vperm.slane %v4640, %v4645
        %v4648 = vunpack.c.l.s4 1934713408
        %v4649 = vunpack.c.0.s8 %v4648
        %v4650 = vperm.slane %v4642, %v4649
        %v4651 = vrot.slane %v4634, 4
        %v4652 = vsel %vm345, 0.0, %v4651
        %v4653 = vrot.slane %v4638, 4
        %v4654 = vsel %vm345, 0.0, %v4653
        %v4655 = vrot.slane %v4646, 4
        %v4656 = vsel %vm345, 0.0, %v4655
        %v4657 = vrot.slane %v4650, 4
        %v4658 = vsel %vm345, 0.0, %v4657
        %v4659 = vrot.slane %v4600, 4
        %v4660 = vsel %vm345, %v4659, %v4596
        %v4661 = vrot.slane %v4596, 4
        %v4662 = vsel %vm345, %v4600, %v4661
        %v4664 = vunpack.c.l.s4 1983009808
        %v4665 = vunpack.c.0.s8 %v4664
        %v4666 = vperm.slane %v4660, %v4665
        %v4668 = vunpack.c.l.s4 1983009808
        %v4669 = vunpack.c.0.s8 %v4668
        %v4670 = vperm.slane %v4662, %v4669
        %v4671 = vrot.slane %v4602, 4
        %v4672 = vsel %vm345, %v4671, %v4598
        %v4673 = vrot.slane %v4598, 4
        %v4674 = vsel %vm345, %v4602, %v4673
        %v4676 = vunpack.c.l.s4 1983009808
        %v4677 = vunpack.c.0.s8 %v4676
        %v4678 = vperm.slane %v4672, %v4677
        %v4680 = vunpack.c.l.s4 1983009808
        %v4681 = vunpack.c.0.s8 %v4680
        %v4682 = vperm.slane %v4674, %v4681
        %v4683 = vrot.slane %v4678, 4
        %v4684 = vsel %vm345, %v4683, %v4666
        %v4685 = vrot.slane %v4666, 4
        %v4686 = vsel %vm345, %v4678, %v4685
        %v4688 = vunpack.c.l.s4 1934713408
        %v4689 = vunpack.c.0.s8 %v4688
        %v4690 = vperm.slane %v4684, %v4689
        %v4692 = vunpack.c.l.s4 1934713408
        %v4693 = vunpack.c.0.s8 %v4692
        %v4694 = vperm.slane %v4686, %v4693
        %v4695 = vrot.slane %v4682, 4
        %v4696 = vsel %vm345, %v4695, %v4670
        %v4697 = vrot.slane %v4670, 4
        %v4698 = vsel %vm345, %v4682, %v4697
        %v4700 = vunpack.c.l.s4 1934713408
        %v4701 = vunpack.c.0.s8 %v4700
        %v4702 = vperm.slane %v4696, %v4701
        %v4704 = vunpack.c.l.s4 1934713408
        %v4705 = vunpack.c.0.s8 %v4704
        %v4706 = vperm.slane %v4698, %v4705
        %v4707 = vrot.slane %v4690, 4
        %v4708 = vsel %vm345, 0.0, %v4707
        %v4709 = vrot.slane %v4694, 4
        %v4710 = vsel %vm345, 0.0, %v4709
        %v4711 = vrot.slane %v4702, 4
        %v4712 = vsel %vm345, 0.0, %v4711
        %v4713 = vrot.slane %v4706, 4
        %v4714 = vsel %vm345, 0.0, %v4713
        %4716 = vrot.lane.b32.xlu0 %v4652, 16
        %v4717 = vpop.permute.xlu0 %4716
        %4720 = vrot.lane.b32.xlu0 %v4638, 32
        %v4721 = vpop.permute.xlu0 %4720
        %4724 = vrot.lane.b32.xlu0 %v4654, 48
        %v4725 = vpop.permute.xlu0 %4724
        %4728 = vrot.lane.b32.xlu0 %v4646, 64
        %v4729 = vpop.permute.xlu0 %4728
        %4732 = vrot.lane.b32.xlu0 %v4656, 80
        %v4733 = vpop.permute.xlu0 %4732
        %4736 = vrot.lane.b32.xlu0 %v4650, 96
        %v4737 = vpop.permute.xlu0 %4736
        %4740 = vrot.lane.b32.xlu0 %v4658, 112
        %v4741 = vpop.permute.xlu0 %4740
        %4744 = vrot.lane.b32.xlu0 %v4708, 16
        %v4745 = vpop.permute.xlu0 %4744
        %4748 = vrot.lane.b32.xlu0 %v4694, 32
        %v4749 = vpop.permute.xlu0 %4748
        %4752 = vrot.lane.b32.xlu0 %v4710, 48
        %v4753 = vpop.permute.xlu0 %4752
        %4756 = vrot.lane.b32.xlu0 %v4702, 64
        %v4757 = vpop.permute.xlu0 %4756
        %4760 = vrot.lane.b32.xlu0 %v4712, 80
        %v4761 = vpop.permute.xlu0 %4760
        %4764 = vrot.lane.b32.xlu0 %v4706, 96
        %v4765 = vpop.permute.xlu0 %4764
        %4768 = vrot.lane.b32.xlu0 %v4714, 112
        %v4769 = vpop.permute.xlu0 %4768
        %v4771 = vsel %vm513, %v4634, %v4717
        %v4772 = vsel %vm515, %v4771, %v4721
        %v4773 = vsel %vm517, %v4772, %v4725
        %v4774 = vsel %vm519, %v4773, %v4729
        %v4775 = vsel %vm521, %v4774, %v4733
        %v4776 = vsel %vm523, %v4775, %v4737
        %v4777 = vsel %vm525, %v4776, %v4741
        %v4778 = vsel %vm513, %v4690, %v4745
        %v4779 = vsel %vm515, %v4778, %v4749
        %v4780 = vsel %vm517, %v4779, %v4753
        %v4781 = vsel %vm519, %v4780, %v4757
        %v4782 = vsel %vm521, %v4781, %v4761
        %v4783 = vsel %vm523, %v4782, %v4765
        %v4784 = vsel %vm525, %v4783, %v4769
        %v4785 = vpack.c.bf16 %v4784, %v4777
        %v4787 = vrot.slane %v4785, 6
        %4789 = vst [vmem:[#allocation3 + $0x48] sm:$0xcc] %v4787
        %v4790 = vld [vmem:[#allocation2] sm:$0xff]
        %v4791 = vld [vmem:[#allocation2 + $0x8] sm:$0xff]
        %v4792 = vld [vmem:[#allocation2 + $0x18] sm:$0xff]
        %v4793 = vld [vmem:[#allocation2 + $0x20] sm:$0xff]
        %v4794 = vld [vmem:[#allocation2 + $0x30] sm:$0xff]
        %v4795 = vld [vmem:[#allocation2 + $0x38] sm:$0xff]
        %v4796 = vld [vmem:[#allocation2 + $0x48] sm:$0xff]
        %v4797 = vld [vmem:[#allocation2 + $0x50] sm:$0xff]
        %4806 = vrot.lane.b32.xlu0 %v4790, 124
        %v4807 = vpop.permute.xlu0 %4806
        %4808 = vrot.lane.b32.xlu0 %v4791, 124
        %v4809 = vpop.permute.xlu0 %4808
        %4810 = vrot.lane.b32.xlu0 %v4792, 124
        %v4811 = vpop.permute.xlu0 %4810
        %4812 = vrot.lane.b32.xlu0 %v4793, 124
        %v4813 = vpop.permute.xlu0 %4812
        %4814 = vrot.lane.b32.xlu0 %v4794, 124
        %v4815 = vpop.permute.xlu0 %4814
        %4816 = vrot.lane.b32.xlu0 %v4795, 124
        %v4817 = vpop.permute.xlu0 %4816
        %4818 = vrot.lane.b32.xlu0 %v4796, 124
        %v4819 = vpop.permute.xlu0 %4818
        %4820 = vrot.lane.b32.xlu0 %v4797, 124
        %v4821 = vpop.permute.xlu0 %4820
        %v4830 = vrot.slane %v4815, 4
        %v4831 = vsel %vm345, %v4830, %v4807
        %v4832 = vrot.slane %v4807, 4
        %v4833 = vsel %vm345, %v4815, %v4832
        %v4835 = vunpack.c.l.s4 1983009808
        %v4836 = vunpack.c.0.s8 %v4835
        %v4837 = vperm.slane %v4831, %v4836
        %v4839 = vunpack.c.l.s4 1983009808
        %v4840 = vunpack.c.0.s8 %v4839
        %v4841 = vperm.slane %v4833, %v4840
        %v4842 = vrot.slane %v4819, 4
        %v4843 = vsel %vm345, %v4842, %v4811
        %v4844 = vrot.slane %v4811, 4
        %v4845 = vsel %vm345, %v4819, %v4844
        %v4847 = vunpack.c.l.s4 1983009808
        %v4848 = vunpack.c.0.s8 %v4847
        %v4849 = vperm.slane %v4843, %v4848
        %v4851 = vunpack.c.l.s4 1983009808
        %v4852 = vunpack.c.0.s8 %v4851
        %v4853 = vperm.slane %v4845, %v4852
        %v4854 = vrot.slane %v4849, 4
        %v4855 = vsel %vm345, %v4854, %v4837
        %v4856 = vrot.slane %v4837, 4
        %v4857 = vsel %vm345, %v4849, %v4856
        %v4859 = vunpack.c.l.s4 1934713408
        %v4860 = vunpack.c.0.s8 %v4859
        %v4861 = vperm.slane %v4855, %v4860
        %v4863 = vunpack.c.l.s4 1934713408
        %v4864 = vunpack.c.0.s8 %v4863
        %v4865 = vperm.slane %v4857, %v4864
        %v4866 = vrot.slane %v4853, 4
        %v4867 = vsel %vm345, %v4866, %v4841
        %v4868 = vrot.slane %v4841, 4
        %v4869 = vsel %vm345, %v4853, %v4868
        %v4871 = vunpack.c.l.s4 1934713408
        %v4872 = vunpack.c.0.s8 %v4871
        %v4873 = vperm.slane %v4867, %v4872
        %v4875 = vunpack.c.l.s4 1934713408
        %v4876 = vunpack.c.0.s8 %v4875
        %v4877 = vperm.slane %v4869, %v4876
        %v4878 = vrot.slane %v4861, 4
        %v4879 = vsel %vm345, 0.0, %v4878
        %v4880 = vrot.slane %v4865, 4
        %v4881 = vsel %vm345, 0.0, %v4880
        %v4882 = vrot.slane %v4873, 4
        %v4883 = vsel %vm345, 0.0, %v4882
        %v4884 = vrot.slane %v4877, 4
        %v4885 = vsel %vm345, 0.0, %v4884
        %v4886 = vrot.slane %v4817, 4
        %v4887 = vsel %vm345, %v4886, %v4809
        %v4888 = vrot.slane %v4809, 4
        %v4889 = vsel %vm345, %v4817, %v4888
        %v4891 = vunpack.c.l.s4 1983009808
        %v4892 = vunpack.c.0.s8 %v4891
        %v4893 = vperm.slane %v4887, %v4892
        %v4895 = vunpack.c.l.s4 1983009808
        %v4896 = vunpack.c.0.s8 %v4895
        %v4897 = vperm.slane %v4889, %v4896
        %v4898 = vrot.slane %v4821, 4
        %v4899 = vsel %vm345, %v4898, %v4813
        %v4900 = vrot.slane %v4813, 4
        %v4901 = vsel %vm345, %v4821, %v4900
        %v4903 = vunpack.c.l.s4 1983009808
        %v4904 = vunpack.c.0.s8 %v4903
        %v4905 = vperm.slane %v4899, %v4904
        %v4907 = vunpack.c.l.s4 1983009808
        %v4908 = vunpack.c.0.s8 %v4907
        %v4909 = vperm.slane %v4901, %v4908
        %v4910 = vrot.slane %v4905, 4
        %v4911 = vsel %vm345, %v4910, %v4893
        %v4912 = vrot.slane %v4893, 4
        %v4913 = vsel %vm345, %v4905, %v4912
        %v4915 = vunpack.c.l.s4 1934713408
        %v4916 = vunpack.c.0.s8 %v4915
        %v4917 = vperm.slane %v4911, %v4916
        %v4919 = vunpack.c.l.s4 1934713408
        %v4920 = vunpack.c.0.s8 %v4919
        %v4921 = vperm.slane %v4913, %v4920
        %v4922 = vrot.slane %v4909, 4
        %v4923 = vsel %vm345, %v4922, %v4897
        %v4924 = vrot.slane %v4897, 4
        %v4925 = vsel %vm345, %v4909, %v4924
        %v4927 = vunpack.c.l.s4 1934713408
        %v4928 = vunpack.c.0.s8 %v4927
        %v4929 = vperm.slane %v4923, %v4928
        %v4931 = vunpack.c.l.s4 1934713408
        %v4932 = vunpack.c.0.s8 %v4931
        %v4933 = vperm.slane %v4925, %v4932
        %v4934 = vrot.slane %v4917, 4
        %v4935 = vsel %vm345, 0.0, %v4934
        %v4936 = vrot.slane %v4921, 4
        %v4937 = vsel %vm345, 0.0, %v4936
        %v4938 = vrot.slane %v4929, 4
        %v4939 = vsel %vm345, 0.0, %v4938
        %v4940 = vrot.slane %v4933, 4
        %v4941 = vsel %vm345, 0.0, %v4940
        %4943 = vrot.lane.b32.xlu0 %v4879, 16
        %v4944 = vpop.permute.xlu0 %4943
        %4947 = vrot.lane.b32.xlu0 %v4865, 32
        %v4948 = vpop.permute.xlu0 %4947
        %4951 = vrot.lane.b32.xlu0 %v4881, 48
        %v4952 = vpop.permute.xlu0 %4951
        %4955 = vrot.lane.b32.xlu0 %v4873, 64
        %v4956 = vpop.permute.xlu0 %4955
        %4959 = vrot.lane.b32.xlu0 %v4883, 80
        %v4960 = vpop.permute.xlu0 %4959
        %4963 = vrot.lane.b32.xlu0 %v4877, 96
        %v4964 = vpop.permute.xlu0 %4963
        %4967 = vrot.lane.b32.xlu0 %v4885, 112
        %v4968 = vpop.permute.xlu0 %4967
        %4971 = vrot.lane.b32.xlu0 %v4935, 16
        %v4972 = vpop.permute.xlu0 %4971
        %4975 = vrot.lane.b32.xlu0 %v4921, 32
        %v4976 = vpop.permute.xlu0 %4975
        %4979 = vrot.lane.b32.xlu0 %v4937, 48
        %v4980 = vpop.permute.xlu0 %4979
        %4983 = vrot.lane.b32.xlu0 %v4929, 64
        %v4984 = vpop.permute.xlu0 %4983
        %4987 = vrot.lane.b32.xlu0 %v4939, 80
        %v4988 = vpop.permute.xlu0 %4987
        %4991 = vrot.lane.b32.xlu0 %v4933, 96
        %v4992 = vpop.permute.xlu0 %4991
        %4995 = vrot.lane.b32.xlu0 %v4941, 112
        %v4996 = vpop.permute.xlu0 %4995
        %v4998 = vsel %vm513, %v4861, %v4944
        %v4999 = vsel %vm515, %v4998, %v4948
        %v5000 = vsel %vm517, %v4999, %v4952
        %v5001 = vsel %vm519, %v5000, %v4956
        %v5002 = vsel %vm521, %v5001, %v4960
        %v5003 = vsel %vm523, %v5002, %v4964
        %v5004 = vsel %vm525, %v5003, %v4968
        %v5005 = vsel %vm513, %v4917, %v4972
        %v5006 = vsel %vm515, %v5005, %v4976
        %v5007 = vsel %vm517, %v5006, %v4980
        %v5008 = vsel %vm519, %v5007, %v4984
        %v5009 = vsel %vm521, %v5008, %v4988
        %v5010 = vsel %vm523, %v5009, %v4992
        %v5011 = vsel %vm525, %v5010, %v4996
        %v5012 = vpack.c.bf16 %v5011, %v5004
        %5013 = vst [vmem:[#allocation3 + $0x50] sm:$0x33] %v5012
        %v5014 = vld [vmem:[#allocation2] sm:$0xff]
        %v5015 = vld [vmem:[#allocation2 + $0x8] sm:$0xff]
        %v5016 = vld [vmem:[#allocation2 + $0x18] sm:$0xff]
        %v5017 = vld [vmem:[#allocation2 + $0x20] sm:$0xff]
        %v5018 = vld [vmem:[#allocation2 + $0x30] sm:$0xff]
        %v5019 = vld [vmem:[#allocation2 + $0x38] sm:$0xff]
        %v5020 = vld [vmem:[#allocation2 + $0x48] sm:$0xff]
        %v5021 = vld [vmem:[#allocation2 + $0x50] sm:$0xff]
        %5030 = vrot.lane.b32.xlu0 %v5014, 120
        %v5031 = vpop.permute.xlu0 %5030
        %5032 = vrot.lane.b32.xlu0 %v5015, 120
        %v5033 = vpop.permute.xlu0 %5032
        %5034 = vrot.lane.b32.xlu0 %v5016, 120
        %v5035 = vpop.permute.xlu0 %5034
        %5036 = vrot.lane.b32.xlu0 %v5017, 120
        %v5037 = vpop.permute.xlu0 %5036
        %5038 = vrot.lane.b32.xlu0 %v5018, 120
        %v5039 = vpop.permute.xlu0 %5038
        %5040 = vrot.lane.b32.xlu0 %v5019, 120
        %v5041 = vpop.permute.xlu0 %5040
        %5042 = vrot.lane.b32.xlu0 %v5020, 120
        %v5043 = vpop.permute.xlu0 %5042
        %5044 = vrot.lane.b32.xlu0 %v5021, 120
        %v5045 = vpop.permute.xlu0 %5044
        %v5054 = vrot.slane %v5039, 4
        %v5055 = vsel %vm345, %v5054, %v5031
        %v5056 = vrot.slane %v5031, 4
        %v5057 = vsel %vm345, %v5039, %v5056
        %v5059 = vunpack.c.l.s4 1983009808
        %v5060 = vunpack.c.0.s8 %v5059
        %v5061 = vperm.slane %v5055, %v5060
        %v5063 = vunpack.c.l.s4 1983009808
        %v5064 = vunpack.c.0.s8 %v5063
        %v5065 = vperm.slane %v5057, %v5064
        %v5066 = vrot.slane %v5043, 4
        %v5067 = vsel %vm345, %v5066, %v5035
        %v5068 = vrot.slane %v5035, 4
        %v5069 = vsel %vm345, %v5043, %v5068
        %v5071 = vunpack.c.l.s4 1983009808
        %v5072 = vunpack.c.0.s8 %v5071
        %v5073 = vperm.slane %v5067, %v5072
        %v5075 = vunpack.c.l.s4 1983009808
        %v5076 = vunpack.c.0.s8 %v5075
        %v5077 = vperm.slane %v5069, %v5076
        %v5078 = vrot.slane %v5073, 4
        %v5079 = vsel %vm345, %v5078, %v5061
        %v5080 = vrot.slane %v5061, 4
        %v5081 = vsel %vm345, %v5073, %v5080
        %v5083 = vunpack.c.l.s4 1934713408
        %v5084 = vunpack.c.0.s8 %v5083
        %v5085 = vperm.slane %v5079, %v5084
        %v5087 = vunpack.c.l.s4 1934713408
        %v5088 = vunpack.c.0.s8 %v5087
        %v5089 = vperm.slane %v5081, %v5088
        %v5090 = vrot.slane %v5077, 4
        %v5091 = vsel %vm345, %v5090, %v5065
        %v5092 = vrot.slane %v5065, 4
        %v5093 = vsel %vm345, %v5077, %v5092
        %v5095 = vunpack.c.l.s4 1934713408
        %v5096 = vunpack.c.0.s8 %v5095
        %v5097 = vperm.slane %v5091, %v5096
        %v5099 = vunpack.c.l.s4 1934713408
        %v5100 = vunpack.c.0.s8 %v5099
        %v5101 = vperm.slane %v5093, %v5100
        %v5102 = vrot.slane %v5085, 4
        %v5103 = vsel %vm345, 0.0, %v5102
        %v5104 = vrot.slane %v5089, 4
        %v5105 = vsel %vm345, 0.0, %v5104
        %v5106 = vrot.slane %v5097, 4
        %v5107 = vsel %vm345, 0.0, %v5106
        %v5108 = vrot.slane %v5101, 4
        %v5109 = vsel %vm345, 0.0, %v5108
        %v5110 = vrot.slane %v5041, 4
        %v5111 = vsel %vm345, %v5110, %v5033
        %v5112 = vrot.slane %v5033, 4
        %v5113 = vsel %vm345, %v5041, %v5112
        %v5115 = vunpack.c.l.s4 1983009808
        %v5116 = vunpack.c.0.s8 %v5115
        %v5117 = vperm.slane %v5111, %v5116
        %v5119 = vunpack.c.l.s4 1983009808
        %v5120 = vunpack.c.0.s8 %v5119
        %v5121 = vperm.slane %v5113, %v5120
        %v5122 = vrot.slane %v5045, 4
        %v5123 = vsel %vm345, %v5122, %v5037
        %v5124 = vrot.slane %v5037, 4
        %v5125 = vsel %vm345, %v5045, %v5124
        %v5127 = vunpack.c.l.s4 1983009808
        %v5128 = vunpack.c.0.s8 %v5127
        %v5129 = vperm.slane %v5123, %v5128
        %v5131 = vunpack.c.l.s4 1983009808
        %v5132 = vunpack.c.0.s8 %v5131
        %v5133 = vperm.slane %v5125, %v5132
        %v5134 = vrot.slane %v5129, 4
        %v5135 = vsel %vm345, %v5134, %v5117
        %v5136 = vrot.slane %v5117, 4
        %v5137 = vsel %vm345, %v5129, %v5136
        %v5139 = vunpack.c.l.s4 1934713408
        %v5140 = vunpack.c.0.s8 %v5139
        %v5141 = vperm.slane %v5135, %v5140
        %v5143 = vunpack.c.l.s4 1934713408
        %v5144 = vunpack.c.0.s8 %v5143
        %v5145 = vperm.slane %v5137, %v5144
        %v5146 = vrot.slane %v5133, 4
        %v5147 = vsel %vm345, %v5146, %v5121
        %v5148 = vrot.slane %v5121, 4
        %v5149 = vsel %vm345, %v5133, %v5148
        %v5151 = vunpack.c.l.s4 1934713408
        %v5152 = vunpack.c.0.s8 %v5151
        %v5153 = vperm.slane %v5147, %v5152
        %v5155 = vunpack.c.l.s4 1934713408
        %v5156 = vunpack.c.0.s8 %v5155
        %v5157 = vperm.slane %v5149, %v5156
        %v5158 = vrot.slane %v5141, 4
        %v5159 = vsel %vm345, 0.0, %v5158
        %v5160 = vrot.slane %v5145, 4
        %v5161 = vsel %vm345, 0.0, %v5160
        %v5162 = vrot.slane %v5153, 4
        %v5163 = vsel %vm345, 0.0, %v5162
        %v5164 = vrot.slane %v5157, 4
        %v5165 = vsel %vm345, 0.0, %v5164
        %5167 = vrot.lane.b32.xlu0 %v5103, 16
        %v5168 = vpop.permute.xlu0 %5167
        %5171 = vrot.lane.b32.xlu0 %v5089, 32
        %v5172 = vpop.permute.xlu0 %5171
        %5175 = vrot.lane.b32.xlu0 %v5105, 48
        %v5176 = vpop.permute.xlu0 %5175
        %5179 = vrot.lane.b32.xlu0 %v5097, 64
        %v5180 = vpop.permute.xlu0 %5179
        %5183 = vrot.lane.b32.xlu0 %v5107, 80
        %v5184 = vpop.permute.xlu0 %5183
        %5187 = vrot.lane.b32.xlu0 %v5101, 96
        %v5188 = vpop.permute.xlu0 %5187
        %5191 = vrot.lane.b32.xlu0 %v5109, 112
        %v5192 = vpop.permute.xlu0 %5191
        %5195 = vrot.lane.b32.xlu0 %v5159, 16
        %v5196 = vpop.permute.xlu0 %5195
        %5199 = vrot.lane.b32.xlu0 %v5145, 32
        %v5200 = vpop.permute.xlu0 %5199
        %5203 = vrot.lane.b32.xlu0 %v5161, 48
        %v5204 = vpop.permute.xlu0 %5203
        %5207 = vrot.lane.b32.xlu0 %v5153, 64
        %v5208 = vpop.permute.xlu0 %5207
        %5211 = vrot.lane.b32.xlu0 %v5163, 80
        %v5212 = vpop.permute.xlu0 %5211
        %5215 = vrot.lane.b32.xlu0 %v5157, 96
        %v5216 = vpop.permute.xlu0 %5215
        %5219 = vrot.lane.b32.xlu0 %v5165, 112
        %v5220 = vpop.permute.xlu0 %5219
        %v5222 = vsel %vm513, %v5085, %v5168
        %v5223 = vsel %vm515, %v5222, %v5172
        %v5224 = vsel %vm517, %v5223, %v5176
        %v5225 = vsel %vm519, %v5224, %v5180
        %v5226 = vsel %vm521, %v5225, %v5184
        %v5227 = vsel %vm523, %v5226, %v5188
        %v5228 = vsel %vm525, %v5227, %v5192
        %v5229 = vsel %vm513, %v5141, %v5196
        %v5230 = vsel %vm515, %v5229, %v5200
        %v5231 = vsel %vm517, %v5230, %v5204
        %v5232 = vsel %vm519, %v5231, %v5208
        %v5233 = vsel %vm521, %v5232, %v5212
        %v5234 = vsel %vm523, %v5233, %v5216
        %v5235 = vsel %vm525, %v5234, %v5220
        %v5236 = vpack.c.bf16 %v5235, %v5228
        %v5238 = vrot.slane %v5236, 6
        %5240 = vst [vmem:[#allocation3 + $0x50] sm:$0xcc] %v5238
        %v5241 = vld [vmem:[#allocation2 + $0x4] sm:$0xff]
        %v5242 = vld [vmem:[#allocation2 + $0xc] sm:$0xff]
        %v5243 = vld [vmem:[#allocation2 + $0x1c] sm:$0xff]
        %v5244 = vld [vmem:[#allocation2 + $0x24] sm:$0xff]
        %v5245 = vld [vmem:[#allocation2 + $0x34] sm:$0xff]
        %v5246 = vld [vmem:[#allocation2 + $0x3c] sm:$0xff]
        %v5247 = vld [vmem:[#allocation2 + $0x4c] sm:$0xff]
        %v5248 = vld [vmem:[#allocation2 + $0x54] sm:$0xff]
        %v5249 = vrot.slane %v5245, 4
        %v5250 = vsel %vm345, %v5249, %v5241
        %v5251 = vrot.slane %v5241, 4
        %v5252 = vsel %vm345, %v5245, %v5251
        %v5254 = vunpack.c.l.s4 1983009808
        %v5255 = vunpack.c.0.s8 %v5254
        %v5256 = vperm.slane %v5250, %v5255
        %v5258 = vunpack.c.l.s4 1983009808
        %v5259 = vunpack.c.0.s8 %v5258
        %v5260 = vperm.slane %v5252, %v5259
        %v5261 = vrot.slane %v5247, 4
        %v5262 = vsel %vm345, %v5261, %v5243
        %v5263 = vrot.slane %v5243, 4
        %v5264 = vsel %vm345, %v5247, %v5263
        %v5266 = vunpack.c.l.s4 1983009808
        %v5267 = vunpack.c.0.s8 %v5266
        %v5268 = vperm.slane %v5262, %v5267
        %v5270 = vunpack.c.l.s4 1983009808
        %v5271 = vunpack.c.0.s8 %v5270
        %v5272 = vperm.slane %v5264, %v5271
        %v5273 = vrot.slane %v5268, 4
        %v5274 = vsel %vm345, %v5273, %v5256
        %v5275 = vrot.slane %v5256, 4
        %v5276 = vsel %vm345, %v5268, %v5275
        %v5278 = vunpack.c.l.s4 1934713408
        %v5279 = vunpack.c.0.s8 %v5278
        %v5280 = vperm.slane %v5274, %v5279
        %v5282 = vunpack.c.l.s4 1934713408
        %v5283 = vunpack.c.0.s8 %v5282
        %v5284 = vperm.slane %v5276, %v5283
        %v5285 = vrot.slane %v5272, 4
        %v5286 = vsel %vm345, %v5285, %v5260
        %v5287 = vrot.slane %v5260, 4
        %v5288 = vsel %vm345, %v5272, %v5287
        %v5290 = vunpack.c.l.s4 1934713408
        %v5291 = vunpack.c.0.s8 %v5290
        %v5292 = vperm.slane %v5286, %v5291
        %v5294 = vunpack.c.l.s4 1934713408
        %v5295 = vunpack.c.0.s8 %v5294
        %v5296 = vperm.slane %v5288, %v5295
        %v5297 = vrot.slane %v5280, 4
        %v5298 = vsel %vm345, 0.0, %v5297
        %v5299 = vrot.slane %v5284, 4
        %v5300 = vsel %vm345, 0.0, %v5299
        %v5301 = vrot.slane %v5292, 4
        %v5302 = vsel %vm345, 0.0, %v5301
        %v5303 = vrot.slane %v5296, 4
        %v5304 = vsel %vm345, 0.0, %v5303
        %v5305 = vrot.slane %v5246, 4
        %v5306 = vsel %vm345, %v5305, %v5242
        %v5307 = vrot.slane %v5242, 4
        %v5308 = vsel %vm345, %v5246, %v5307
        %v5310 = vunpack.c.l.s4 1983009808
        %v5311 = vunpack.c.0.s8 %v5310
        %v5312 = vperm.slane %v5306, %v5311
        %v5314 = vunpack.c.l.s4 1983009808
        %v5315 = vunpack.c.0.s8 %v5314
        %v5316 = vperm.slane %v5308, %v5315
        %v5317 = vrot.slane %v5248, 4
        %v5318 = vsel %vm345, %v5317, %v5244
        %v5319 = vrot.slane %v5244, 4
        %v5320 = vsel %vm345, %v5248, %v5319
        %v5322 = vunpack.c.l.s4 1983009808
        %v5323 = vunpack.c.0.s8 %v5322
        %v5324 = vperm.slane %v5318, %v5323
        %v5326 = vunpack.c.l.s4 1983009808
        %v5327 = vunpack.c.0.s8 %v5326
        %v5328 = vperm.slane %v5320, %v5327
        %v5329 = vrot.slane %v5324, 4
        %v5330 = vsel %vm345, %v5329, %v5312
        %v5331 = vrot.slane %v5312, 4
        %v5332 = vsel %vm345, %v5324, %v5331
        %v5334 = vunpack.c.l.s4 1934713408
        %v5335 = vunpack.c.0.s8 %v5334
        %v5336 = vperm.slane %v5330, %v5335
        %v5338 = vunpack.c.l.s4 1934713408
        %v5339 = vunpack.c.0.s8 %v5338
        %v5340 = vperm.slane %v5332, %v5339
        %v5341 = vrot.slane %v5328, 4
        %v5342 = vsel %vm345, %v5341, %v5316
        %v5343 = vrot.slane %v5316, 4
        %v5344 = vsel %vm345, %v5328, %v5343
        %v5346 = vunpack.c.l.s4 1934713408
        %v5347 = vunpack.c.0.s8 %v5346
        %v5348 = vperm.slane %v5342, %v5347
        %v5350 = vunpack.c.l.s4 1934713408
        %v5351 = vunpack.c.0.s8 %v5350
        %v5352 = vperm.slane %v5344, %v5351
        %v5353 = vrot.slane %v5336, 4
        %v5354 = vsel %vm345, 0.0, %v5353
        %v5355 = vrot.slane %v5340, 4
        %v5356 = vsel %vm345, 0.0, %v5355
        %v5357 = vrot.slane %v5348, 4
        %v5358 = vsel %vm345, 0.0, %v5357
        %v5359 = vrot.slane %v5352, 4
        %v5360 = vsel %vm345, 0.0, %v5359
        %5362 = vrot.lane.b32.xlu0 %v5298, 16
        %v5363 = vpop.permute.xlu0 %5362
        %5366 = vrot.lane.b32.xlu0 %v5284, 32
        %v5367 = vpop.permute.xlu0 %5366
        %5370 = vrot.lane.b32.xlu0 %v5300, 48
        %v5371 = vpop.permute.xlu0 %5370
        %5374 = vrot.lane.b32.xlu0 %v5292, 64
        %v5375 = vpop.permute.xlu0 %5374
        %5378 = vrot.lane.b32.xlu0 %v5302, 80
        %v5379 = vpop.permute.xlu0 %5378
        %5382 = vrot.lane.b32.xlu0 %v5296, 96
        %v5383 = vpop.permute.xlu0 %5382
        %5386 = vrot.lane.b32.xlu0 %v5304, 112
        %v5387 = vpop.permute.xlu0 %5386
        %5390 = vrot.lane.b32.xlu0 %v5354, 16
        %v5391 = vpop.permute.xlu0 %5390
        %5394 = vrot.lane.b32.xlu0 %v5340, 32
        %v5395 = vpop.permute.xlu0 %5394
        %5398 = vrot.lane.b32.xlu0 %v5356, 48
        %v5399 = vpop.permute.xlu0 %5398
        %5402 = vrot.lane.b32.xlu0 %v5348, 64
        %v5403 = vpop.permute.xlu0 %5402
        %5406 = vrot.lane.b32.xlu0 %v5358, 80
        %v5407 = vpop.permute.xlu0 %5406
        %5410 = vrot.lane.b32.xlu0 %v5352, 96
        %v5411 = vpop.permute.xlu0 %5410
        %5414 = vrot.lane.b32.xlu0 %v5360, 112
        %v5415 = vpop.permute.xlu0 %5414
        %v5417 = vsel %vm513, %v5280, %v5363
        %v5418 = vsel %vm515, %v5417, %v5367
        %v5419 = vsel %vm517, %v5418, %v5371
        %v5420 = vsel %vm519, %v5419, %v5375
        %v5421 = vsel %vm521, %v5420, %v5379
        %v5422 = vsel %vm523, %v5421, %v5383
        %v5423 = vsel %vm525, %v5422, %v5387
        %v5424 = vsel %vm513, %v5336, %v5391
        %v5425 = vsel %vm515, %v5424, %v5395
        %v5426 = vsel %vm517, %v5425, %v5399
        %v5427 = vsel %vm519, %v5426, %v5403
        %v5428 = vsel %vm521, %v5427, %v5407
        %v5429 = vsel %vm523, %v5428, %v5411
        %v5430 = vsel %vm525, %v5429, %v5415
        %v5431 = vpack.c.bf16 %v5430, %v5423
        %5432 = vst [vmem:[#allocation3 + $0x58] sm:$0x33] %v5431
        %v5433 = vld [vmem:[#allocation2 + $0x4] sm:$0xff]
        %v5434 = vld [vmem:[#allocation2 + $0xc] sm:$0xff]
        %v5435 = vld [vmem:[#allocation2 + $0x1c] sm:$0xff]
        %v5436 = vld [vmem:[#allocation2 + $0x24] sm:$0xff]
        %v5437 = vld [vmem:[#allocation2 + $0x34] sm:$0xff]
        %v5438 = vld [vmem:[#allocation2 + $0x3c] sm:$0xff]
        %v5439 = vld [vmem:[#allocation2 + $0x4c] sm:$0xff]
        %v5440 = vld [vmem:[#allocation2 + $0x54] sm:$0xff]
        %5449 = vrot.lane.b32.xlu0 %v5433, 124
        %v5450 = vpop.permute.xlu0 %5449
        %5451 = vrot.lane.b32.xlu0 %v5434, 124
        %v5452 = vpop.permute.xlu0 %5451
        %5453 = vrot.lane.b32.xlu0 %v5435, 124
        %v5454 = vpop.permute.xlu0 %5453
        %5455 = vrot.lane.b32.xlu0 %v5436, 124
        %v5456 = vpop.permute.xlu0 %5455
        %5457 = vrot.lane.b32.xlu0 %v5437, 124
        %v5458 = vpop.permute.xlu0 %5457
        %5459 = vrot.lane.b32.xlu0 %v5438, 124
        %v5460 = vpop.permute.xlu0 %5459
        %5461 = vrot.lane.b32.xlu0 %v5439, 124
        %v5462 = vpop.permute.xlu0 %5461
        %5463 = vrot.lane.b32.xlu0 %v5440, 124
        %v5464 = vpop.permute.xlu0 %5463
        %v5473 = vrot.slane %v5458, 4
        %v5474 = vsel %vm345, %v5473, %v5450
        %v5475 = vrot.slane %v5450, 4
        %v5476 = vsel %vm345, %v5458, %v5475
        %v5478 = vunpack.c.l.s4 1983009808
        %v5479 = vunpack.c.0.s8 %v5478
        %v5480 = vperm.slane %v5474, %v5479
        %v5482 = vunpack.c.l.s4 1983009808
        %v5483 = vunpack.c.0.s8 %v5482
        %v5484 = vperm.slane %v5476, %v5483
        %v5485 = vrot.slane %v5462, 4
        %v5486 = vsel %vm345, %v5485, %v5454
        %v5487 = vrot.slane %v5454, 4
        %v5488 = vsel %vm345, %v5462, %v5487
        %v5490 = vunpack.c.l.s4 1983009808
        %v5491 = vunpack.c.0.s8 %v5490
        %v5492 = vperm.slane %v5486, %v5491
        %v5494 = vunpack.c.l.s4 1983009808
        %v5495 = vunpack.c.0.s8 %v5494
        %v5496 = vperm.slane %v5488, %v5495
        %v5497 = vrot.slane %v5492, 4
        %v5498 = vsel %vm345, %v5497, %v5480
        %v5499 = vrot.slane %v5480, 4
        %v5500 = vsel %vm345, %v5492, %v5499
        %v5502 = vunpack.c.l.s4 1934713408
        %v5503 = vunpack.c.0.s8 %v5502
        %v5504 = vperm.slane %v5498, %v5503
        %v5506 = vunpack.c.l.s4 1934713408
        %v5507 = vunpack.c.0.s8 %v5506
        %v5508 = vperm.slane %v5500, %v5507
        %v5509 = vrot.slane %v5496, 4
        %v5510 = vsel %vm345, %v5509, %v5484
        %v5511 = vrot.slane %v5484, 4
        %v5512 = vsel %vm345, %v5496, %v5511
        %v5514 = vunpack.c.l.s4 1934713408
        %v5515 = vunpack.c.0.s8 %v5514
        %v5516 = vperm.slane %v5510, %v5515
        %v5518 = vunpack.c.l.s4 1934713408
        %v5519 = vunpack.c.0.s8 %v5518
        %v5520 = vperm.slane %v5512, %v5519
        %v5521 = vrot.slane %v5504, 4
        %v5522 = vsel %vm345, 0.0, %v5521
        %v5523 = vrot.slane %v5508, 4
        %v5524 = vsel %vm345, 0.0, %v5523
        %v5525 = vrot.slane %v5516, 4
        %v5526 = vsel %vm345, 0.0, %v5525
        %v5527 = vrot.slane %v5520, 4
        %v5528 = vsel %vm345, 0.0, %v5527
        %v5529 = vrot.slane %v5460, 4
        %v5530 = vsel %vm345, %v5529, %v5452
        %v5531 = vrot.slane %v5452, 4
        %v5532 = vsel %vm345, %v5460, %v5531
        %v5534 = vunpack.c.l.s4 1983009808
        %v5535 = vunpack.c.0.s8 %v5534
        %v5536 = vperm.slane %v5530, %v5535
        %v5538 = vunpack.c.l.s4 1983009808
        %v5539 = vunpack.c.0.s8 %v5538
        %v5540 = vperm.slane %v5532, %v5539
        %v5541 = vrot.slane %v5464, 4
        %v5542 = vsel %vm345, %v5541, %v5456
        %v5543 = vrot.slane %v5456, 4
        %v5544 = vsel %vm345, %v5464, %v5543
        %v5546 = vunpack.c.l.s4 1983009808
        %v5547 = vunpack.c.0.s8 %v5546
        %v5548 = vperm.slane %v5542, %v5547
        %v5550 = vunpack.c.l.s4 1983009808
        %v5551 = vunpack.c.0.s8 %v5550
        %v5552 = vperm.slane %v5544, %v5551
        %v5553 = vrot.slane %v5548, 4
        %v5554 = vsel %vm345, %v5553, %v5536
        %v5555 = vrot.slane %v5536, 4
        %v5556 = vsel %vm345, %v5548, %v5555
        %v5558 = vunpack.c.l.s4 1934713408
        %v5559 = vunpack.c.0.s8 %v5558
        %v5560 = vperm.slane %v5554, %v5559
        %v5562 = vunpack.c.l.s4 1934713408
        %v5563 = vunpack.c.0.s8 %v5562
        %v5564 = vperm.slane %v5556, %v5563
        %v5565 = vrot.slane %v5552, 4
        %v5566 = vsel %vm345, %v5565, %v5540
        %v5567 = vrot.slane %v5540, 4
        %v5568 = vsel %vm345, %v5552, %v5567
        %v5570 = vunpack.c.l.s4 1934713408
        %v5571 = vunpack.c.0.s8 %v5570
        %v5572 = vperm.slane %v5566, %v5571
        %v5574 = vunpack.c.l.s4 1934713408
        %v5575 = vunpack.c.0.s8 %v5574
        %v5576 = vperm.slane %v5568, %v5575
        %v5577 = vrot.slane %v5560, 4
        %v5578 = vsel %vm345, 0.0, %v5577
        %v5579 = vrot.slane %v5564, 4
        %v5580 = vsel %vm345, 0.0, %v5579
        %v5581 = vrot.slane %v5572, 4
        %v5582 = vsel %vm345, 0.0, %v5581
        %v5583 = vrot.slane %v5576, 4
        %v5584 = vsel %vm345, 0.0, %v5583
        %5586 = vrot.lane.b32.xlu0 %v5522, 16
        %v5587 = vpop.permute.xlu0 %5586
        %5590 = vrot.lane.b32.xlu0 %v5508, 32
        %v5591 = vpop.permute.xlu0 %5590
        %5594 = vrot.lane.b32.xlu0 %v5524, 48
        %v5595 = vpop.permute.xlu0 %5594
        %5598 = vrot.lane.b32.xlu0 %v5516, 64
        %v5599 = vpop.permute.xlu0 %5598
        %5602 = vrot.lane.b32.xlu0 %v5526, 80
        %v5603 = vpop.permute.xlu0 %5602
        %5606 = vrot.lane.b32.xlu0 %v5520, 96
        %v5607 = vpop.permute.xlu0 %5606
        %5610 = vrot.lane.b32.xlu0 %v5528, 112
        %v5611 = vpop.permute.xlu0 %5610
        %5614 = vrot.lane.b32.xlu0 %v5578, 16
        %v5615 = vpop.permute.xlu0 %5614
        %5618 = vrot.lane.b32.xlu0 %v5564, 32
        %v5619 = vpop.permute.xlu0 %5618
        %5622 = vrot.lane.b32.xlu0 %v5580, 48
        %v5623 = vpop.permute.xlu0 %5622
        %5626 = vrot.lane.b32.xlu0 %v5572, 64
        %v5627 = vpop.permute.xlu0 %5626
        %5630 = vrot.lane.b32.xlu0 %v5582, 80
        %v5631 = vpop.permute.xlu0 %5630
        %5634 = vrot.lane.b32.xlu0 %v5576, 96
        %v5635 = vpop.permute.xlu0 %5634
        %5638 = vrot.lane.b32.xlu0 %v5584, 112
        %v5639 = vpop.permute.xlu0 %5638
        %v5641 = vsel %vm513, %v5504, %v5587
        %v5642 = vsel %vm515, %v5641, %v5591
        %v5643 = vsel %vm517, %v5642, %v5595
        %v5644 = vsel %vm519, %v5643, %v5599
        %v5645 = vsel %vm521, %v5644, %v5603
        %v5646 = vsel %vm523, %v5645, %v5607
        %v5647 = vsel %vm525, %v5646, %v5611
        %v5648 = vsel %vm513, %v5560, %v5615
        %v5649 = vsel %vm515, %v5648, %v5619
        %v5650 = vsel %vm517, %v5649, %v5623
        %v5651 = vsel %vm519, %v5650, %v5627
        %v5652 = vsel %vm521, %v5651, %v5631
        %v5653 = vsel %vm523, %v5652, %v5635
        %v5654 = vsel %vm525, %v5653, %v5639
        %v5655 = vpack.c.bf16 %v5654, %v5647
        %v5657 = vrot.slane %v5655, 6
        %5659 = vst [vmem:[#allocation3 + $0x58] sm:$0xcc] %v5657
        %v5660 = vld [vmem:[#allocation2 + $0x4] sm:$0xff]
        %v5661 = vld [vmem:[#allocation2 + $0xc] sm:$0xff]
        %v5662 = vld [vmem:[#allocation2 + $0x1c] sm:$0xff]
        %v5663 = vld [vmem:[#allocation2 + $0x24] sm:$0xff]
        %v5664 = vld [vmem:[#allocation2 + $0x34] sm:$0xff]
        %v5665 = vld [vmem:[#allocation2 + $0x3c] sm:$0xff]
        %v5666 = vld [vmem:[#allocation2 + $0x4c] sm:$0xff]
        %v5667 = vld [vmem:[#allocation2 + $0x54] sm:$0xff]
        %5676 = vrot.lane.b32.xlu0 %v5660, 120
        %v5677 = vpop.permute.xlu0 %5676
        %5678 = vrot.lane.b32.xlu0 %v5661, 120
        %v5679 = vpop.permute.xlu0 %5678
        %5680 = vrot.lane.b32.xlu0 %v5662, 120
        %v5681 = vpop.permute.xlu0 %5680
        %5682 = vrot.lane.b32.xlu0 %v5663, 120
        %v5683 = vpop.permute.xlu0 %5682
        %5684 = vrot.lane.b32.xlu0 %v5664, 120
        %v5685 = vpop.permute.xlu0 %5684
        %5686 = vrot.lane.b32.xlu0 %v5665, 120
        %v5687 = vpop.permute.xlu0 %5686
        %5688 = vrot.lane.b32.xlu0 %v5666, 120
        %v5689 = vpop.permute.xlu0 %5688
        %5690 = vrot.lane.b32.xlu0 %v5667, 120
        %v5691 = vpop.permute.xlu0 %5690
        %v5700 = vrot.slane %v5685, 4
        %v5701 = vsel %vm345, %v5700, %v5677
        %v5702 = vrot.slane %v5677, 4
        %v5703 = vsel %vm345, %v5685, %v5702
        %v5705 = vunpack.c.l.s4 1983009808
        %v5706 = vunpack.c.0.s8 %v5705
        %v5707 = vperm.slane %v5701, %v5706
        %v5709 = vunpack.c.l.s4 1983009808
        %v5710 = vunpack.c.0.s8 %v5709
        %v5711 = vperm.slane %v5703, %v5710
        %v5712 = vrot.slane %v5689, 4
        %v5713 = vsel %vm345, %v5712, %v5681
        %v5714 = vrot.slane %v5681, 4
        %v5715 = vsel %vm345, %v5689, %v5714
        %v5717 = vunpack.c.l.s4 1983009808
        %v5718 = vunpack.c.0.s8 %v5717
        %v5719 = vperm.slane %v5713, %v5718
        %v5721 = vunpack.c.l.s4 1983009808
        %v5722 = vunpack.c.0.s8 %v5721
        %v5723 = vperm.slane %v5715, %v5722
        %v5724 = vrot.slane %v5719, 4
        %v5725 = vsel %vm345, %v5724, %v5707
        %v5726 = vrot.slane %v5707, 4
        %v5727 = vsel %vm345, %v5719, %v5726
        %v5729 = vunpack.c.l.s4 1934713408
        %v5730 = vunpack.c.0.s8 %v5729
        %v5731 = vperm.slane %v5725, %v5730
        %v5733 = vunpack.c.l.s4 1934713408
        %v5734 = vunpack.c.0.s8 %v5733
        %v5735 = vperm.slane %v5727, %v5734
        %v5736 = vrot.slane %v5723, 4
        %v5737 = vsel %vm345, %v5736, %v5711
        %v5738 = vrot.slane %v5711, 4
        %v5739 = vsel %vm345, %v5723, %v5738
        %v5741 = vunpack.c.l.s4 1934713408
        %v5742 = vunpack.c.0.s8 %v5741
        %v5743 = vperm.slane %v5737, %v5742
        %v5745 = vunpack.c.l.s4 1934713408
        %v5746 = vunpack.c.0.s8 %v5745
        %v5747 = vperm.slane %v5739, %v5746
        %v5748 = vrot.slane %v5731, 4
        %v5749 = vsel %vm345, 0.0, %v5748
        %v5750 = vrot.slane %v5735, 4
        %v5751 = vsel %vm345, 0.0, %v5750
        %v5752 = vrot.slane %v5743, 4
        %v5753 = vsel %vm345, 0.0, %v5752
        %v5754 = vrot.slane %v5747, 4
        %v5755 = vsel %vm345, 0.0, %v5754
        %v5756 = vrot.slane %v5687, 4
        %v5757 = vsel %vm345, %v5756, %v5679
        %v5758 = vrot.slane %v5679, 4
        %v5759 = vsel %vm345, %v5687, %v5758
        %v5761 = vunpack.c.l.s4 1983009808
        %v5762 = vunpack.c.0.s8 %v5761
        %v5763 = vperm.slane %v5757, %v5762
        %v5765 = vunpack.c.l.s4 1983009808
        %v5766 = vunpack.c.0.s8 %v5765
        %v5767 = vperm.slane %v5759, %v5766
        %v5768 = vrot.slane %v5691, 4
        %v5769 = vsel %vm345, %v5768, %v5683
        %v5770 = vrot.slane %v5683, 4
        %v5771 = vsel %vm345, %v5691, %v5770
        %v5773 = vunpack.c.l.s4 1983009808
        %v5774 = vunpack.c.0.s8 %v5773
        %v5775 = vperm.slane %v5769, %v5774
        %v5777 = vunpack.c.l.s4 1983009808
        %v5778 = vunpack.c.0.s8 %v5777
        %v5779 = vperm.slane %v5771, %v5778
        %v5780 = vrot.slane %v5775, 4
        %v5781 = vsel %vm345, %v5780, %v5763
        %v5782 = vrot.slane %v5763, 4
        %v5783 = vsel %vm345, %v5775, %v5782
        %v5785 = vunpack.c.l.s4 1934713408
        %v5786 = vunpack.c.0.s8 %v5785
        %v5787 = vperm.slane %v5781, %v5786
        %v5789 = vunpack.c.l.s4 1934713408
        %v5790 = vunpack.c.0.s8 %v5789
        %v5791 = vperm.slane %v5783, %v5790
        %v5792 = vrot.slane %v5779, 4
        %v5793 = vsel %vm345, %v5792, %v5767
        %v5794 = vrot.slane %v5767, 4
        %v5795 = vsel %vm345, %v5779, %v5794
        %v5797 = vunpack.c.l.s4 1934713408
        %v5798 = vunpack.c.0.s8 %v5797
        %v5799 = vperm.slane %v5793, %v5798
        %v5801 = vunpack.c.l.s4 1934713408
        %v5802 = vunpack.c.0.s8 %v5801
        %v5803 = vperm.slane %v5795, %v5802
        %v5804 = vrot.slane %v5787, 4
        %v5805 = vsel %vm345, 0.0, %v5804
        %v5806 = vrot.slane %v5791, 4
        %v5807 = vsel %vm345, 0.0, %v5806
        %v5808 = vrot.slane %v5799, 4
        %v5809 = vsel %vm345, 0.0, %v5808
        %v5810 = vrot.slane %v5803, 4
        %v5811 = vsel %vm345, 0.0, %v5810
        %5813 = vrot.lane.b32.xlu0 %v5749, 16
        %v5814 = vpop.permute.xlu0 %5813
        %5817 = vrot.lane.b32.xlu0 %v5735, 32
        %v5818 = vpop.permute.xlu0 %5817
        %5821 = vrot.lane.b32.xlu0 %v5751, 48
        %v5822 = vpop.permute.xlu0 %5821
        %5825 = vrot.lane.b32.xlu0 %v5743, 64
        %v5826 = vpop.permute.xlu0 %5825
        %5829 = vrot.lane.b32.xlu0 %v5753, 80
        %v5830 = vpop.permute.xlu0 %5829
        %5833 = vrot.lane.b32.xlu0 %v5747, 96
        %v5834 = vpop.permute.xlu0 %5833
        %5837 = vrot.lane.b32.xlu0 %v5755, 112
        %v5838 = vpop.permute.xlu0 %5837
        %5841 = vrot.lane.b32.xlu0 %v5805, 16
        %v5842 = vpop.permute.xlu0 %5841
        %5845 = vrot.lane.b32.xlu0 %v5791, 32
        %v5846 = vpop.permute.xlu0 %5845
        %5849 = vrot.lane.b32.xlu0 %v5807, 48
        %v5850 = vpop.permute.xlu0 %5849
        %5853 = vrot.lane.b32.xlu0 %v5799, 64
        %v5854 = vpop.permute.xlu0 %5853
        %5857 = vrot.lane.b32.xlu0 %v5809, 80
        %v5858 = vpop.permute.xlu0 %5857
        %5861 = vrot.lane.b32.xlu0 %v5803, 96
        %v5862 = vpop.permute.xlu0 %5861
        %5865 = vrot.lane.b32.xlu0 %v5811, 112
        %v5866 = vpop.permute.xlu0 %5865
        %v5868 = vsel %vm513, %v5731, %v5814
        %v5869 = vsel %vm515, %v5868, %v5818
        %v5870 = vsel %vm517, %v5869, %v5822
        %v5871 = vsel %vm519, %v5870, %v5826
        %v5872 = vsel %vm521, %v5871, %v5830
        %v5873 = vsel %vm523, %v5872, %v5834
        %v5874 = vsel %vm525, %v5873, %v5838
        %v5875 = vsel %vm513, %v5787, %v5842
        %v5876 = vsel %vm515, %v5875, %v5846
        %v5877 = vsel %vm517, %v5876, %v5850
        %v5878 = vsel %vm519, %v5877, %v5854
        %v5879 = vsel %vm521, %v5878, %v5858
        %v5880 = vsel %vm523, %v5879, %v5862
        %v5881 = vsel %vm525, %v5880, %v5866
        %v5882 = vpack.c.bf16 %v5881, %v5874
        %5883 = vst [vmem:[#allocation3 + $0x60] sm:$0x33] %v5882
        %v5884 = vld [vmem:[#allocation2 + $0x8] sm:$0xff]
        %v5885 = vld [vmem:[#allocation2 + $0x10] sm:$0xff]
        %v5886 = vld [vmem:[#allocation2 + $0x20] sm:$0xff]
        %v5887 = vld [vmem:[#allocation2 + $0x28] sm:$0xff]
        %v5888 = vld [vmem:[#allocation2 + $0x38] sm:$0xff]
        %v5889 = vld [vmem:[#allocation2 + $0x40] sm:$0xff]
        %v5890 = vld [vmem:[#allocation2 + $0x50] sm:$0xff]
        %v5891 = vld [vmem:[#allocation2 + $0x58] sm:$0xff]
        %v5892 = vrot.slane %v5888, 4
        %v5893 = vsel %vm345, %v5892, %v5884
        %v5894 = vrot.slane %v5884, 4
        %v5895 = vsel %vm345, %v5888, %v5894
        %v5897 = vunpack.c.l.s4 1983009808
        %v5898 = vunpack.c.0.s8 %v5897
        %v5899 = vperm.slane %v5893, %v5898
        %v5901 = vunpack.c.l.s4 1983009808
        %v5902 = vunpack.c.0.s8 %v5901
        %v5903 = vperm.slane %v5895, %v5902
        %v5904 = vrot.slane %v5890, 4
        %v5905 = vsel %vm345, %v5904, %v5886
        %v5906 = vrot.slane %v5886, 4
        %v5907 = vsel %vm345, %v5890, %v5906
        %v5909 = vunpack.c.l.s4 1983009808
        %v5910 = vunpack.c.0.s8 %v5909
        %v5911 = vperm.slane %v5905, %v5910
        %v5913 = vunpack.c.l.s4 1983009808
        %v5914 = vunpack.c.0.s8 %v5913
        %v5915 = vperm.slane %v5907, %v5914
        %v5916 = vrot.slane %v5911, 4
        %v5917 = vsel %vm345, %v5916, %v5899
        %v5918 = vrot.slane %v5899, 4
        %v5919 = vsel %vm345, %v5911, %v5918
        %v5921 = vunpack.c.l.s4 1934713408
        %v5922 = vunpack.c.0.s8 %v5921
        %v5923 = vperm.slane %v5917, %v5922
        %v5925 = vunpack.c.l.s4 1934713408
        %v5926 = vunpack.c.0.s8 %v5925
        %v5927 = vperm.slane %v5919, %v5926
        %v5928 = vrot.slane %v5915, 4
        %v5929 = vsel %vm345, %v5928, %v5903
        %v5930 = vrot.slane %v5903, 4
        %v5931 = vsel %vm345, %v5915, %v5930
        %v5933 = vunpack.c.l.s4 1934713408
        %v5934 = vunpack.c.0.s8 %v5933
        %v5935 = vperm.slane %v5929, %v5934
        %v5937 = vunpack.c.l.s4 1934713408
        %v5938 = vunpack.c.0.s8 %v5937
        %v5939 = vperm.slane %v5931, %v5938
        %v5940 = vrot.slane %v5923, 4
        %v5941 = vsel %vm345, 0.0, %v5940
        %v5942 = vrot.slane %v5927, 4
        %v5943 = vsel %vm345, 0.0, %v5942
        %v5944 = vrot.slane %v5935, 4
        %v5945 = vsel %vm345, 0.0, %v5944
        %v5946 = vrot.slane %v5939, 4
        %v5947 = vsel %vm345, 0.0, %v5946
        %v5948 = vrot.slane %v5889, 4
        %v5949 = vsel %vm345, %v5948, %v5885
        %v5950 = vrot.slane %v5885, 4
        %v5951 = vsel %vm345, %v5889, %v5950
        %v5953 = vunpack.c.l.s4 1983009808
        %v5954 = vunpack.c.0.s8 %v5953
        %v5955 = vperm.slane %v5949, %v5954
        %v5957 = vunpack.c.l.s4 1983009808
        %v5958 = vunpack.c.0.s8 %v5957
        %v5959 = vperm.slane %v5951, %v5958
        %v5960 = vrot.slane %v5891, 4
        %v5961 = vsel %vm345, %v5960, %v5887
        %v5962 = vrot.slane %v5887, 4
        %v5963 = vsel %vm345, %v5891, %v5962
        %v5965 = vunpack.c.l.s4 1983009808
        %v5966 = vunpack.c.0.s8 %v5965
        %v5967 = vperm.slane %v5961, %v5966
        %v5969 = vunpack.c.l.s4 1983009808
        %v5970 = vunpack.c.0.s8 %v5969
        %v5971 = vperm.slane %v5963, %v5970
        %v5972 = vrot.slane %v5967, 4
        %v5973 = vsel %vm345, %v5972, %v5955
        %v5974 = vrot.slane %v5955, 4
        %v5975 = vsel %vm345, %v5967, %v5974
        %v5977 = vunpack.c.l.s4 1934713408
        %v5978 = vunpack.c.0.s8 %v5977
        %v5979 = vperm.slane %v5973, %v5978
        %v5981 = vunpack.c.l.s4 1934713408
        %v5982 = vunpack.c.0.s8 %v5981
        %v5983 = vperm.slane %v5975, %v5982
        %v5984 = vrot.slane %v5971, 4
        %v5985 = vsel %vm345, %v5984, %v5959
        %v5986 = vrot.slane %v5959, 4
        %v5987 = vsel %vm345, %v5971, %v5986
        %v5989 = vunpack.c.l.s4 1934713408
        %v5990 = vunpack.c.0.s8 %v5989
        %v5991 = vperm.slane %v5985, %v5990
        %v5993 = vunpack.c.l.s4 1934713408
        %v5994 = vunpack.c.0.s8 %v5993
        %v5995 = vperm.slane %v5987, %v5994
        %v5996 = vrot.slane %v5979, 4
        %v5997 = vsel %vm345, 0.0, %v5996
        %v5998 = vrot.slane %v5983, 4
        %v5999 = vsel %vm345, 0.0, %v5998
        %v6000 = vrot.slane %v5991, 4
        %v6001 = vsel %vm345, 0.0, %v6000
        %v6002 = vrot.slane %v5995, 4
        %v6003 = vsel %vm345, 0.0, %v6002
        %6005 = vrot.lane.b32.xlu0 %v5941, 16
        %v6006 = vpop.permute.xlu0 %6005
        %6009 = vrot.lane.b32.xlu0 %v5927, 32
        %v6010 = vpop.permute.xlu0 %6009
        %6013 = vrot.lane.b32.xlu0 %v5943, 48
        %v6014 = vpop.permute.xlu0 %6013
        %6017 = vrot.lane.b32.xlu0 %v5935, 64
        %v6018 = vpop.permute.xlu0 %6017
        %6021 = vrot.lane.b32.xlu0 %v5945, 80
        %v6022 = vpop.permute.xlu0 %6021
        %6025 = vrot.lane.b32.xlu0 %v5939, 96
        %v6026 = vpop.permute.xlu0 %6025
        %6029 = vrot.lane.b32.xlu0 %v5947, 112
        %v6030 = vpop.permute.xlu0 %6029
        %6033 = vrot.lane.b32.xlu0 %v5997, 16
        %v6034 = vpop.permute.xlu0 %6033
        %6037 = vrot.lane.b32.xlu0 %v5983, 32
        %v6038 = vpop.permute.xlu0 %6037
        %6041 = vrot.lane.b32.xlu0 %v5999, 48
        %v6042 = vpop.permute.xlu0 %6041
        %6045 = vrot.lane.b32.xlu0 %v5991, 64
        %v6046 = vpop.permute.xlu0 %6045
        %6049 = vrot.lane.b32.xlu0 %v6001, 80
        %v6050 = vpop.permute.xlu0 %6049
        %6053 = vrot.lane.b32.xlu0 %v5995, 96
        %v6054 = vpop.permute.xlu0 %6053
        %6057 = vrot.lane.b32.xlu0 %v6003, 112
        %v6058 = vpop.permute.xlu0 %6057
        %v6060 = vsel %vm513, %v5923, %v6006
        %v6061 = vsel %vm515, %v6060, %v6010
        %v6062 = vsel %vm517, %v6061, %v6014
        %v6063 = vsel %vm519, %v6062, %v6018
        %v6064 = vsel %vm521, %v6063, %v6022
        %v6065 = vsel %vm523, %v6064, %v6026
        %v6066 = vsel %vm525, %v6065, %v6030
        %v6067 = vsel %vm513, %v5979, %v6034
        %v6068 = vsel %vm515, %v6067, %v6038
        %v6069 = vsel %vm517, %v6068, %v6042
        %v6070 = vsel %vm519, %v6069, %v6046
        %v6071 = vsel %vm521, %v6070, %v6050
        %v6072 = vsel %vm523, %v6071, %v6054
        %v6073 = vsel %vm525, %v6072, %v6058
        %v6074 = vpack.c.bf16 %v6073, %v6066
        %v6076 = vrot.slane %v6074, 6
        %6078 = vst [vmem:[#allocation3 + $0x60] sm:$0xcc] %v6076
        %v6079 = vld [vmem:[#allocation2 + $0x8] sm:$0xff]
        %v6080 = vld [vmem:[#allocation2 + $0x10] sm:$0xff]
        %v6081 = vld [vmem:[#allocation2 + $0x20] sm:$0xff]
        %v6082 = vld [vmem:[#allocation2 + $0x28] sm:$0xff]
        %v6083 = vld [vmem:[#allocation2 + $0x38] sm:$0xff]
        %v6084 = vld [vmem:[#allocation2 + $0x40] sm:$0xff]
        %v6085 = vld [vmem:[#allocation2 + $0x50] sm:$0xff]
        %v6086 = vld [vmem:[#allocation2 + $0x58] sm:$0xff]
        %6095 = vrot.lane.b32.xlu0 %v6079, 124
        %v6096 = vpop.permute.xlu0 %6095
        %6097 = vrot.lane.b32.xlu0 %v6080, 124
        %v6098 = vpop.permute.xlu0 %6097
        %6099 = vrot.lane.b32.xlu0 %v6081, 124
        %v6100 = vpop.permute.xlu0 %6099
        %6101 = vrot.lane.b32.xlu0 %v6082, 124
        %v6102 = vpop.permute.xlu0 %6101
        %6103 = vrot.lane.b32.xlu0 %v6083, 124
        %v6104 = vpop.permute.xlu0 %6103
        %6105 = vrot.lane.b32.xlu0 %v6084, 124
        %v6106 = vpop.permute.xlu0 %6105
        %6107 = vrot.lane.b32.xlu0 %v6085, 124
        %v6108 = vpop.permute.xlu0 %6107
        %6109 = vrot.lane.b32.xlu0 %v6086, 124
        %v6110 = vpop.permute.xlu0 %6109
        %v6119 = vrot.slane %v6104, 4
        %v6120 = vsel %vm345, %v6119, %v6096
        %v6121 = vrot.slane %v6096, 4
        %v6122 = vsel %vm345, %v6104, %v6121
        %v6124 = vunpack.c.l.s4 1983009808
        %v6125 = vunpack.c.0.s8 %v6124
        %v6126 = vperm.slane %v6120, %v6125
        %v6128 = vunpack.c.l.s4 1983009808
        %v6129 = vunpack.c.0.s8 %v6128
        %v6130 = vperm.slane %v6122, %v6129
        %v6131 = vrot.slane %v6108, 4
        %v6132 = vsel %vm345, %v6131, %v6100
        %v6133 = vrot.slane %v6100, 4
        %v6134 = vsel %vm345, %v6108, %v6133
        %v6136 = vunpack.c.l.s4 1983009808
        %v6137 = vunpack.c.0.s8 %v6136
        %v6138 = vperm.slane %v6132, %v6137
        %v6140 = vunpack.c.l.s4 1983009808
        %v6141 = vunpack.c.0.s8 %v6140
        %v6142 = vperm.slane %v6134, %v6141
        %v6143 = vrot.slane %v6138, 4
        %v6144 = vsel %vm345, %v6143, %v6126
        %v6145 = vrot.slane %v6126, 4
        %v6146 = vsel %vm345, %v6138, %v6145
        %v6148 = vunpack.c.l.s4 1934713408
        %v6149 = vunpack.c.0.s8 %v6148
        %v6150 = vperm.slane %v6144, %v6149
        %v6152 = vunpack.c.l.s4 1934713408
        %v6153 = vunpack.c.0.s8 %v6152
        %v6154 = vperm.slane %v6146, %v6153
        %v6155 = vrot.slane %v6142, 4
        %v6156 = vsel %vm345, %v6155, %v6130
        %v6157 = vrot.slane %v6130, 4
        %v6158 = vsel %vm345, %v6142, %v6157
        %v6160 = vunpack.c.l.s4 1934713408
        %v6161 = vunpack.c.0.s8 %v6160
        %v6162 = vperm.slane %v6156, %v6161
        %v6164 = vunpack.c.l.s4 1934713408
        %v6165 = vunpack.c.0.s8 %v6164
        %v6166 = vperm.slane %v6158, %v6165
        %v6167 = vrot.slane %v6150, 4
        %v6168 = vsel %vm345, 0.0, %v6167
        %v6169 = vrot.slane %v6154, 4
        %v6170 = vsel %vm345, 0.0, %v6169
        %v6171 = vrot.slane %v6162, 4
        %v6172 = vsel %vm345, 0.0, %v6171
        %v6173 = vrot.slane %v6166, 4
        %v6174 = vsel %vm345, 0.0, %v6173
        %v6175 = vrot.slane %v6106, 4
        %v6176 = vsel %vm345, %v6175, %v6098
        %v6177 = vrot.slane %v6098, 4
        %v6178 = vsel %vm345, %v6106, %v6177
        %v6180 = vunpack.c.l.s4 1983009808
        %v6181 = vunpack.c.0.s8 %v6180
        %v6182 = vperm.slane %v6176, %v6181
        %v6184 = vunpack.c.l.s4 1983009808
        %v6185 = vunpack.c.0.s8 %v6184
        %v6186 = vperm.slane %v6178, %v6185
        %v6187 = vrot.slane %v6110, 4
        %v6188 = vsel %vm345, %v6187, %v6102
        %v6189 = vrot.slane %v6102, 4
        %v6190 = vsel %vm345, %v6110, %v6189
        %v6192 = vunpack.c.l.s4 1983009808
        %v6193 = vunpack.c.0.s8 %v6192
        %v6194 = vperm.slane %v6188, %v6193
        %v6196 = vunpack.c.l.s4 1983009808
        %v6197 = vunpack.c.0.s8 %v6196
        %v6198 = vperm.slane %v6190, %v6197
        %v6199 = vrot.slane %v6194, 4
        %v6200 = vsel %vm345, %v6199, %v6182
        %v6201 = vrot.slane %v6182, 4
        %v6202 = vsel %vm345, %v6194, %v6201
        %v6204 = vunpack.c.l.s4 1934713408
        %v6205 = vunpack.c.0.s8 %v6204
        %v6206 = vperm.slane %v6200, %v6205
        %v6208 = vunpack.c.l.s4 1934713408
        %v6209 = vunpack.c.0.s8 %v6208
        %v6210 = vperm.slane %v6202, %v6209
        %v6211 = vrot.slane %v6198, 4
        %v6212 = vsel %vm345, %v6211, %v6186
        %v6213 = vrot.slane %v6186, 4
        %v6214 = vsel %vm345, %v6198, %v6213
        %v6216 = vunpack.c.l.s4 1934713408
        %v6217 = vunpack.c.0.s8 %v6216
        %v6218 = vperm.slane %v6212, %v6217
        %v6220 = vunpack.c.l.s4 1934713408
        %v6221 = vunpack.c.0.s8 %v6220
        %v6222 = vperm.slane %v6214, %v6221
        %v6223 = vrot.slane %v6206, 4
        %v6224 = vsel %vm345, 0.0, %v6223
        %v6225 = vrot.slane %v6210, 4
        %v6226 = vsel %vm345, 0.0, %v6225
        %v6227 = vrot.slane %v6218, 4
        %v6228 = vsel %vm345, 0.0, %v6227
        %v6229 = vrot.slane %v6222, 4
        %v6230 = vsel %vm345, 0.0, %v6229
        %6232 = vrot.lane.b32.xlu0 %v6168, 16
        %v6233 = vpop.permute.xlu0 %6232
        %6236 = vrot.lane.b32.xlu0 %v6154, 32
        %v6237 = vpop.permute.xlu0 %6236
        %6240 = vrot.lane.b32.xlu0 %v6170, 48
        %v6241 = vpop.permute.xlu0 %6240
        %6244 = vrot.lane.b32.xlu0 %v6162, 64
        %v6245 = vpop.permute.xlu0 %6244
        %6248 = vrot.lane.b32.xlu0 %v6172, 80
        %v6249 = vpop.permute.xlu0 %6248
        %6252 = vrot.lane.b32.xlu0 %v6166, 96
        %v6253 = vpop.permute.xlu0 %6252
        %6256 = vrot.lane.b32.xlu0 %v6174, 112
        %v6257 = vpop.permute.xlu0 %6256
        %6260 = vrot.lane.b32.xlu0 %v6224, 16
        %v6261 = vpop.permute.xlu0 %6260
        %6264 = vrot.lane.b32.xlu0 %v6210, 32
        %v6265 = vpop.permute.xlu0 %6264
        %6268 = vrot.lane.b32.xlu0 %v6226, 48
        %v6269 = vpop.permute.xlu0 %6268
        %6272 = vrot.lane.b32.xlu0 %v6218, 64
        %v6273 = vpop.permute.xlu0 %6272
        %6276 = vrot.lane.b32.xlu0 %v6228, 80
        %v6277 = vpop.permute.xlu0 %6276
        %6280 = vrot.lane.b32.xlu0 %v6222, 96
        %v6281 = vpop.permute.xlu0 %6280
        %6284 = vrot.lane.b32.xlu0 %v6230, 112
        %v6285 = vpop.permute.xlu0 %6284
        %v6287 = vsel %vm513, %v6150, %v6233
        %v6288 = vsel %vm515, %v6287, %v6237
        %v6289 = vsel %vm517, %v6288, %v6241
        %v6290 = vsel %vm519, %v6289, %v6245
        %v6291 = vsel %vm521, %v6290, %v6249
        %v6292 = vsel %vm523, %v6291, %v6253
        %v6293 = vsel %vm525, %v6292, %v6257
        %v6294 = vsel %vm513, %v6206, %v6261
        %v6295 = vsel %vm515, %v6294, %v6265
        %v6296 = vsel %vm517, %v6295, %v6269
        %v6297 = vsel %vm519, %v6296, %v6273
        %v6298 = vsel %vm521, %v6297, %v6277
        %v6299 = vsel %vm523, %v6298, %v6281
        %v6300 = vsel %vm525, %v6299, %v6285
        %v6301 = vpack.c.bf16 %v6300, %v6293
        %6302 = vst [vmem:[#allocation3 + $0x68] sm:$0x33] %v6301
        %v6303 = vld [vmem:[#allocation2 + $0x8] sm:$0xff]
        %v6304 = vld [vmem:[#allocation2 + $0x10] sm:$0xff]
        %v6305 = vld [vmem:[#allocation2 + $0x20] sm:$0xff]
        %v6306 = vld [vmem:[#allocation2 + $0x28] sm:$0xff]
        %v6307 = vld [vmem:[#allocation2 + $0x38] sm:$0xff]
        %v6308 = vld [vmem:[#allocation2 + $0x40] sm:$0xff]
        %v6309 = vld [vmem:[#allocation2 + $0x50] sm:$0xff]
        %v6310 = vld [vmem:[#allocation2 + $0x58] sm:$0xff]
        %6319 = vrot.lane.b32.xlu0 %v6303, 120
        %v6320 = vpop.permute.xlu0 %6319
        %6321 = vrot.lane.b32.xlu0 %v6304, 120
        %v6322 = vpop.permute.xlu0 %6321
        %6323 = vrot.lane.b32.xlu0 %v6305, 120
        %v6324 = vpop.permute.xlu0 %6323
        %6325 = vrot.lane.b32.xlu0 %v6306, 120
        %v6326 = vpop.permute.xlu0 %6325
        %6327 = vrot.lane.b32.xlu0 %v6307, 120
        %v6328 = vpop.permute.xlu0 %6327
        %6329 = vrot.lane.b32.xlu0 %v6308, 120
        %v6330 = vpop.permute.xlu0 %6329
        %6331 = vrot.lane.b32.xlu0 %v6309, 120
        %v6332 = vpop.permute.xlu0 %6331
        %6333 = vrot.lane.b32.xlu0 %v6310, 120
        %v6334 = vpop.permute.xlu0 %6333
        %v6343 = vrot.slane %v6328, 4
        %v6344 = vsel %vm345, %v6343, %v6320
        %v6345 = vrot.slane %v6320, 4
        %v6346 = vsel %vm345, %v6328, %v6345
        %v6348 = vunpack.c.l.s4 1983009808
        %v6349 = vunpack.c.0.s8 %v6348
        %v6350 = vperm.slane %v6344, %v6349
        %v6352 = vunpack.c.l.s4 1983009808
        %v6353 = vunpack.c.0.s8 %v6352
        %v6354 = vperm.slane %v6346, %v6353
        %v6355 = vrot.slane %v6332, 4
        %v6356 = vsel %vm345, %v6355, %v6324
        %v6357 = vrot.slane %v6324, 4
        %v6358 = vsel %vm345, %v6332, %v6357
        %v6360 = vunpack.c.l.s4 1983009808
        %v6361 = vunpack.c.0.s8 %v6360
        %v6362 = vperm.slane %v6356, %v6361
        %v6364 = vunpack.c.l.s4 1983009808
        %v6365 = vunpack.c.0.s8 %v6364
        %v6366 = vperm.slane %v6358, %v6365
        %v6367 = vrot.slane %v6362, 4
        %v6368 = vsel %vm345, %v6367, %v6350
        %v6369 = vrot.slane %v6350, 4
        %v6370 = vsel %vm345, %v6362, %v6369
        %v6372 = vunpack.c.l.s4 1934713408
        %v6373 = vunpack.c.0.s8 %v6372
        %v6374 = vperm.slane %v6368, %v6373
        %v6376 = vunpack.c.l.s4 1934713408
        %v6377 = vunpack.c.0.s8 %v6376
        %v6378 = vperm.slane %v6370, %v6377
        %v6379 = vrot.slane %v6366, 4
        %v6380 = vsel %vm345, %v6379, %v6354
        %v6381 = vrot.slane %v6354, 4
        %v6382 = vsel %vm345, %v6366, %v6381
        %v6384 = vunpack.c.l.s4 1934713408
        %v6385 = vunpack.c.0.s8 %v6384
        %v6386 = vperm.slane %v6380, %v6385
        %v6388 = vunpack.c.l.s4 1934713408
        %v6389 = vunpack.c.0.s8 %v6388
        %v6390 = vperm.slane %v6382, %v6389
        %v6391 = vrot.slane %v6374, 4
        %v6392 = vsel %vm345, 0.0, %v6391
        %v6393 = vrot.slane %v6378, 4
        %v6394 = vsel %vm345, 0.0, %v6393
        %v6395 = vrot.slane %v6386, 4
        %v6396 = vsel %vm345, 0.0, %v6395
        %v6397 = vrot.slane %v6390, 4
        %v6398 = vsel %vm345, 0.0, %v6397
        %v6399 = vrot.slane %v6330, 4
        %v6400 = vsel %vm345, %v6399, %v6322
        %v6401 = vrot.slane %v6322, 4
        %v6402 = vsel %vm345, %v6330, %v6401
        %v6404 = vunpack.c.l.s4 1983009808
        %v6405 = vunpack.c.0.s8 %v6404
        %v6406 = vperm.slane %v6400, %v6405
        %v6408 = vunpack.c.l.s4 1983009808
        %v6409 = vunpack.c.0.s8 %v6408
        %v6410 = vperm.slane %v6402, %v6409
        %v6411 = vrot.slane %v6334, 4
        %v6412 = vsel %vm345, %v6411, %v6326
        %v6413 = vrot.slane %v6326, 4
        %v6414 = vsel %vm345, %v6334, %v6413
        %v6416 = vunpack.c.l.s4 1983009808
        %v6417 = vunpack.c.0.s8 %v6416
        %v6418 = vperm.slane %v6412, %v6417
        %v6420 = vunpack.c.l.s4 1983009808
        %v6421 = vunpack.c.0.s8 %v6420
        %v6422 = vperm.slane %v6414, %v6421
        %v6423 = vrot.slane %v6418, 4
        %v6424 = vsel %vm345, %v6423, %v6406
        %v6425 = vrot.slane %v6406, 4
        %v6426 = vsel %vm345, %v6418, %v6425
        %v6428 = vunpack.c.l.s4 1934713408
        %v6429 = vunpack.c.0.s8 %v6428
        %v6430 = vperm.slane %v6424, %v6429
        %v6432 = vunpack.c.l.s4 1934713408
        %v6433 = vunpack.c.0.s8 %v6432
        %v6434 = vperm.slane %v6426, %v6433
        %v6435 = vrot.slane %v6422, 4
        %v6436 = vsel %vm345, %v6435, %v6410
        %v6437 = vrot.slane %v6410, 4
        %v6438 = vsel %vm345, %v6422, %v6437
        %v6440 = vunpack.c.l.s4 1934713408
        %v6441 = vunpack.c.0.s8 %v6440
        %v6442 = vperm.slane %v6436, %v6441
        %v6444 = vunpack.c.l.s4 1934713408
        %v6445 = vunpack.c.0.s8 %v6444
        %v6446 = vperm.slane %v6438, %v6445
        %v6447 = vrot.slane %v6430, 4
        %v6448 = vsel %vm345, 0.0, %v6447
        %v6449 = vrot.slane %v6434, 4
        %v6450 = vsel %vm345, 0.0, %v6449
        %v6451 = vrot.slane %v6442, 4
        %v6452 = vsel %vm345, 0.0, %v6451
        %v6453 = vrot.slane %v6446, 4
        %v6454 = vsel %vm345, 0.0, %v6453
        %6456 = vrot.lane.b32.xlu0 %v6392, 16
        %v6457 = vpop.permute.xlu0 %6456
        %6460 = vrot.lane.b32.xlu0 %v6378, 32
        %v6461 = vpop.permute.xlu0 %6460
        %6464 = vrot.lane.b32.xlu0 %v6394, 48
        %v6465 = vpop.permute.xlu0 %6464
        %6468 = vrot.lane.b32.xlu0 %v6386, 64
        %v6469 = vpop.permute.xlu0 %6468
        %6472 = vrot.lane.b32.xlu0 %v6396, 80
        %v6473 = vpop.permute.xlu0 %6472
        %6476 = vrot.lane.b32.xlu0 %v6390, 96
        %v6477 = vpop.permute.xlu0 %6476
        %6480 = vrot.lane.b32.xlu0 %v6398, 112
        %v6481 = vpop.permute.xlu0 %6480
        %6484 = vrot.lane.b32.xlu0 %v6448, 16
        %v6485 = vpop.permute.xlu0 %6484
        %6488 = vrot.lane.b32.xlu0 %v6434, 32
        %v6489 = vpop.permute.xlu0 %6488
        %6492 = vrot.lane.b32.xlu0 %v6450, 48
        %v6493 = vpop.permute.xlu0 %6492
        %6496 = vrot.lane.b32.xlu0 %v6442, 64
        %v6497 = vpop.permute.xlu0 %6496
        %6500 = vrot.lane.b32.xlu0 %v6452, 80
        %v6501 = vpop.permute.xlu0 %6500
        %6504 = vrot.lane.b32.xlu0 %v6446, 96
        %v6505 = vpop.permute.xlu0 %6504
        %6508 = vrot.lane.b32.xlu0 %v6454, 112
        %v6509 = vpop.permute.xlu0 %6508
        %v6511 = vsel %vm513, %v6374, %v6457
        %v6512 = vsel %vm515, %v6511, %v6461
        %v6513 = vsel %vm517, %v6512, %v6465
        %v6514 = vsel %vm519, %v6513, %v6469
        %v6515 = vsel %vm521, %v6514, %v6473
        %v6516 = vsel %vm523, %v6515, %v6477
        %v6517 = vsel %vm525, %v6516, %v6481
        %v6518 = vsel %vm513, %v6430, %v6485
        %v6519 = vsel %vm515, %v6518, %v6489
        %v6520 = vsel %vm517, %v6519, %v6493
        %v6521 = vsel %vm519, %v6520, %v6497
        %v6522 = vsel %vm521, %v6521, %v6501
        %v6523 = vsel %vm523, %v6522, %v6505
        %v6524 = vsel %vm525, %v6523, %v6509
        %v6525 = vpack.c.bf16 %v6524, %v6517
        %v6527 = vrot.slane %v6525, 6
        %6529 = vst [vmem:[#allocation3 + $0x68] sm:$0xcc] %v6527
        %v6530 = vld [vmem:[%s1] sm:$0xf]
        %v6531 = vld [vmem:[#allocation3] sm:$0xff]
        %v6532 = vld [vmem:[#allocation3 + $0x8] sm:$0xff]
        %v6533 = vld [vmem:[#allocation3 + $0x10] sm:$0xff]
        %v6534 = vld [vmem:[#allocation3 + $0x18] sm:$0xff]
        %v6535 = vld [vmem:[#allocation3 + $0x20] sm:$0xff]
        %v6536 = vld [vmem:[#allocation3 + $0x28] sm:$0xff]
        %v6537 = vld [vmem:[#allocation3 + $0x30] sm:$0xff]
        %v6538 = vld [vmem:[#allocation3 + $0x38] sm:$0xff]
        %v6539 = vld [vmem:[#allocation3 + $0x40] sm:$0xff]
        %v6540 = vld [vmem:[#allocation3 + $0x48] sm:$0xff]
        %v6541 = vld [vmem:[#allocation3 + $0x50] sm:$0xff]
        %v6542 = vld [vmem:[#allocation3 + $0x58] sm:$0xff]
        %v6543 = vld [vmem:[#allocation3 + $0x60] sm:$0xff]
        %v6544 = vld [vmem:[#allocation3 + $0x68] sm:$0xff]
        %v6559 = vunpack.c.l.b16 %v6531
        %v6560 = vunpack.c.h.b16 %v6531
        %v6561 = vunpack.c.l.b16 %v6532
        %v6562 = vunpack.c.h.b16 %v6532
        %v6563 = vunpack.c.l.b16 %v6533
        %v6564 = vunpack.c.h.b16 %v6533
        %v6565 = vunpack.c.l.b16 %v6534
        %v6566 = vunpack.c.h.b16 %v6534
        %v6567 = vunpack.c.l.b16 %v6535
        %v6568 = vunpack.c.h.b16 %v6535
        %v6569 = vunpack.c.l.b16 %v6536
        %v6570 = vunpack.c.h.b16 %v6536
        %v6571 = vunpack.c.l.b16 %v6537
        %v6572 = vunpack.c.h.b16 %v6537
        %v6573 = vunpack.c.l.b16 %v6538
        %v6574 = vunpack.c.h.b16 %v6538
        %v6575 = vunpack.c.l.b16 %v6539
        %v6576 = vunpack.c.h.b16 %v6539
        %v6577 = vunpack.c.l.b16 %v6540
        %v6578 = vunpack.c.h.b16 %v6540
        %v6579 = vunpack.c.l.b16 %v6541
        %v6580 = vunpack.c.h.b16 %v6541
        %v6581 = vunpack.c.l.b16 %v6542
        %v6582 = vunpack.c.h.b16 %v6542
        %v6583 = vunpack.c.l.b16 %v6543
        %v6584 = vunpack.c.h.b16 %v6543
        %v6585 = vunpack.c.l.b16 %v6544
        %v6586 = vunpack.c.h.b16 %v6544
        %v6587 = vpack.c.b16 %v6561, %v6559
        %v6588 = vpack.c.b16 %v6562, %v6560
        %v6589 = vpack.c.b16 %v6565, %v6563
        %v6590 = vpack.c.b16 %v6566, %v6564
        %v6591 = vpack.c.b16 %v6569, %v6567
        %v6592 = vpack.c.b16 %v6570, %v6568
        %v6593 = vpack.c.b16 %v6573, %v6571
        %v6594 = vpack.c.b16 %v6574, %v6572
        %v6595 = vpack.c.b16 %v6577, %v6575
        %v6596 = vpack.c.b16 %v6578, %v6576
        %v6597 = vpack.c.b16 %v6581, %v6579
        %v6598 = vpack.c.b16 %v6582, %v6580
        %v6599 = vpack.c.b16 %v6585, %v6583
        %v6600 = vpack.c.b16 %v6586, %v6584
        %v6616 = vsel %vm525, %v6530, 0
        %6618 = vmatpush.bf16.msra.mxu0 0
        %6619 = vmatpush.bf16.msra.mxu0 %v6599
        %6620 = vmatpush.bf16.msra.mxu0 %v6597
        %6621 = vmatpush.bf16.msra.mxu0 %v6595
        %6622 = vmatpush.bf16.msra.mxu0 %v6593
        %6623 = vmatpush.bf16.msra.mxu0 %v6591
        %6624 = vmatpush.bf16.msra.mxu0 %v6589
        %6625 = vmatpush.bf16.msra.mxu0 %v6587
        %6626 = vmatmul.bf16.gmra.mxu0 %v6616
        %v6627 = vpop.f32.mrf.mxu0
        %v6628 = vadd.f32 0.0, %v6627
        %v6629 = vpop.f32.mrf.mxu0
        %6630 = vdwg.mxu0
        %6631 = vmatpush.bf16.msra.mxu0 0
        %6632 = vmatpush.bf16.msra.mxu0 %v6600
        %6633 = vmatpush.bf16.msra.mxu0 %v6598
        %6634 = vmatpush.bf16.msra.mxu0 %v6596
        %6635 = vmatpush.bf16.msra.mxu0 %v6594
        %6636 = vmatpush.bf16.msra.mxu0 %v6592
        %6637 = vmatpush.bf16.msra.mxu0 %v6590
        %6638 = vmatpush.bf16.msra.mxu0 %v6588
        %6639 = vmatmul.bf16.gmra.mxu0 %v6616
        %v6640 = vpop.f32.mrf.mxu0
        %v6641 = vadd.f32 0.0, %v6640
        %v6642 = vpop.f32.mrf.mxu0
        %6643 = vdwg.mxu0
        %6644 = vst [vmem:[%s232] sm:$0xff] %v6628
        %6645 = vst [vmem:[%s232 + $0x8] sm:$0xff] %v6641
        %v6646 = vadd.f32 %v6628, %v6641
        %6647 = vadd.xlane.f32.xlu0 %v6646
        %v6648 = vpop.xlane.xlu0 %6647
        %v6649 = vmul.f32 %v6648, 0.00390625
        %v6650 = vsub.f32 %v6628, %v6649
        %v6651 = vsub.f32 %v6641, %v6649
        %vm6652 = vcmask 7168
        %6653 = vst.msk [vmem:[%s236] sm:$0xff] %vm6652, %v6648
        %v6654 = vmul.f32 %v6650, %v6650
        %v6655 = vmul.f32 %v6651, %v6651
        %v6656 = vadd.f32 %v6654, %v6655
        %6657 = vadd.xlane.f32.xlu0 %v6656
        %v6658 = vpop.xlane.xlu0 %6657
        %6659 = vst.msk [vmem:[%s240] sm:$0xff] %vm6652, %v6658
        %p6660 = scmp.lt.s32.totalorder %s19, 1
        %s6661 = scalar_select %p6660, %s19, 1
        %s6662 = smul.addr %s6661, 2
        %s6663 = smul.addr %s6662, 8
        %s6664 = scalar_lea.vmem %s2, %s6663
        %p6665 = scmp.lt.s32.totalorder %s19, 1
        %s6666 = scalar_select %p6665, %s19, 1
        %s6667 = smul.addr %s6666, 8
        %s6668 = scalar_lea.vmem %s3, %s6667
        %p6669 = scmp.lt.s32.totalorder %s19, 1
        %s6670 = scalar_select %p6669, %s19, 1
        %s6671 = smul.addr %s6670, 8
        %s6672 = scalar_lea.vmem %s4, %s6671
        // Predicated region
        $region33: #{_forward.2} parent=27 // pred_check
          %p6673 = pneg %p84
        $region34: #{_forward.2} parent=27 // pred_check_branch
          %6675 = sbr.rel (%p6673) target = $region36
        $region35: #{_forward.2} parent=27 // pred_region
          _
        $region36: #{_forward.2} parent=27 // pred_fallthru
          _
        // Predicated region
        $region37: #{_forward.2} parent=27 // pred_check
          %p6676 = pneg %p110
        $region38: #{_forward.2} parent=27 // pred_check_branch
          %6678 = sbr.rel (%p6676) target = $region40
        $region39: #{_forward.2} parent=27 // pred_region
          _
        $region40: #{_forward.2} parent=27 // pred_fallthru
          _
        // Predicated region
        $region41: #{_forward.2} parent=27 // pred_check
          %p6679 = pneg %p136
        $region42: #{_forward.2} parent=27 // pred_check_branch
          %6681 = sbr.rel (%p6679) target = $region44
        $region43: #{_forward.2} parent=27 // pred_region
          _
        $region44: #{_forward.2} parent=27 // pred_fallthru
          _
      $region28: #{_forward.2} parent=5 // pred_fallthru
        _
      %p6682 = scmp.le.s32.totalorder 2, %s14
      // Predicated region
      $region45: #{_forward.2} parent=5 // pred_check
        %p6683 = pneg %p6682
      $region46: #{_forward.2} parent=5 // pred_check_branch
        %6685 = sbr.rel (%p6683) target = $region48
      $region47: #{_forward.2} parent=5 // pred_region
        %s6686 = ssub.s32 %s14, 2
        // Predicated region
        $region49: #{_forward.2} parent=47 // pred_check
          %p6687 = pneg %p90
        $region50: #{_forward.2} parent=47 // pred_check_branch
          %6689 = sbr.rel (%p6687) target = $region52
        $region51: #{_forward.2} parent=47 // pred_region
          %p6690 = scmp.lt.s32.totalorder %s20, 1
          %s6691 = scalar_select %p6690, %s20, 1
          %s6692 = smul.addr %s6691, 2
          %s6693 = smul.addr %s6692, 8
          %s6694 = scalar_lea.vmem %s2, %s6693
        $region52: #{_forward.2} parent=47 // pred_fallthru
          _
        // Predicated region
        $region53: #{_forward.2} parent=47 // pred_check
          %p6695 = pneg %p116
        $region54: #{_forward.2} parent=47 // pred_check_branch
          %6697 = sbr.rel (%p6695) target = $region56
        $region55: #{_forward.2} parent=47 // pred_region
          %p6698 = scmp.lt.s32.totalorder %s20, 1
          %s6699 = scalar_select %p6698, %s20, 1
          %s6700 = smul.addr %s6699, 8
          %s6701 = scalar_lea.vmem %s3, %s6700
        $region56: #{_forward.2} parent=47 // pred_fallthru
          _
        // Predicated region
        $region57: #{_forward.2} parent=47 // pred_check
          %p6702 = pneg %p142
        $region58: #{_forward.2} parent=47 // pred_check_branch
          %6704 = sbr.rel (%p6702) target = $region60
        $region59: #{_forward.2} parent=47 // pred_region
          %p6705 = scmp.lt.s32.totalorder %s20, 1
          %s6706 = scalar_select %p6705, %s20, 1
          %s6707 = smul.addr %s6706, 8
          %s6708 = scalar_lea.vmem %s4, %s6707
        $region60: #{_forward.2} parent=47 // pred_fallthru
          _
      $region48: #{_forward.2} parent=5 // pred_fallthru
        _
    $region6: #{_forward.2} parent=1 // loop_footer
      %s18 = sadd.s32 1, %s14
    $region7: #{_forward.2} parent=1 // loop_footer_branch
      %13 = sbr.rel target = $region3
    $region8: #{_forward.2} parent=1 // loop_exit
      _
    %6709 = vsyncpa [#allocation5], 1
    %s6710 = scalar_lea.sflag [#allocation5], 1
    %6711 = vsyncpa %s6710, 1

</llo_original>
